<compile_context>
chip_gen: v6e
topology: v6e:2x2x1
jax: 0.10.0
libtpu: 0.0.40
codegen_flags: <defaults>
</compile_context>

<pallas_src>
import functools

import jax
import jax.numpy as jnp
from jax import lax
from jax.experimental import pallas as pl
from jax.experimental.pallas import tpu as pltpu

KS = 3       # 3x3 conv, stride 1, padding 1 (module defaults)
LANE = 128   # TPU lane width; channel / K dims are padded to a multiple of this


def _round_up(v, m):
    return ((v + m - 1) // m) * m


# ---------------------------------------------------------------------------
# Kernel
# ---------------------------------------------------------------------------
def _make_kernel(H, ht, W, K1p, Cp):
    """Fused (conv3x3 + BN + ReLU) x2 for one (batch, row-strip) grid step."""
    need_tail_mask = (H % ht) != 0

    def kernel(xm_ref, xt_ref, xb_ref,
               w1_ref, s1_ref, b1_ref,
               w2_ref, s2_ref, b2_ref,
               o_ref, mid_ref):
        # xm_ref : (1, ht, W, K1p) bf16   pre-im2col'd strip rows
        # xt_ref : (1, 1,  W, K1p) bf16   row above the strip (clamped index)
        # xb_ref : (1, 1,  W, K1p) bf16   row below the strip (clamped index)
        # w1_ref : (K1p, Cp)       bf16   conv1 weights, (ky,kx,ci)-major rows
        # s1/b1  : (1, Cp)         f32    folded BN1 scale / bias
        # w2_ref : (9, Cp, Cp)     bf16   conv2 weights, tap-major
        # s2/b2  : (1, Cp)         f32    folded BN2 scale / bias
        # o_ref  : (1, ht, W, Cp)  bf16   output strip (lane-dense Cp)
        # mid_ref: (ht+2, W+2, Cp) bf16   intermediate (+1 halo row / zero col)
        h = pl.program_id(1)
        bt = mid_ref.dtype

        w1 = w1_ref[...]
        s1 = s1_ref[0]
        b1 = b1_ref[0]

        def conv1(lhs):                       # (M, K1p) bf16 -> (M, Cp) f32
            y = jnp.dot(lhs, w1, preferred_element_type=jnp.float32)
            return jnp.maximum(y * s1 + b1, 0.0)          # folded BN1 + ReLU

        # ---- conv1 over the strip's own rows: one lane-dense MXU dot read
        #      directly from the pipelined input block (no restaging copy).
        y_main = conv1(xm_ref[0].reshape(ht * W, K1p)).reshape(ht, W, Cp)
        if need_tail_mask:                    # zero the padded tail rows (>= H)
            row_g = h * ht + lax.broadcasted_iota(jnp.int32, (ht, 1, 1), 0)
            y_main = jnp.where(row_g < H, y_main, 0.0)

        # ---- conv1 over the one-row halos; out-of-image halo rows must be
        #      zero (they are conv2's vertical zero padding).
        y_top = conv1(xt_ref[0, 0])                               # (W, Cp)
        y_bot = conv1(xb_ref[0, 0])                               # (W, Cp)
        y_top = jnp.where(h > 0, y_top, 0.0)
        y_bot = jnp.where((h + 1) * ht < H, y_bot, 0.0)

        # ---- stage the intermediate with a 1-row halo and 1-col zero padding.
        #      The zero columns are tiny ((ht+2)*Cp each); they are rewritten
        #      every step because on megacore parts each core has its own
        #      scratch and may never execute grid step (0, 0).
        mid_ref[:, 0:1, :] = jnp.zeros((ht + 2, 1, Cp), bt)
        mid_ref[:, W + 1:W + 2, :] = jnp.zeros((ht + 2, 1, Cp), bt)
        mid_ref[0:1, 1:W + 1, :] = y_top.reshape(1, W, Cp).astype(bt)
        mid_ref[1:ht + 1, 1:W + 1, :] = y_main.astype(bt)
        mid_ref[ht + 1:ht + 2, 1:W + 1, :] = y_bot.reshape(1, W, Cp).astype(bt)

        # ---- conv2: 9 accumulated per-tap MXU dots (K = Cp), f32 accumulate.
        #      kx offsets are sublane slices of the VMEM intermediate; no
        #      (Ht*W, 9*Cp) im2col patch is ever materialized.
        acc = jnp.zeros((ht * W, Cp), jnp.float32)
        for t in range(KS * KS):
            ky, kx = divmod(t, KS)
            lhs = mid_ref[ky:ky + ht, kx:kx + W, :].reshape(ht * W, Cp)
            acc = acc + jnp.dot(lhs, w2_ref[t],
                                preferred_element_type=jnp.float32)
        y2 = jnp.maximum(acc * s2_ref[0] + b2_ref[0], 0.0)        # BN2 + ReLU
        o_ref[...] = y2.reshape(1, ht, W, Cp).astype(o_ref.dtype)

    return kernel


# ---------------------------------------------------------------------------
# pallas_call wrapper
# ---------------------------------------------------------------------------
def _fused_conv_pair(xp, w1, s1, b1, w2, s2, b2, *, H, ht, vmem_limit):
    N, Hp, W, K1p = xp.shape
    Cp = w2.shape[-1]
    nh = Hp // ht
    kernel = _make_kernel(H, ht, W, K1p, Cp)

    in_specs = [
        pl.BlockSpec((1, ht, W, K1p), lambda n, h: (n, h, 0, 0)),
        # one row directly above / below the strip; clamped index at the image
        # border fetches a valid (but unused) row that is zeroed in-kernel.
        pl.BlockSpec((1, 1, W, K1p),
                     lambda n, h: (n, jnp.maximum(h * ht - 1, 0), 0, 0)),
        pl.BlockSpec((1, 1, W, K1p),
                     lambda n, h: (n, jnp.minimum(h * ht + ht, Hp - 1), 0, 0)),
        pl.BlockSpec((K1p, Cp), lambda n, h: (0, 0)),
        pl.BlockSpec((1, Cp), lambda n, h: (0, 0)),
        pl.BlockSpec((1, Cp), lambda n, h: (0, 0)),
        pl.BlockSpec((KS * KS, Cp, Cp), lambda n, h: (0, 0, 0)),
        pl.BlockSpec((1, Cp), lambda n, h: (0, 0)),
        pl.BlockSpec((1, Cp), lambda n, h: (0, 0)),
    ]
    out_spec = pl.BlockSpec((1, ht, W, Cp), lambda n, h: (n, h, 0, 0))

    return pl.pallas_call(
        kernel,
        out_shape=jax.ShapeDtypeStruct((N, Hp, W, Cp), jnp.bfloat16),
        grid=(N, nh),
        in_specs=in_specs,
        out_specs=out_spec,
        scratch_shapes=[pltpu.VMEM((ht + 2, W + 2, Cp), jnp.bfloat16)],
        compiler_params=pltpu.CompilerParams(
            dimension_semantics=("parallel", "parallel"),
            vmem_limit_bytes=int(vmem_limit)),
    )(xp, xp, xp, w1, s1, b1, w2, s2, b2)


# ---------------------------------------------------------------------------
# VMEM sizing / strip-height selection (generation-aware)
# ---------------------------------------------------------------------------
def _vmem_capacity_bytes():
    try:
        info = pltpu.get_tpu_info()
        for attr in ("vmem_capacity_bytes", "vmem_size_bytes", "vmem_bytes"):
            v = getattr(info, attr, None)
            if v:
                return int(v)
    except Exception:
        pass
    return 64 * 1024 * 1024        # conservative default (v7x per-core VMEM)


def _est_vmem_bytes(ht, W, K1p, Cp):
    """Estimate per-step VMEM; all dims here are already lane-padded."""
    bf, f32 = 2, 4
    by = 2 * ht * W * K1p * bf                                # strip input (dbl-buf)
    by += 2 * 2 * W * K1p * bf                                # halo rows (dbl-buf)
    by += 2 * ht * W * Cp * bf                                # output strip (dbl-buf)
    by += 2 * (K1p * Cp + KS * KS * Cp * Cp + 4 * Cp) * bf    # weights / BN consts
    by += (ht + 2) * (W + 2) * Cp * bf                        # mid scratch
    by += ht * W * Cp * (3 * f32 + 2 * bf)                    # in-flight f32/bf16 temps
    by += (ht + 2) * W * max(K1p, Cp) * bf                    # relayout headroom
    return by


def _pick_block_h(H, W, K1p, Cp, budget, n_batch):
    cap = H
    if n_batch == 1 and H > 8:
        cap = -(-H // 2)           # keep >= 2 row strips so both v7x TCs get work
    cands = sorted({h for h in range(8, cap + 1, 8)} | {cap}, reverse=True)
    fitting = [h for h in cands if _est_vmem_bytes(h, W, K1p, Cp) <= budget]
    if not fitting:
        return max(1, min(8, H))
    best = fitting[0]
    for h in fitting:              # mild preference for divisors (no padded tail)
        if H % h == 0 and 2 * h >= best:
            return h
    return best


# ---------------------------------------------------------------------------
# Parameters / BN folding / packing
# ---------------------------------------------------------------------------
def init_unet_conv2_params(key, in_size, out_size, n=2, is_batchnorm=True):
    """Deterministic synthetic parameters matching unetConv2's shapes.
    Conv weights stored as HWIO (3, 3, Cin, Cout) float32."""
    params = []
    cin = in_size
    for _ in range(n):
        key, k_w, k_b, k_g, k_beta, k_m, k_v = jax.random.split(key, 7)
        w_oihw = 0.1 * jax.random.normal(k_w, (out_size, cin, KS, KS), jnp.float32)
        p = dict(w=jnp.transpose(w_oihw, (2, 3, 1, 0)),
                 conv_b=0.1 * jax.random.normal(k_b, (out_size,), jnp.float32))
        if is_batchnorm:
            p["gamma"] = 1.0 + 0.1 * jax.random.normal(k_g, (out_size,), jnp.float32)
            p["beta"] = 0.1 * jax.random.normal(k_beta, (out_size,), jnp.float32)
            p["mean"] = 0.1 * jax.random.normal(k_m, (out_size,), jnp.float32)
            p["var"] = 1.0 + 0.2 * jax.random.uniform(k_v, (out_size,), jnp.float32)
        params.append(p)
        cin = out_size
    return params


def _fold_bn(p, eps=1e-5):
    if "gamma" not in p:                       # is_batchnorm=False: conv + ReLU
        return jnp.ones_like(p["conv_b"]), p["conv_b"]
    s = p["gamma"] * lax.rsqrt(p["var"] + eps)
    b = (p["conv_b"] - p["mean"]) * s + p["beta"]
    return s, b


def _prep_params(params, Ci, Cp, K1p):
    """Fold BN, pad channels to Cp / K rows to K1p, cast weights to bf16."""
    p1, p2 = params
    co = p1["w"].shape[3]
    s1, b1 = _fold_bn(p1)
    s2, b2 = _fold_bn(p2)

    w1 = jnp.pad(p1["w"], ((0, 0), (0, 0), (0, 0), (0, Cp - co)))
    w1 = w1.reshape(KS * KS * Ci, Cp)
    w1 = jnp.pad(w1, ((0, K1p - KS * KS * Ci), (0, 0))).astype(jnp.bfloat16)

    w2 = jnp.pad(p2["w"], ((0, 0), (0, 0), (0, Cp - co), (0, Cp - co)))
    w2 = w2.reshape(KS * KS, Cp, Cp).astype(jnp.bfloat16)

    pad_c = lambda v: jnp.pad(v, (0, Cp - co)).reshape(1, Cp).astype(jnp.float32)
    return w1, pad_c(s1), pad_c(b1), w2, pad_c(s2), pad_c(b2)


def _im2col_pack(x_nhwc, Hp, K1p):
    """(N,H,W,Ci) bf16 -> (N,Hp,W,K1p) bf16, (ky,kx,ci)-major lane-dense patches."""
    N, H, W, Ci = x_nhwc.shape
    xpad = jnp.pad(x_nhwc, ((0, 0), (1, 1), (1, 1), (0, 0)))
    taps = [xpad[:, dy:dy + H, dx:dx + W, :]
            for dy in range(KS) for dx in range(KS)]
    xp = jnp.concatenate(taps, axis=-1)                     # (N, H, W, 9*Ci)
    return jnp.pad(xp, ((0, 0), (0, Hp - H), (0, 0), (0, K1p - KS * KS * Ci)))


# ---------------------------------------------------------------------------
# Forward
# ---------------------------------------------------------------------------
@functools.partial(jax.jit, static_argnums=(2, 3))
def _forward_impl(x_nchw, params, ht, vmem_limit):
    N, Ci, H, W = x_nchw.shape
    co = params[0]["w"].shape[3]
    Cp = _round_up(co, LANE)
    K1p = _round_up(KS * KS * Ci, LANE)
    nh = -(-H // ht)
    Hp = nh * ht

    x = jnp.transpose(x_nchw.astype(jnp.bfloat16), (0, 2, 3, 1))   # NCHW->NHWC, bf16
    xp = _im2col_pack(x, Hp, K1p)
    w1, s1, b1, w2, s2, b2 = _prep_params(params, Ci, Cp, K1p)
    y = _fused_conv_pair(xp, w1, s1, b1, w2, s2, b2,
                         H=H, ht=ht, vmem_limit=vmem_limit)
    y = y[:, :H, :, :co]                          # drop row / channel padding (bf16)
    return jnp.transpose(y, (0, 3, 1, 2)).astype(jnp.float32)      # NHWC->NCHW


def unet_conv2_forward(x_nchw, params, block_h=None):
    """Matches unetConv2.forward (n=2, eval-mode BN). NCHW in / NCHW out."""
    if len(params) != 2:
        raise NotImplementedError("fused kernel implements the default n=2 case")
    N, Ci, H, W = x_nchw.shape
    co = params[0]["w"].shape[3]
    Cp = _round_up(co, LANE)
    K1p = _round_up(KS * KS * Ci, LANE)

    cap = _vmem_capacity_bytes()
    vmem_limit = max(32 * 1024 * 1024, min((cap * 7) // 10, 100 * 1024 * 1024))
    budget = (vmem_limit * 3) // 5

    if block_h is not None:
        ht = max(1, int(block_h))
    else:
        ht = _pick_block_h(H, W, K1p, Cp, budget, N)
    ht = min(ht, max(H, 1))
    return _forward_impl(x_nchw, params, ht, int(vmem_limit))


# ---------------------------------------------------------------------------
# Pure-JAX reference (same bf16 rounding points as the kernel)
# ---------------------------------------------------------------------------
def reference_forward(x_nchw, params):
    x = jnp.transpose(x_nchw, (0, 2, 3, 1)).astype(jnp.float32)
    for p in params:
        w = p["w"].astype(jnp.bfloat16).astype(jnp.float32)
        xin = x.astype(jnp.bfloat16).astype(jnp.float32)
        y = lax.conv_general_dilated(
            xin, w, window_strides=(1, 1), padding="SAME",
            dimension_numbers=("NHWC", "HWIO", "NHWC"),
            precision=lax.Precision.HIGHEST)
        s, b = _fold_bn(p)
        x = jnp.maximum(y * s + b, 0.0)
    return jnp.transpose(x, (0, 3, 1, 2))


if __name__ == "__main__":
    key = jax.random.PRNGKey(0)
    k1, k2, kp = jax.random.split(key, 3)

    # Case 1: explicit block_h -> 2 row strips per image (halo logic both sides).
    N, C_in, H, W, C_out = 2, 4, 16, 16, 8
    x = jax.random.normal(k1, (N, C_in, H, W), jnp.float32)
    params = init_unet_conv2_params(kp, C_in, C_out, n=2, is_batchnorm=True)

    out = jax.block_until_ready(unet_conv2_forward(x, params, block_h=8))
    ref = reference_forward(x, params)
    assert out.shape == (N, C_out, H, W)
    err1 = float(jnp.max(jnp.abs(out - ref)))
    assert jnp.allclose(out, ref, atol=3e-2, rtol=3e-2), err1

    # Case 2: odd, non-dividing H with auto block_h -> masked tail strip,
    # clamped halos, and the N=1 (two-strip megacore) path.
    N2, H2 = 1, 13
    x2 = jax.random.normal(k2, (N2, C_in, H2, W), jnp.float32)
    out2 = jax.block_until_ready(unet_conv2_forward(x2, params))
    ref2 = reference_forward(x2, params)
    assert out2.shape == (N2, C_out, H2, W)
    err2 = float(jnp.max(jnp.abs(out2 - ref2)))
    assert jnp.allclose(out2, ref2, atol=3e-2, rtol=3e-2), err2

    print("KERNEL_OK")
</pallas_src>

<mosaic_0001>
module attributes {stable_mosaic.version = 11 : i64} {
  func.func @kernel(%arg0: i32, %arg1: i32, %arg2: memref<1x8x16x128xbf16, #tpu.memory_space<vmem>>, %arg3: memref<1x1x16x128xbf16, #tpu.memory_space<vmem>>, %arg4: memref<1x1x16x128xbf16, #tpu.memory_space<vmem>>, %arg5: memref<128x128xbf16, #tpu.memory_space<vmem>>, %arg6: memref<1x128xf32, #tpu.memory_space<vmem>>, %arg7: memref<1x128xf32, #tpu.memory_space<vmem>>, %arg8: memref<9x128x128xbf16, #tpu.memory_space<vmem>>, %arg9: memref<1x128xf32, #tpu.memory_space<vmem>>, %arg10: memref<1x128xf32, #tpu.memory_space<vmem>>, %arg11: memref<1x8x16x128xbf16, #tpu.memory_space<vmem>>, %arg12: memref<10x18x128xbf16, #tpu.memory_space<vmem>>) attributes {dimension_semantics = [#tpu.dimension_semantics<parallel>, #tpu.dimension_semantics<parallel>], iteration_bounds = array<i64: 2, 2>, scalar_prefetch = 0 : i64, scratch_operands = 1 : i64, tpu.core_type = #tpu.core_type<tc>, window_params = [{transform_indices = @transform_0, window_bounds = array<i64: 1, 8, 16, 128>}, {transform_indices = @transform_1, window_bounds = array<i64: 1, 1, 16, 128>}, {transform_indices = @transform_2, window_bounds = array<i64: 1, 1, 16, 128>}, {pipeline_mode = #tpu.pipeline_mode<synchronous>, transform_indices = @transform_3, window_bounds = array<i64: 128, 128>}, {pipeline_mode = #tpu.pipeline_mode<synchronous>, transform_indices = @transform_4, window_bounds = array<i64: 1, 128>}, {pipeline_mode = #tpu.pipeline_mode<synchronous>, transform_indices = @transform_5, window_bounds = array<i64: 1, 128>}, {pipeline_mode = #tpu.pipeline_mode<synchronous>, transform_indices = @transform_6, window_bounds = array<i64: 9, 128, 128>}, {pipeline_mode = #tpu.pipeline_mode<synchronous>, transform_indices = @transform_7, window_bounds = array<i64: 1, 128>}, {pipeline_mode = #tpu.pipeline_mode<synchronous>, transform_indices = @transform_8, window_bounds = array<i64: 1, 128>}, {transform_indices = @transform_9, window_bounds = array<i64: 1, 8, 16, 128>}]} {
    %c0 = arith.constant 0 : index
    %c0_0 = arith.constant 0 : index
    %0 = vector.load %arg5[%c0, %c0_0] : memref<128x128xbf16, #tpu.memory_space<vmem>>, vector<128x128xbf16>
    %c0_1 = arith.constant 0 : index
    %c0_2 = arith.constant 0 : index
    %1 = vector.load %arg6[%c0_1, %c0_2] : memref<1x128xf32, #tpu.memory_space<vmem>>, vector<1x128xf32>
    %2 = vector.shape_cast %1 : vector<1x128xf32> to vector<128xf32>
    %c0_3 = arith.constant 0 : index
    %c0_4 = arith.constant 0 : index
    %3 = vector.load %arg7[%c0_3, %c0_4] : memref<1x128xf32, #tpu.memory_space<vmem>>, vector<1x128xf32>
    %4 = vector.shape_cast %3 : vector<1x128xf32> to vector<128xf32>
    %c0_5 = arith.constant 0 : index
    %c0_6 = arith.constant 0 : index
    %c0_7 = arith.constant 0 : index
    %c0_8 = arith.constant 0 : index
    %5 = vector.load %arg2[%c0_5, %c0_6, %c0_7, %c0_8] : memref<1x8x16x128xbf16, #tpu.memory_space<vmem>>, vector<1x8x16x128xbf16>
    %6 = vector.shape_cast %5 : vector<1x8x16x128xbf16> to vector<8x16x128xbf16>
    %7 = vector.shape_cast %6 : vector<8x16x128xbf16> to vector<128x128xbf16>
    %cst = arith.constant dense<0.000000e+00> : vector<128x128xf32>
    %8 = tpu.matmul %7, %0, %cst {dimension_numbers = #tpu.dot_dimension_numbers<[1], [0], [0], [1], [0, 0, 1, 1], [], []>} : vector<128x128xbf16>, vector<128x128xbf16>, vector<128x128xf32> -> vector<128x128xf32>
    %9 = vector.shape_cast %2 : vector<128xf32> to vector<1x128xf32>
    %10 = vector.broadcast %9 : vector<1x128xf32> to vector<128x128xf32>
    %11 = arith.mulf %8, %10 : vector<128x128xf32>
    %12 = vector.shape_cast %4 : vector<128xf32> to vector<1x128xf32>
    %13 = vector.broadcast %12 : vector<1x128xf32> to vector<128x128xf32>
    %14 = arith.addf %11, %13 : vector<128x128xf32>
    %cst_9 = arith.constant 0.000000e+00 : f32
    %15 = vector.broadcast %cst_9 : f32 to vector<128x128xf32>
    %16 = arith.maximumf %14, %15 : vector<128x128xf32>
    %17 = vector.shape_cast %16 : vector<128x128xf32> to vector<8x16x128xf32>
    %c0_10 = arith.constant 0 : index
    %c0_11 = arith.constant 0 : index
    %c0_12 = arith.constant 0 : index
    %c0_13 = arith.constant 0 : index
    %18 = vector.load %arg3[%c0_10, %c0_11, %c0_12, %c0_13] : memref<1x1x16x128xbf16, #tpu.memory_space<vmem>>, vector<1x1x16x128xbf16>
    %19 = vector.shape_cast %18 : vector<1x1x16x128xbf16> to vector<16x128xbf16>
    %cst_14 = arith.constant dense<0.000000e+00> : vector<16x128xf32>
    %20 = tpu.matmul %19, %0, %cst_14 {dimension_numbers = #tpu.dot_dimension_numbers<[1], [0], [0], [1], [0, 0, 1, 1], [], []>} : vector<16x128xbf16>, vector<128x128xbf16>, vector<16x128xf32> -> vector<16x128xf32>
    %21 = vector.shape_cast %2 : vector<128xf32> to vector<1x128xf32>
    %22 = vector.broadcast %21 : vector<1x128xf32> to vector<16x128xf32>
    %23 = arith.mulf %20, %22 : vector<16x128xf32>
    %24 = vector.shape_cast %4 : vector<128xf32> to vector<1x128xf32>
    %25 = vector.broadcast %24 : vector<1x128xf32> to vector<16x128xf32>
    %26 = arith.addf %23, %25 : vector<16x128xf32>
    %cst_15 = arith.constant 0.000000e+00 : f32
    %27 = vector.broadcast %cst_15 : f32 to vector<16x128xf32>
    %28 = arith.maximumf %26, %27 : vector<16x128xf32>
    %c0_16 = arith.constant 0 : index
    %c0_17 = arith.constant 0 : index
    %c0_18 = arith.constant 0 : index
    %c0_19 = arith.constant 0 : index
    %29 = vector.load %arg4[%c0_16, %c0_17, %c0_18, %c0_19] : memref<1x1x16x128xbf16, #tpu.memory_space<vmem>>, vector<1x1x16x128xbf16>
    %30 = vector.shape_cast %29 : vector<1x1x16x128xbf16> to vector<16x128xbf16>
    %cst_20 = arith.constant dense<0.000000e+00> : vector<16x128xf32>
    %31 = tpu.matmul %30, %0, %cst_20 {dimension_numbers = #tpu.dot_dimension_numbers<[1], [0], [0], [1], [0, 0, 1, 1], [], []>} : vector<16x128xbf16>, vector<128x128xbf16>, vector<16x128xf32> -> vector<16x128xf32>
    %32 = vector.shape_cast %2 : vector<128xf32> to vector<1x128xf32>
    %33 = vector.broadcast %32 : vector<1x128xf32> to vector<16x128xf32>
    %34 = arith.mulf %31, %33 : vector<16x128xf32>
    %35 = vector.shape_cast %4 : vector<128xf32> to vector<1x128xf32>
    %36 = vector.broadcast %35 : vector<1x128xf32> to vector<16x128xf32>
    %37 = arith.addf %34, %36 : vector<16x128xf32>
    %cst_21 = arith.constant 0.000000e+00 : f32
    %38 = vector.broadcast %cst_21 : f32 to vector<16x128xf32>
    %39 = arith.maximumf %37, %38 : vector<16x128xf32>
    %c0_i32 = arith.constant 0 : i32
    %40 = arith.cmpi sgt, %arg1, %c0_i32 : i32
    %cst_22 = arith.constant 0.000000e+00 : f32
    %41 = vector.broadcast %cst_22 : f32 to vector<16x128xf32>
    %42 = arith.select %40, %28, %41 : vector<16x128xf32>
    %c1_i32 = arith.constant 1 : i32
    %43 = arith.addi %arg1, %c1_i32 : i32
    %c8_i32 = arith.constant 8 : i32
    %44 = arith.muli %43, %c8_i32 : i32
    %c16_i32 = arith.constant 16 : i32
    %45 = arith.cmpi slt, %44, %c16_i32 : i32
    %cst_23 = arith.constant 0.000000e+00 : f32
    %46 = vector.broadcast %cst_23 : f32 to vector<16x128xf32>
    %47 = arith.select %45, %39, %46 : vector<16x128xf32>
    %cst_24 = arith.constant 0.000000e+00 : bf16
    %48 = vector.broadcast %cst_24 : bf16 to vector<10x1x128xbf16>
    %c0_25 = arith.constant 0 : index
    %c0_26 = arith.constant 0 : index
    %c0_27 = arith.constant 0 : index
    %49 = vector.load %arg12[%c0_25, %c0_26, %c0_27] : memref<10x18x128xbf16, #tpu.memory_space<vmem>>, vector<10x1x128xbf16>
    tpu.vector_store %arg12[%c0_25, %c0_26, %c0_27], %48 {strides = array<i32>} : memref<10x18x128xbf16, #tpu.memory_space<vmem>>, vector<10x1x128xbf16>,
    %cst_28 = arith.constant 0.000000e+00 : bf16
    %50 = vector.broadcast %cst_28 : bf16 to vector<10x1x128xbf16>
    %c0_29 = arith.constant 0 : index
    %c17 = arith.constant 17 : index
    %c0_30 = arith.constant 0 : index
    %51 = vector.load %arg12[%c0_29, %c17, %c0_30] : memref<10x18x128xbf16, #tpu.memory_space<vmem>>, vector<10x1x128xbf16>
    tpu.vector_store %arg12[%c0_29, %c17, %c0_30], %50 {strides = array<i32>} : memref<10x18x128xbf16, #tpu.memory_space<vmem>>, vector<10x1x128xbf16>,
    %52 = vector.shape_cast %42 : vector<16x128xf32> to vector<1x16x128xf32>
    %53 = arith.truncf %52 : vector<1x16x128xf32> to vector<1x16x128xbf16>
    %c0_31 = arith.constant 0 : index
    %c1 = arith.constant 1 : index
    %c0_32 = arith.constant 0 : index
    %54 = vector.load %arg12[%c0_31, %c1, %c0_32] : memref<10x18x128xbf16, #tpu.memory_space<vmem>>, vector<1x16x128xbf16>
    tpu.vector_store %arg12[%c0_31, %c1, %c0_32], %53 {strides = array<i32>} : memref<10x18x128xbf16, #tpu.memory_space<vmem>>, vector<1x16x128xbf16>,
    %55 = arith.truncf %17 : vector<8x16x128xf32> to vector<8x16x128xbf16>
    %c1_33 = arith.constant 1 : index
    %c1_34 = arith.constant 1 : index
    %c0_35 = arith.constant 0 : index
    %56 = vector.load %arg12[%c1_33, %c1_34, %c0_35] : memref<10x18x128xbf16, #tpu.memory_space<vmem>>, vector<8x16x128xbf16>
    tpu.vector_store %arg12[%c1_33, %c1_34, %c0_35], %55 {strides = array<i32>} : memref<10x18x128xbf16, #tpu.memory_space<vmem>>, vector<8x16x128xbf16>,
    %57 = vector.shape_cast %47 : vector<16x128xf32> to vector<1x16x128xf32>
    %58 = arith.truncf %57 : vector<1x16x128xf32> to vector<1x16x128xbf16>
    %c9 = arith.constant 9 : index
    %c1_36 = arith.constant 1 : index
    %c0_37 = arith.constant 0 : index
    %59 = vector.load %arg12[%c9, %c1_36, %c0_37] : memref<10x18x128xbf16, #tpu.memory_space<vmem>>, vector<1x16x128xbf16>
    tpu.vector_store %arg12[%c9, %c1_36, %c0_37], %58 {strides = array<i32>} : memref<10x18x128xbf16, #tpu.memory_space<vmem>>, vector<1x16x128xbf16>,
    %cst_38 = arith.constant 0.000000e+00 : f32
    %60 = vector.broadcast %cst_38 : f32 to vector<128x128xf32>
    %c0_39 = arith.constant 0 : index
    %c0_40 = arith.constant 0 : index
    %c0_41 = arith.constant 0 : index
    %61 = vector.load %arg12[%c0_39, %c0_40, %c0_41] : memref<10x18x128xbf16, #tpu.memory_space<vmem>>, vector<8x16x128xbf16>
    %62 = vector.shape_cast %61 : vector<8x16x128xbf16> to vector<128x128xbf16>
    %c0_42 = arith.constant 0 : index
    %c0_43 = arith.constant 0 : index
    %c0_44 = arith.constant 0 : index
    %63 = vector.load %arg8[%c0_42, %c0_43, %c0_44] : memref<9x128x128xbf16, #tpu.memory_space<vmem>>, vector<1x128x128xbf16>
    %64 = vector.shape_cast %63 : vector<1x128x128xbf16> to vector<128x128xbf16>
    %cst_45 = arith.constant dense<0.000000e+00> : vector<128x128xf32>
    %65 = tpu.matmul %62, %64, %cst_45 {dimension_numbers = #tpu.dot_dimension_numbers<[1], [0], [0], [1], [0, 0, 1, 1], [], []>} : vector<128x128xbf16>, vector<128x128xbf16>, vector<128x128xf32> -> vector<128x128xf32>
    %66 = arith.addf %60, %65 : vector<128x128xf32>
    %c0_46 = arith.constant 0 : index
    %c1_47 = arith.constant 1 : index
    %c0_48 = arith.constant 0 : index
    %67 = vector.load %arg12[%c0_46, %c1_47, %c0_48] : memref<10x18x128xbf16, #tpu.memory_space<vmem>>, vector<8x16x128xbf16>
    %68 = vector.shape_cast %67 : vector<8x16x128xbf16> to vector<128x128xbf16>
    %c1_49 = arith.constant 1 : index
    %c0_50 = arith.constant 0 : index
    %c0_51 = arith.constant 0 : index
    %69 = vector.load %arg8[%c1_49, %c0_50, %c0_51] : memref<9x128x128xbf16, #tpu.memory_space<vmem>>, vector<1x128x128xbf16>
    %70 = vector.shape_cast %69 : vector<1x128x128xbf16> to vector<128x128xbf16>
    %cst_52 = arith.constant dense<0.000000e+00> : vector<128x128xf32>
    %71 = tpu.matmul %68, %70, %cst_52 {dimension_numbers = #tpu.dot_dimension_numbers<[1], [0], [0], [1], [0, 0, 1, 1], [], []>} : vector<128x128xbf16>, vector<128x128xbf16>, vector<128x128xf32> -> vector<128x128xf32>
    %72 = arith.addf %66, %71 : vector<128x128xf32>
    %c0_53 = arith.constant 0 : index
    %c2 = arith.constant 2 : index
    %c0_54 = arith.constant 0 : index
    %73 = vector.load %arg12[%c0_53, %c2, %c0_54] : memref<10x18x128xbf16, #tpu.memory_space<vmem>>, vector<8x16x128xbf16>
    %74 = vector.shape_cast %73 : vector<8x16x128xbf16> to vector<128x128xbf16>
    %c2_55 = arith.constant 2 : index
    %c0_56 = arith.constant 0 : index
    %c0_57 = arith.constant 0 : index
    %75 = vector.load %arg8[%c2_55, %c0_56, %c0_57] : memref<9x128x128xbf16, #tpu.memory_space<vmem>>, vector<1x128x128xbf16>
    %76 = vector.shape_cast %75 : vector<1x128x128xbf16> to vector<128x128xbf16>
    %cst_58 = arith.constant dense<0.000000e+00> : vector<128x128xf32>
    %77 = tpu.matmul %74, %76, %cst_58 {dimension_numbers = #tpu.dot_dimension_numbers<[1], [0], [0], [1], [0, 0, 1, 1], [], []>} : vector<128x128xbf16>, vector<128x128xbf16>, vector<128x128xf32> -> vector<128x128xf32>
    %78 = arith.addf %72, %77 : vector<128x128xf32>
    %c1_59 = arith.constant 1 : index
    %c0_60 = arith.constant 0 : index
    %c0_61 = arith.constant 0 : index
    %79 = vector.load %arg12[%c1_59, %c0_60, %c0_61] : memref<10x18x128xbf16, #tpu.memory_space<vmem>>, vector<8x16x128xbf16>
    %80 = vector.shape_cast %79 : vector<8x16x128xbf16> to vector<128x128xbf16>
    %c3 = arith.constant 3 : index
    %c0_62 = arith.constant 0 : index
    %c0_63 = arith.constant 0 : index
    %81 = vector.load %arg8[%c3, %c0_62, %c0_63] : memref<9x128x128xbf16, #tpu.memory_space<vmem>>, vector<1x128x128xbf16>
    %82 = vector.shape_cast %81 : vector<1x128x128xbf16> to vector<128x128xbf16>
    %cst_64 = arith.constant dense<0.000000e+00> : vector<128x128xf32>
    %83 = tpu.matmul %80, %82, %cst_64 {dimension_numbers = #tpu.dot_dimension_numbers<[1], [0], [0], [1], [0, 0, 1, 1], [], []>} : vector<128x128xbf16>, vector<128x128xbf16>, vector<128x128xf32> -> vector<128x128xf32>
    %84 = arith.addf %78, %83 : vector<128x128xf32>
    %c1_65 = arith.constant 1 : index
    %c1_66 = arith.constant 1 : index
    %c0_67 = arith.constant 0 : index
    %85 = vector.load %arg12[%c1_65, %c1_66, %c0_67] : memref<10x18x128xbf16, #tpu.memory_space<vmem>>, vector<8x16x128xbf16>
    %86 = vector.shape_cast %85 : vector<8x16x128xbf16> to vector<128x128xbf16>
    %c4 = arith.constant 4 : index
    %c0_68 = arith.constant 0 : index
    %c0_69 = arith.constant 0 : index
    %87 = vector.load %arg8[%c4, %c0_68, %c0_69] : memref<9x128x128xbf16, #tpu.memory_space<vmem>>, vector<1x128x128xbf16>
    %88 = vector.shape_cast %87 : vector<1x128x128xbf16> to vector<128x128xbf16>
    %cst_70 = arith.constant dense<0.000000e+00> : vector<128x128xf32>
    %89 = tpu.matmul %86, %88, %cst_70 {dimension_numbers = #tpu.dot_dimension_numbers<[1], [0], [0], [1], [0, 0, 1, 1], [], []>} : vector<128x128xbf16>, vector<128x128xbf16>, vector<128x128xf32> -> vector<128x128xf32>
    %90 = arith.addf %84, %89 : vector<128x128xf32>
    %c1_71 = arith.constant 1 : index
    %c2_72 = arith.constant 2 : index
    %c0_73 = arith.constant 0 : index
    %91 = vector.load %arg12[%c1_71, %c2_72, %c0_73] : memref<10x18x128xbf16, #tpu.memory_space<vmem>>, vector<8x16x128xbf16>
    %92 = vector.shape_cast %91 : vector<8x16x128xbf16> to vector<128x128xbf16>
    %c5 = arith.constant 5 : index
    %c0_74 = arith.constant 0 : index
    %c0_75 = arith.constant 0 : index
    %93 = vector.load %arg8[%c5, %c0_74, %c0_75] : memref<9x128x128xbf16, #tpu.memory_space<vmem>>, vector<1x128x128xbf16>
    %94 = vector.shape_cast %93 : vector<1x128x128xbf16> to vector<128x128xbf16>
    %cst_76 = arith.constant dense<0.000000e+00> : vector<128x128xf32>
    %95 = tpu.matmul %92, %94, %cst_76 {dimension_numbers = #tpu.dot_dimension_numbers<[1], [0], [0], [1], [0, 0, 1, 1], [], []>} : vector<128x128xbf16>, vector<128x128xbf16>, vector<128x128xf32> -> vector<128x128xf32>
    %96 = arith.addf %90, %95 : vector<128x128xf32>
    %c2_77 = arith.constant 2 : index
    %c0_78 = arith.constant 0 : index
    %c0_79 = arith.constant 0 : index
    %97 = vector.load %arg12[%c2_77, %c0_78, %c0_79] : memref<10x18x128xbf16, #tpu.memory_space<vmem>>, vector<8x16x128xbf16>
    %98 = vector.shape_cast %97 : vector<8x16x128xbf16> to vector<128x128xbf16>
    %c6 = arith.constant 6 : index
    %c0_80 = arith.constant 0 : index
    %c0_81 = arith.constant 0 : index
    %99 = vector.load %arg8[%c6, %c0_80, %c0_81] : memref<9x128x128xbf16, #tpu.memory_space<vmem>>, vector<1x128x128xbf16>
    %100 = vector.shape_cast %99 : vector<1x128x128xbf16> to vector<128x128xbf16>
    %cst_82 = arith.constant dense<0.000000e+00> : vector<128x128xf32>
    %101 = tpu.matmul %98, %100, %cst_82 {dimension_numbers = #tpu.dot_dimension_numbers<[1], [0], [0], [1], [0, 0, 1, 1], [], []>} : vector<128x128xbf16>, vector<128x128xbf16>, vector<128x128xf32> -> vector<128x128xf32>
    %102 = arith.addf %96, %101 : vector<128x128xf32>
    %c2_83 = arith.constant 2 : index
    %c1_84 = arith.constant 1 : index
    %c0_85 = arith.constant 0 : index
    %103 = vector.load %arg12[%c2_83, %c1_84, %c0_85] : memref<10x18x128xbf16, #tpu.memory_space<vmem>>, vector<8x16x128xbf16>
    %104 = vector.shape_cast %103 : vector<8x16x128xbf16> to vector<128x128xbf16>
    %c7 = arith.constant 7 : index
    %c0_86 = arith.constant 0 : index
    %c0_87 = arith.constant 0 : index
    %105 = vector.load %arg8[%c7, %c0_86, %c0_87] : memref<9x128x128xbf16, #tpu.memory_space<vmem>>, vector<1x128x128xbf16>
    %106 = vector.shape_cast %105 : vector<1x128x128xbf16> to vector<128x128xbf16>
    %cst_88 = arith.constant dense<0.000000e+00> : vector<128x128xf32>
    %107 = tpu.matmul %104, %106, %cst_88 {dimension_numbers = #tpu.dot_dimension_numbers<[1], [0], [0], [1], [0, 0, 1, 1], [], []>} : vector<128x128xbf16>, vector<128x128xbf16>, vector<128x128xf32> -> vector<128x128xf32>
    %108 = arith.addf %102, %107 : vector<128x128xf32>
    %c2_89 = arith.constant 2 : index
    %c2_90 = arith.constant 2 : index
    %c0_91 = arith.constant 0 : index
    %109 = vector.load %arg12[%c2_89, %c2_90, %c0_91] : memref<10x18x128xbf16, #tpu.memory_space<vmem>>, vector<8x16x128xbf16>
    %110 = vector.shape_cast %109 : vector<8x16x128xbf16> to vector<128x128xbf16>
    %c8 = arith.constant 8 : index
    %c0_92 = arith.constant 0 : index
    %c0_93 = arith.constant 0 : index
    %111 = vector.load %arg8[%c8, %c0_92, %c0_93] : memref<9x128x128xbf16, #tpu.memory_space<vmem>>, vector<1x128x128xbf16>
    %112 = vector.shape_cast %111 : vector<1x128x128xbf16> to vector<128x128xbf16>
    %cst_94 = arith.constant dense<0.000000e+00> : vector<128x128xf32>
    %113 = tpu.matmul %110, %112, %cst_94 {dimension_numbers = #tpu.dot_dimension_numbers<[1], [0], [0], [1], [0, 0, 1, 1], [], []>} : vector<128x128xbf16>, vector<128x128xbf16>, vector<128x128xf32> -> vector<128x128xf32>
    %114 = arith.addf %108, %113 : vector<128x128xf32>
    %c0_95 = arith.constant 0 : index
    %c0_96 = arith.constant 0 : index
    %115 = vector.load %arg9[%c0_95, %c0_96] : memref<1x128xf32, #tpu.memory_space<vmem>>, vector<1x128xf32>
    %116 = vector.shape_cast %115 : vector<1x128xf32> to vector<128xf32>
    %117 = vector.shape_cast %116 : vector<128xf32> to vector<1x128xf32>
    %118 = vector.broadcast %117 : vector<1x128xf32> to vector<128x128xf32>
    %119 = arith.mulf %114, %118 : vector<128x128xf32>
    %c0_97 = arith.constant 0 : index
    %c0_98 = arith.constant 0 : index
    %120 = vector.load %arg10[%c0_97, %c0_98] : memref<1x128xf32, #tpu.memory_space<vmem>>, vector<1x128xf32>
    %121 = vector.shape_cast %120 : vector<1x128xf32> to vector<128xf32>
    %122 = vector.shape_cast %121 : vector<128xf32> to vector<1x128xf32>
    %123 = vector.broadcast %122 : vector<1x128xf32> to vector<128x128xf32>
    %124 = arith.addf %119, %123 : vector<128x128xf32>
    %cst_99 = arith.constant 0.000000e+00 : f32
    %125 = vector.broadcast %cst_99 : f32 to vector<128x128xf32>
    %126 = arith.maximumf %124, %125 : vector<128x128xf32>
    %127 = vector.shape_cast %126 : vector<128x128xf32> to vector<1x8x16x128xf32>
    %128 = arith.truncf %127 : vector<1x8x16x128xf32> to vector<1x8x16x128xbf16>
    %c0_100 = arith.constant 0 : index
    %c0_101 = arith.constant 0 : index
    %c0_102 = arith.constant 0 : index
    %c0_103 = arith.constant 0 : index
    %129 = vector.load %arg11[%c0_100, %c0_101, %c0_102, %c0_103] : memref<1x8x16x128xbf16, #tpu.memory_space<vmem>>, vector<1x8x16x128xbf16>
    tpu.vector_store %arg11[%c0_100, %c0_101, %c0_102, %c0_103], %128 {strides = array<i32>} : memref<1x8x16x128xbf16, #tpu.memory_space<vmem>>, vector<1x8x16x128xbf16>,
    return
  }
  func.func @transform_0(%arg0: i32, %arg1: i32) -> (i32, i32, i32, i32) {
    %c0_i32 = arith.constant 0 : i32
    %c0_i32_0 = arith.constant 0 : i32
    %c0_i32_1 = arith.constant 0 : i32
    return %arg0, %arg1, %c0_i32, %c0_i32_0 : i32, i32, i32, i32
  }
  func.func @transform_1(%arg0: i32, %arg1: i32) -> (i32, i32, i32, i32) {
    %c8_i32 = arith.constant 8 : i32
    %0 = arith.muli %arg1, %c8_i32 : i32
    %c1_i32 = arith.constant 1 : i32
    %1 = arith.subi %0, %c1_i32 : i32
    %c0_i32 = arith.constant 0 : i32
    %2 = arith.maxsi %1, %c0_i32 : i32
    %c0_i32_0 = arith.constant 0 : i32
    %c0_i32_1 = arith.constant 0 : i32
    %c0_i32_2 = arith.constant 0 : i32
    return %arg0, %2, %c0_i32_0, %c0_i32_1 : i32, i32, i32, i32
  }
  func.func @transform_2(%arg0: i32, %arg1: i32) -> (i32, i32, i32, i32) {
    %c8_i32 = arith.constant 8 : i32
    %0 = arith.muli %arg1, %c8_i32 : i32
    %c8_i32_0 = arith.constant 8 : i32
    %1 = arith.addi %0, %c8_i32_0 : i32
    %c15_i32 = arith.constant 15 : i32
    %2 = arith.minsi %1, %c15_i32 : i32
    %c0_i32 = arith.constant 0 : i32
    %c0_i32_1 = arith.constant 0 : i32
    %c0_i32_2 = arith.constant 0 : i32
    return %arg0, %2, %c0_i32, %c0_i32_1 : i32, i32, i32, i32
  }
  func.func @transform_3(%arg0: i32, %arg1: i32) -> (i32, i32) {
    %c0_i32 = arith.constant 0 : i32
    %c0_i32_0 = arith.constant 0 : i32
    %c0_i32_1 = arith.constant 0 : i32
    return %c0_i32, %c0_i32_0 : i32, i32
  }
  func.func @transform_4(%arg0: i32, %arg1: i32) -> (i32, i32) {
    %c0_i32 = arith.constant 0 : i32
    %c0_i32_0 = arith.constant 0 : i32
    %c0_i32_1 = arith.constant 0 : i32
    return %c0_i32, %c0_i32_0 : i32, i32
  }
  func.func @transform_5(%arg0: i32, %arg1: i32) -> (i32, i32) {
    %c0_i32 = arith.constant 0 : i32
    %c0_i32_0 = arith.constant 0 : i32
    %c0_i32_1 = arith.constant 0 : i32
    return %c0_i32, %c0_i32_0 : i32, i32
  }
  func.func @transform_6(%arg0: i32, %arg1: i32) -> (i32, i32, i32) {
    %c0_i32 = arith.constant 0 : i32
    %c0_i32_0 = arith.constant 0 : i32
    %c0_i32_1 = arith.constant 0 : i32
    %c0_i32_2 = arith.constant 0 : i32
    return %c0_i32, %c0_i32_0, %c0_i32_1 : i32, i32, i32
  }
  func.func @transform_7(%arg0: i32, %arg1: i32) -> (i32, i32) {
    %c0_i32 = arith.constant 0 : i32
    %c0_i32_0 = arith.constant 0 : i32
    %c0_i32_1 = arith.constant 0 : i32
    return %c0_i32, %c0_i32_0 : i32, i32
  }
  func.func @transform_8(%arg0: i32, %arg1: i32) -> (i32, i32) {
    %c0_i32 = arith.constant 0 : i32
    %c0_i32_0 = arith.constant 0 : i32
    %c0_i32_1 = arith.constant 0 : i32
    return %c0_i32, %c0_i32_0 : i32, i32
  }
  func.func @transform_9(%arg0: i32, %arg1: i32) -> (i32, i32, i32, i32) {
    %c0_i32 = arith.constant 0 : i32
    %c0_i32_0 = arith.constant 0 : i32
    %c0_i32_1 = arith.constant 0 : i32
    return %arg0, %arg1, %c0_i32, %c0_i32_0 : i32, i32, i32, i32
  }
}

</mosaic_0001>

<llo_original>
// kernel: _forward_impl.1
$region0: #{_forward_impl.1}
  #allocation0 [shape = 'u32[]', space=smem, size = 0x4, offset = 0x4, fixed_abs, tag = 'smem constant byte address 0x4 - core index']
  #allocation1 [shape = 'u32[144,128]{1,0:T(1,128)}', space=vmem, size = 0x12000, scoped, tag = 'internal scratch']
  #allocation2 [shape = 'bf16[10,18,128]{2,1,0:T(8,128)(2,1)}', space=vmem, size = 0xf000, scoped, tag = 'scratch operand']
  %s0 = inlined_call_operand.vmem [shape: bf16[2,16,16,128], index: 0, kind: input, shape index: {}, may-alias: {0,1,2}]
  %s1 = inlined_call_operand.vmem [shape: bf16[2,16,16,128], index: 1, kind: input, shape index: {}, may-alias: {0,1,2}]
  %s2 = inlined_call_operand.vmem [shape: bf16[2,16,16,128], index: 2, kind: input, shape index: {}, may-alias: {0,1,2}]
  %s3 = inlined_call_operand.vmem [shape: bf16[128,128], index: 3, kind: input, shape index: {}]
  %s4 = inlined_call_operand.vmem [shape: f32[1,128], index: 4, kind: input, shape index: {}]
  %s5 = inlined_call_operand.vmem [shape: f32[1,128], index: 5, kind: input, shape index: {}]
  %s6 = inlined_call_operand.vmem [shape: bf16[9,128,128], index: 6, kind: input, shape index: {}]
  %s7 = inlined_call_operand.vmem [shape: f32[1,128], index: 7, kind: input, shape index: {}]
  %s8 = inlined_call_operand.vmem [shape: f32[1,128], index: 8, kind: input, shape index: {}]
  %s9 = inlined_call_operand.vmem [shape: bf16[2,16,16,128], index: 9, kind: output, shape index: {}]
  %s10 = sld [smem:[#allocation0]]
  $region69: #{_forward_impl.1} parent=0
    _
  %s12 = ssub.s32 1, %s10
  %s13 = scalar_select 0, %s12, %s10
  loop: start=0, step=1, limit=6
  $region2: #{_forward_impl.1} parent=0 // loop_pre_header
    _
  $region3: #{_forward_impl.1} parent=0 // loop_header
    %s15 = sphi 0, %s19
    %p16 = scmp.ge.s32.totalorder %s15, 6
    %s22 = sphi 0, %s34
    %s23 = sphi 0, %s30
    %s24 = sphi 0, %s22
    %s25 = sphi 0, %s23
    %s26 = sphi 0, %s24
    %s27 = sphi 0, %s25
    %s39 = sphi 0, %s41
    %s42 = sphi 0, %s39
    %s43 = sphi 0, %s42
    %s59 = sphi 0, %s43
    %s75 = sphi 0, %s77
    %s78 = sphi 0, %s75
    %s79 = sphi 0, %s78
    %s95 = sphi 0, %s79
    %s111 = sphi 0, %s113
    %s114 = sphi 0, %s111
    %s115 = sphi 0, %s114
    %s131 = sphi 0, %s115
    %s135 = sphi 0, %s135
    %s137 = sphi 0, %s135
    %s138 = sphi 0, %s137
    %s152 = sphi 0, %s138
    %s156 = sphi 0, %s156
    %s158 = sphi 0, %s156
    %s159 = sphi 0, %s158
    %s173 = sphi 0, %s159
    %s177 = sphi 0, %s177
    %s179 = sphi 0, %s177
    %s180 = sphi 0, %s179
    %s194 = sphi 0, %s180
    %s198 = sphi 0, %s198
    %s200 = sphi 0, %s198
    %s201 = sphi 0, %s200
    %s215 = sphi 0, %s201
    %s219 = sphi 0, %s219
    %s221 = sphi 0, %s219
    %s222 = sphi 0, %s221
    %s236 = sphi 0, %s222
    %s240 = sphi 0, %s240
    %s242 = sphi 0, %s240
    %s243 = sphi 0, %s242
    %s257 = sphi 0, %s243
    %s265 = sphi 0, %s267
    %s268 = sphi 0, %s265
    %s269 = sphi 0, %s268
    %s285 = sphi 0, %s269
  $region4: #{_forward_impl.1} parent=0 // loop_header_branch
    %18 = sbr.rel (%p16) target = $region8
  $region5: #{_forward_impl.1} parent=0 // loop_body
    %s20 = ssub.s32 %s15, 1
    %s21 = ssub.s32 %s15, 2
    %s28 = sadd.s32 1, %s23
    %p29 = scmp.ge.s32.totalorder %s28, 2
    %s30 = scalar_select %p29, 0, %s28
    %s31 = sadd.s32 1, %s22
    %s32 = scalar_select %p29, %s31, %s22
    %p33 = scmp.ge.s32.totalorder %s32, 2
    %s34 = scalar_select %p33, 0, %s32
    %s35 = ssub.s32 %s22, %s34
    %s36 = ssub.s32 %s23, %s30
    %s37 = sor.u32 %s35, %s36
    %p38 = scmp.eq.s32.totalorder %s37, 0
    %s40 = sadd.s32 %s39, 1
    %s41 = scalar_select %p38, %s39, %s40
    %p44 = pneg %p38
    %p45 = scmp.eq.s32.totalorder %s15, 3
    %p46 = por %p44, %p45
    %p47 = scmp.ne.s32.totalorder %s39, %s42
    %p48 = scmp.eq.s32.totalorder %s15, 0
    %p49 = por %p47, %p48
    %p50 = scmp.ne.s32.totalorder %s39, %s42
    %p51 = scmp.eq.s32.totalorder %s20, 3
    %p52 = por %p50, %p51
    %p53 = scmp.ne.s32.totalorder %s42, %s43
    %p54 = scmp.eq.s32.totalorder %s20, 0
    %p55 = por %p53, %p54
    %p56 = scmp.ne.s32.totalorder %s42, %s43
    %p57 = scmp.eq.s32.totalorder %s21, 3
    %p58 = por %p56, %p57
    %p60 = scmp.ne.s32.totalorder %s43, %s59
    %p61 = scmp.eq.s32.totalorder %s21, 0
    %p62 = por %p60, %p61
    %s63 = smul.u32 %s23, 8
    %s64 = ssub.s32 %s63, 1
    %p65 = scmp.gt.s32.totalorder %s64, 0
    %s66 = scalar_select %p65, %s64, 0
    %s67 = smul.u32 %s30, 8
    %s68 = ssub.s32 %s67, 1
    %p69 = scmp.gt.s32.totalorder %s68, 0
    %s70 = scalar_select %p69, %s68, 0
    %s71 = ssub.s32 %s22, %s34
    %s72 = ssub.s32 %s66, %s70
    %s73 = sor.u32 %s71, %s72
    %p74 = scmp.eq.s32.totalorder %s73, 0
    %s76 = sadd.s32 %s75, 1
    %s77 = scalar_select %p74, %s75, %s76
    %p80 = pneg %p74
    %p81 = scmp.eq.s32.totalorder %s15, 3
    %p82 = por %p80, %p81
    %p83 = scmp.ne.s32.totalorder %s75, %s78
    %p84 = scmp.eq.s32.totalorder %s15, 0
    %p85 = por %p83, %p84
    %p86 = scmp.ne.s32.totalorder %s75, %s78
    %p87 = scmp.eq.s32.totalorder %s20, 3
    %p88 = por %p86, %p87
    %p89 = scmp.ne.s32.totalorder %s78, %s79
    %p90 = scmp.eq.s32.totalorder %s20, 0
    %p91 = por %p89, %p90
    %p92 = scmp.ne.s32.totalorder %s78, %s79
    %p93 = scmp.eq.s32.totalorder %s21, 3
    %p94 = por %p92, %p93
    %p96 = scmp.ne.s32.totalorder %s79, %s95
    %p97 = scmp.eq.s32.totalorder %s21, 0
    %p98 = por %p96, %p97
    %s99 = smul.u32 %s23, 8
    %s100 = sadd.s32 %s99, 8
    %p101 = scmp.lt.s32.totalorder %s100, 15
    %s102 = scalar_select %p101, %s100, 15
    %s103 = smul.u32 %s30, 8
    %s104 = sadd.s32 %s103, 8
    %p105 = scmp.lt.s32.totalorder %s104, 15
    %s106 = scalar_select %p105, %s104, 15
    %s107 = ssub.s32 %s22, %s34
    %s108 = ssub.s32 %s102, %s106
    %s109 = sor.u32 %s107, %s108
    %p110 = scmp.eq.s32.totalorder %s109, 0
    %s112 = sadd.s32 %s111, 1
    %s113 = scalar_select %p110, %s111, %s112
    %p116 = pneg %p110
    %p117 = scmp.eq.s32.totalorder %s15, 3
    %p118 = por %p116, %p117
    %p119 = scmp.ne.s32.totalorder %s111, %s114
    %p120 = scmp.eq.s32.totalorder %s15, 0
    %p121 = por %p119, %p120
    %p122 = scmp.ne.s32.totalorder %s111, %s114
    %p123 = scmp.eq.s32.totalorder %s20, 3
    %p124 = por %p122, %p123
    %p125 = scmp.ne.s32.totalorder %s114, %s115
    %p126 = scmp.eq.s32.totalorder %s20, 0
    %p127 = por %p125, %p126
    %p128 = scmp.ne.s32.totalorder %s114, %s115
    %p129 = scmp.eq.s32.totalorder %s21, 3
    %p130 = por %p128, %p129
    %p132 = scmp.ne.s32.totalorder %s115, %s131
    %p133 = scmp.eq.s32.totalorder %s21, 0
    %p134 = por %p132, %p133
    %s136 = sadd.s32 %s135, 1
    %p139 = scmp.eq.s32.totalorder %s15, 3
    %p140 = scmp.ne.s32.totalorder %s135, %s137
    %p141 = scmp.eq.s32.totalorder %s15, 0
    %p142 = por %p140, %p141
    %p143 = scmp.ne.s32.totalorder %s135, %s137
    %p144 = scmp.eq.s32.totalorder %s20, 3
    %p145 = por %p143, %p144
    %p146 = scmp.ne.s32.totalorder %s137, %s138
    %p147 = scmp.eq.s32.totalorder %s20, 0
    %p148 = por %p146, %p147
    %p149 = scmp.ne.s32.totalorder %s137, %s138
    %p150 = scmp.eq.s32.totalorder %s21, 3
    %p151 = por %p149, %p150
    %p153 = scmp.ne.s32.totalorder %s138, %s152
    %p154 = scmp.eq.s32.totalorder %s21, 0
    %p155 = por %p153, %p154
    %s157 = sadd.s32 %s156, 1
    %p160 = scmp.eq.s32.totalorder %s15, 3
    %p161 = scmp.ne.s32.totalorder %s156, %s158
    %p162 = scmp.eq.s32.totalorder %s15, 0
    %p163 = por %p161, %p162
    %p164 = scmp.ne.s32.totalorder %s156, %s158
    %p165 = scmp.eq.s32.totalorder %s20, 3
    %p166 = por %p164, %p165
    %p167 = scmp.ne.s32.totalorder %s158, %s159
    %p168 = scmp.eq.s32.totalorder %s20, 0
    %p169 = por %p167, %p168
    %p170 = scmp.ne.s32.totalorder %s158, %s159
    %p171 = scmp.eq.s32.totalorder %s21, 3
    %p172 = por %p170, %p171
    %p174 = scmp.ne.s32.totalorder %s159, %s173
    %p175 = scmp.eq.s32.totalorder %s21, 0
    %p176 = por %p174, %p175
    %s178 = sadd.s32 %s177, 1
    %p181 = scmp.eq.s32.totalorder %s15, 3
    %p182 = scmp.ne.s32.totalorder %s177, %s179
    %p183 = scmp.eq.s32.totalorder %s15, 0
    %p184 = por %p182, %p183
    %p185 = scmp.ne.s32.totalorder %s177, %s179
    %p186 = scmp.eq.s32.totalorder %s20, 3
    %p187 = por %p185, %p186
    %p188 = scmp.ne.s32.totalorder %s179, %s180
    %p189 = scmp.eq.s32.totalorder %s20, 0
    %p190 = por %p188, %p189
    %p191 = scmp.ne.s32.totalorder %s179, %s180
    %p192 = scmp.eq.s32.totalorder %s21, 3
    %p193 = por %p191, %p192
    %p195 = scmp.ne.s32.totalorder %s180, %s194
    %p196 = scmp.eq.s32.totalorder %s21, 0
    %p197 = por %p195, %p196
    %s199 = sadd.s32 %s198, 1
    %p202 = scmp.eq.s32.totalorder %s15, 3
    %p203 = scmp.ne.s32.totalorder %s198, %s200
    %p204 = scmp.eq.s32.totalorder %s15, 0
    %p205 = por %p203, %p204
    %p206 = scmp.ne.s32.totalorder %s198, %s200
    %p207 = scmp.eq.s32.totalorder %s20, 3
    %p208 = por %p206, %p207
    %p209 = scmp.ne.s32.totalorder %s200, %s201
    %p210 = scmp.eq.s32.totalorder %s20, 0
    %p211 = por %p209, %p210
    %p212 = scmp.ne.s32.totalorder %s200, %s201
    %p213 = scmp.eq.s32.totalorder %s21, 3
    %p214 = por %p212, %p213
    %p216 = scmp.ne.s32.totalorder %s201, %s215
    %p217 = scmp.eq.s32.totalorder %s21, 0
    %p218 = por %p216, %p217
    %s220 = sadd.s32 %s219, 1
    %p223 = scmp.eq.s32.totalorder %s15, 3
    %p224 = scmp.ne.s32.totalorder %s219, %s221
    %p225 = scmp.eq.s32.totalorder %s15, 0
    %p226 = por %p224, %p225
    %p227 = scmp.ne.s32.totalorder %s219, %s221
    %p228 = scmp.eq.s32.totalorder %s20, 3
    %p229 = por %p227, %p228
    %p230 = scmp.ne.s32.totalorder %s221, %s222
    %p231 = scmp.eq.s32.totalorder %s20, 0
    %p232 = por %p230, %p231
    %p233 = scmp.ne.s32.totalorder %s221, %s222
    %p234 = scmp.eq.s32.totalorder %s21, 3
    %p235 = por %p233, %p234
    %p237 = scmp.ne.s32.totalorder %s222, %s236
    %p238 = scmp.eq.s32.totalorder %s21, 0
    %p239 = por %p237, %p238
    %s241 = sadd.s32 %s240, 1
    %p244 = scmp.eq.s32.totalorder %s15, 3
    %p245 = scmp.ne.s32.totalorder %s240, %s242
    %p246 = scmp.eq.s32.totalorder %s15, 0
    %p247 = por %p245, %p246
    %p248 = scmp.ne.s32.totalorder %s240, %s242
    %p249 = scmp.eq.s32.totalorder %s20, 3
    %p250 = por %p248, %p249
    %p251 = scmp.ne.s32.totalorder %s242, %s243
    %p252 = scmp.eq.s32.totalorder %s20, 0
    %p253 = por %p251, %p252
    %p254 = scmp.ne.s32.totalorder %s242, %s243
    %p255 = scmp.eq.s32.totalorder %s21, 3
    %p256 = por %p254, %p255
    %p258 = scmp.ne.s32.totalorder %s243, %s257
    %p259 = scmp.eq.s32.totalorder %s21, 0
    %p260 = por %p258, %p259
    %s261 = ssub.s32 %s22, %s34
    %s262 = ssub.s32 %s23, %s30
    %s263 = sor.u32 %s261, %s262
    %p264 = scmp.eq.s32.totalorder %s263, 0
    %s266 = sadd.s32 %s265, 1
    %s267 = scalar_select %p264, %s265, %s266
    %p270 = pneg %p264
    %p271 = scmp.eq.s32.totalorder %s15, 3
    %p272 = por %p270, %p271
    %p273 = scmp.ne.s32.totalorder %s265, %s268
    %p274 = scmp.eq.s32.totalorder %s15, 0
    %p275 = por %p273, %p274
    %p276 = scmp.ne.s32.totalorder %s265, %s268
    %p277 = scmp.eq.s32.totalorder %s20, 3
    %p278 = por %p276, %p277
    %p279 = scmp.ne.s32.totalorder %s268, %s269
    %p280 = scmp.eq.s32.totalorder %s20, 0
    %p281 = por %p279, %p280
    %p282 = scmp.ne.s32.totalorder %s268, %s269
    %p283 = scmp.eq.s32.totalorder %s21, 3
    %p284 = por %p282, %p283
    %p286 = scmp.ne.s32.totalorder %s269, %s285
    %p287 = scmp.eq.s32.totalorder %s21, 0
    %p288 = por %p286, %p287
    %p289 = scmp.le.s32.totalorder 1, %s15
    %p290 = scmp.lt.s32.totalorder %s15, 5
    %p291 = pnand %p289, %p290
    %p292 = pneg %p291
    // Predicated region
    $region9: #{_forward_impl.1} parent=5 // pred_check
      _
    $region10: #{_forward_impl.1} parent=5 // pred_check_branch
      %294 = sbr.rel (%p291) target = $region12
    $region11: #{_forward_impl.1} parent=5 // pred_region
      %s295 = ssub.s32 %s15, 1
      // Predicated region
      $region13: #{_forward_impl.1} parent=11 // pred_check
        %p296 = pneg %p148
      $region14: #{_forward_impl.1} parent=11 // pred_check_branch
        %298 = sbr.rel (%p296) target = $region16
      $region15: #{_forward_impl.1} parent=11 // pred_region
        _
      $region16: #{_forward_impl.1} parent=11 // pred_fallthru
        _
      // Predicated region
      $region17: #{_forward_impl.1} parent=11 // pred_check
        %p299 = pneg %p169
      $region18: #{_forward_impl.1} parent=11 // pred_check_branch
        %301 = sbr.rel (%p299) target = $region20
      $region19: #{_forward_impl.1} parent=11 // pred_region
        _
      $region20: #{_forward_impl.1} parent=11 // pred_fallthru
        _
      // Predicated region
      $region21: #{_forward_impl.1} parent=11 // pred_check
        %p302 = pneg %p190
      $region22: #{_forward_impl.1} parent=11 // pred_check_branch
        %304 = sbr.rel (%p302) target = $region24
      $region23: #{_forward_impl.1} parent=11 // pred_region
        _
      $region24: #{_forward_impl.1} parent=11 // pred_fallthru
        _
      // Predicated region
      $region25: #{_forward_impl.1} parent=11 // pred_check
        %p305 = pneg %p211
      $region26: #{_forward_impl.1} parent=11 // pred_check_branch
        %307 = sbr.rel (%p305) target = $region28
      $region27: #{_forward_impl.1} parent=11 // pred_region
        _
      $region28: #{_forward_impl.1} parent=11 // pred_fallthru
        _
      // Predicated region
      $region29: #{_forward_impl.1} parent=11 // pred_check
        %p308 = pneg %p232
      $region30: #{_forward_impl.1} parent=11 // pred_check_branch
        %310 = sbr.rel (%p308) target = $region32
      $region31: #{_forward_impl.1} parent=11 // pred_region
        _
      $region32: #{_forward_impl.1} parent=11 // pred_fallthru
        _
      // Predicated region
      $region33: #{_forward_impl.1} parent=11 // pred_check
        %p311 = pneg %p253
      $region34: #{_forward_impl.1} parent=11 // pred_check_branch
        %313 = sbr.rel (%p311) target = $region36
      $region35: #{_forward_impl.1} parent=11 // pred_region
        _
      $region36: #{_forward_impl.1} parent=11 // pred_fallthru
        _
    $region12: #{_forward_impl.1} parent=5 // pred_fallthru
      _
    %p314 = scmp.lt.s32.totalorder %s15, 4
    // Predicated region
    $region37: #{_forward_impl.1} parent=5 // pred_check
      %p315 = pneg %p314
    $region38: #{_forward_impl.1} parent=5 // pred_check_branch
      %317 = sbr.rel (%p315) target = $region40
    $region39: #{_forward_impl.1} parent=5 // pred_region
      // Predicated region
      $region41: #{_forward_impl.1} parent=39 // pred_check
        %p318 = pneg %p49
      $region42: #{_forward_impl.1} parent=39 // pred_check_branch
        %320 = sbr.rel (%p318) target = $region44
      $region43: #{_forward_impl.1} parent=39 // pred_region
        %s321 = smul.u32 8, %s23
        %p322 = scmp.lt.s32.totalorder %s22, 1
        %s323 = scalar_select %p322, %s22, 1
        %p324 = scmp.lt.s32.totalorder %s321, 15
        %s325 = scalar_select %p324, %s321, 15
        %s326 = smul.addr %s325, 2
        %s327 = smul.addr %s323, 32
        %s328 = sadd.s32 %s326, %s327
        %s329 = smul.addr %s328, 4
        %s330 = scalar_lea.vmem %s0, %s329
        %s331 = smul.u32 8, %s23
      $region44: #{_forward_impl.1} parent=39 // pred_fallthru
        _
      // Predicated region
      $region45: #{_forward_impl.1} parent=39 // pred_check
        %p332 = pneg %p85
      $region46: #{_forward_impl.1} parent=39 // pred_check_branch
        %334 = sbr.rel (%p332) target = $region48
      $region47: #{_forward_impl.1} parent=39 // pred_region
        %s335 = smul.u32 %s23, 8
        %s336 = ssub.s32 %s335, 1
        %p337 = scmp.gt.s32.totalorder %s336, 0
        %s338 = scalar_select %p337, %s336, 0
        %p339 = scmp.lt.s32.totalorder %s22, 1
        %s340 = scalar_select %p339, %s22, 1
        %p341 = scmp.lt.s32.totalorder %s338, 15
        %s342 = scalar_select %p341, %s338, 15
        %s343 = smul.addr %s342, 2
        %s344 = smul.addr %s340, 32
        %s345 = sadd.s32 %s343, %s344
        %s346 = smul.addr %s345, 4
        %s347 = scalar_lea.vmem %s1, %s346
        %s348 = smul.u32 %s23, 8
        %s349 = ssub.s32 %s348, 1
        %p350 = scmp.gt.s32.totalorder %s349, 0
        %s351 = scalar_select %p350, %s349, 0
      $region48: #{_forward_impl.1} parent=39 // pred_fallthru
        _
      // Predicated region
      $region49: #{_forward_impl.1} parent=39 // pred_check
        %p352 = pneg %p121
      $region50: #{_forward_impl.1} parent=39 // pred_check_branch
        %354 = sbr.rel (%p352) target = $region52
      $region51: #{_forward_impl.1} parent=39 // pred_region
        %s355 = smul.u32 %s23, 8
        %s356 = sadd.s32 %s355, 8
        %p357 = scmp.lt.s32.totalorder %s356, 15
        %s358 = scalar_select %p357, %s356, 15
        %p359 = scmp.lt.s32.totalorder %s22, 1
        %s360 = scalar_select %p359, %s22, 1
        %p361 = scmp.lt.s32.totalorder %s358, 15
        %s362 = scalar_select %p361, %s358, 15
        %s363 = smul.addr %s362, 2
        %s364 = smul.addr %s360, 32
        %s365 = sadd.s32 %s363, %s364
        %s366 = smul.addr %s365, 4
        %s367 = scalar_lea.vmem %s2, %s366
        %s368 = smul.u32 %s23, 8
        %s369 = sadd.s32 %s368, 8
        %p370 = scmp.lt.s32.totalorder %s369, 15
        %s371 = scalar_select %p370, %s369, 15
      $region52: #{_forward_impl.1} parent=39 // pred_fallthru
        _
    $region40: #{_forward_impl.1} parent=5 // pred_fallthru
      _
    %p372 = scmp.le.s32.totalorder 1, %s15
    %p373 = scmp.lt.s32.totalorder %s15, 5
    %p374 = pnand %p372, %p373
    %p375 = pneg %p374
    // Predicated region
    $region53: #{_forward_impl.1} parent=5 // pred_check
      _
    $region54: #{_forward_impl.1} parent=5 // pred_check_branch
      %377 = sbr.rel (%p374) target = $region56
    $region55: #{_forward_impl.1} parent=5 // pred_region
      %s378 = ssub.s32 %s15, 1
      %s379 = smul.u32 8, %s25
      %p380 = scmp.lt.s32.totalorder %s24, 1
      %s381 = scalar_select %p380, %s24, 1
      %p382 = scmp.lt.s32.totalorder %s379, 15
      %s383 = scalar_select %p382, %s379, 15
      %s384 = smul.addr %s383, 2
      %s385 = smul.addr %s381, 32
      %s386 = sadd.s32 %s384, %s385
      %s387 = smul.addr %s386, 4
      %s388 = scalar_lea.vmem %s0, %s387
      %p389 = pneg %p55
      %p390 = pneg %p52
      %s391 = smul.u32 %s25, 8
      %s392 = ssub.s32 %s391, 1
      %p393 = scmp.gt.s32.totalorder %s392, 0
      %s394 = scalar_select %p393, %s392, 0
      %p395 = scmp.lt.s32.totalorder %s24, 1
      %s396 = scalar_select %p395, %s24, 1
      %p397 = scmp.lt.s32.totalorder %s394, 15
      %s398 = scalar_select %p397, %s394, 15
      %s399 = smul.addr %s398, 2
      %s400 = smul.addr %s396, 32
      %s401 = sadd.s32 %s399, %s400
      %s402 = smul.addr %s401, 4
      %s403 = scalar_lea.vmem %s1, %s402
      %p404 = pneg %p91
      %p405 = pneg %p88
      %s406 = smul.u32 %s25, 8
      %s407 = sadd.s32 %s406, 8
      %p408 = scmp.lt.s32.totalorder %s407, 15
      %s409 = scalar_select %p408, %s407, 15
      %p410 = scmp.lt.s32.totalorder %s24, 1
      %s411 = scalar_select %p410, %s24, 1
      %p412 = scmp.lt.s32.totalorder %s409, 15
      %s413 = scalar_select %p412, %s409, 15
      %s414 = smul.addr %s413, 2
      %s415 = smul.addr %s411, 32
      %s416 = sadd.s32 %s414, %s415
      %s417 = smul.addr %s416, 4
      %s418 = scalar_lea.vmem %s2, %s417
      %p419 = pneg %p127
      %p420 = pneg %p124
      %p421 = pneg %p148
      %p422 = pneg %p145
      %p423 = pneg %p169
      %p424 = pneg %p166
      %p425 = pneg %p190
      %p426 = pneg %p187
      %p427 = pneg %p211
      %p428 = pneg %p208
      %p429 = pneg %p232
      %p430 = pneg %p229
      %p431 = pneg %p253
      %p432 = pneg %p250
      %p433 = pneg %p281
      %p434 = pneg %p278
      %s435 = smul.u32 8, %s25
      %p436 = scmp.lt.s32.totalorder %s24, 1
      %s437 = scalar_select %p436, %s24, 1
      %p438 = scmp.lt.s32.totalorder %s435, 15
      %s439 = scalar_select %p438, %s435, 15
      %s440 = smul.addr %s439, 2
      %s441 = smul.addr %s437, 32
      %s442 = sadd.s32 %s440, %s441
      %s443 = smul.addr %s442, 4
      %s444 = scalar_lea.vmem %s9, %s443
      %s445 = smul.u32 8, %s25
      %p446 = scmp.lt.s32.totalorder %s24, 1
      %s447 = scalar_select %p446, %s24, 1
      %p448 = scmp.lt.s32.totalorder %s445, 15
      %s449 = scalar_select %p448, %s445, 15
      %s450 = smul.addr %s449, 2
      %s451 = smul.addr %s447, 32
      %s452 = sadd.s32 %s450, %s451
      %s453 = smul.addr %s452, 4
      %s454 = scalar_lea.vmem %s0, %s453
      %s455 = smul.u32 8, %s25
      %s456 = smul.u32 %s25, 8
      %s457 = ssub.s32 %s456, 1
      %p458 = scmp.gt.s32.totalorder %s457, 0
      %s459 = scalar_select %p458, %s457, 0
      %p460 = scmp.lt.s32.totalorder %s24, 1
      %s461 = scalar_select %p460, %s24, 1
      %p462 = scmp.lt.s32.totalorder %s459, 15
      %s463 = scalar_select %p462, %s459, 15
      %s464 = smul.addr %s463, 2
      %s465 = smul.addr %s461, 32
      %s466 = sadd.s32 %s464, %s465
      %s467 = smul.addr %s466, 4
      %s468 = scalar_lea.vmem %s1, %s467
      %s469 = smul.u32 %s25, 8
      %s470 = ssub.s32 %s469, 1
      %p471 = scmp.gt.s32.totalorder %s470, 0
      %s472 = scalar_select %p471, %s470, 0
      %s473 = smul.u32 %s25, 8
      %s474 = sadd.s32 %s473, 8
      %p475 = scmp.lt.s32.totalorder %s474, 15
      %s476 = scalar_select %p475, %s474, 15
      %p477 = scmp.lt.s32.totalorder %s24, 1
      %s478 = scalar_select %p477, %s24, 1
      %p479 = scmp.lt.s32.totalorder %s476, 15
      %s480 = scalar_select %p479, %s476, 15
      %s481 = smul.addr %s480, 2
      %s482 = smul.addr %s478, 32
      %s483 = sadd.s32 %s481, %s482
      %s484 = smul.addr %s483, 4
      %s485 = scalar_lea.vmem %s2, %s484
      %s486 = smul.u32 %s25, 8
      %s487 = sadd.s32 %s486, 8
      %p488 = scmp.lt.s32.totalorder %s487, 15
      %s489 = scalar_select %p488, %s487, 15
      %s490 = smul.u32 8, %s25
      %p491 = scmp.lt.s32.totalorder %s24, 1
      %s492 = scalar_select %p491, %s24, 1
      %p493 = scmp.lt.s32.totalorder %s490, 15
      %s494 = scalar_select %p493, %s490, 15
      %s495 = smul.addr %s494, 2
      %s496 = smul.addr %s492, 32
      %s497 = sadd.s32 %s495, %s496
      %s498 = smul.addr %s497, 4
      %s499 = scalar_lea.vmem %s9, %s498
      %s500 = smul.u32 8, %s25
      %v502 = vld [vmem:[%s3] sm:$0xf]
      %v503 = vld [vmem:[%s3 + $0x4] sm:$0xf]
      %v504 = vld [vmem:[%s3 + $0x8] sm:$0xf]
      %v505 = vld [vmem:[%s3 + $0xc] sm:$0xf]
      %v506 = vld [vmem:[%s3 + $0x10] sm:$0xf]
      %v507 = vld [vmem:[%s3 + $0x14] sm:$0xf]
      %v508 = vld [vmem:[%s3 + $0x18] sm:$0xf]
      %v509 = vld [vmem:[%s3 + $0x1c] sm:$0xf]
      %v510 = vld [vmem:[%s3 + $0x20] sm:$0xf]
      %v511 = vld [vmem:[%s3 + $0x24] sm:$0xf]
      %v512 = vld [vmem:[%s3 + $0x28] sm:$0xf]
      %v513 = vld [vmem:[%s3 + $0x2c] sm:$0xf]
      %v514 = vld [vmem:[%s3 + $0x30] sm:$0xf]
      %v515 = vld [vmem:[%s3 + $0x34] sm:$0xf]
      %v516 = vld [vmem:[%s3 + $0x38] sm:$0xf]
      %v517 = vld [vmem:[%s3 + $0x3c] sm:$0xf]
      %v518 = vld [vmem:[%s4] sm:$0x1]
      %v519 = vld [vmem:[%s5] sm:$0x1]
      %v520 = vld [vmem:[%s454] sm:$0xf]
      %v521 = vld [vmem:[%s454 + $0x4] sm:$0xf]
      %v522 = vld [vmem:[%s454 + $0x8] sm:$0xf]
      %v523 = vld [vmem:[%s454 + $0xc] sm:$0xf]
      %v524 = vld [vmem:[%s454 + $0x10] sm:$0xf]
      %v525 = vld [vmem:[%s454 + $0x14] sm:$0xf]
      %v526 = vld [vmem:[%s454 + $0x18] sm:$0xf]
      %v527 = vld [vmem:[%s454 + $0x1c] sm:$0xf]
      %v528 = vld [vmem:[%s454 + $0x20] sm:$0xf]
      %v529 = vld [vmem:[%s454 + $0x24] sm:$0xf]
      %v530 = vld [vmem:[%s454 + $0x28] sm:$0xf]
      %v531 = vld [vmem:[%s454 + $0x2c] sm:$0xf]
      %v532 = vld [vmem:[%s454 + $0x30] sm:$0xf]
      %v533 = vld [vmem:[%s454 + $0x34] sm:$0xf]
      %v534 = vld [vmem:[%s454 + $0x38] sm:$0xf]
      %v535 = vld [vmem:[%s454 + $0x3c] sm:$0xf]
      %v552 = vunpack.c.l.b16 %v520
      %v553 = vunpack.c.l.b16 %v521
      %v554 = vunpack.c.l.b16 %v522
      %v555 = vunpack.c.l.b16 %v523
      %v556 = vunpack.c.l.b16 %v524
      %v557 = vunpack.c.l.b16 %v525
      %v558 = vunpack.c.l.b16 %v526
      %v559 = vunpack.c.l.b16 %v527
      %v560 = vunpack.c.l.b16 %v528
      %v561 = vunpack.c.l.b16 %v529
      %v562 = vunpack.c.l.b16 %v530
      %v563 = vunpack.c.l.b16 %v531
      %v564 = vunpack.c.l.b16 %v532
      %v565 = vunpack.c.l.b16 %v533
      %v566 = vunpack.c.l.b16 %v534
      %v567 = vunpack.c.l.b16 %v535
      %v568 = vpack.c.b16 %v553, %v552
      %v569 = vpack.c.b16 %v555, %v554
      %v570 = vpack.c.b16 %v557, %v556
      %v571 = vpack.c.b16 %v559, %v558
      %v572 = vpack.c.b16 %v561, %v560
      %v573 = vpack.c.b16 %v563, %v562
      %v574 = vpack.c.b16 %v565, %v564
      %v575 = vpack.c.b16 %v567, %v566
      %v600 = vunpack.c.l.b16 %v502
      %v601 = vunpack.c.l.b16 %v503
      %v602 = vunpack.c.l.b16 %v504
      %v603 = vunpack.c.l.b16 %v505
      %v604 = vunpack.c.l.b16 %v506
      %v605 = vunpack.c.l.b16 %v507
      %v606 = vunpack.c.l.b16 %v508
      %v607 = vunpack.c.l.b16 %v509
      %v608 = vunpack.c.l.b16 %v510
      %v609 = vunpack.c.l.b16 %v511
      %v610 = vunpack.c.l.b16 %v512
      %v611 = vunpack.c.l.b16 %v513
      %v612 = vunpack.c.l.b16 %v514
      %v613 = vunpack.c.l.b16 %v515
      %v614 = vunpack.c.l.b16 %v516
      %v615 = vunpack.c.l.b16 %v517
      %v616 = vpack.c.b16 %v601, %v600
      %v617 = vpack.c.b16 %v603, %v602
      %v618 = vpack.c.b16 %v605, %v604
      %v619 = vpack.c.b16 %v607, %v606
      %v620 = vpack.c.b16 %v609, %v608
      %v621 = vpack.c.b16 %v611, %v610
      %v622 = vpack.c.b16 %v613, %v612
      %v623 = vpack.c.b16 %v615, %v614
      %632 = vmatprep.subr.bf16.mxu0 0
      %633 = vmatpush1.bf16.msra.mxu0 %v623
      %634 = vmatprep.subr.bf16.mxu0 0
      %635 = vmatpush1.bf16.msra.mxu0 %v622
      %636 = vmatprep.subr.bf16.mxu0 0
      %637 = vmatpush1.bf16.msra.mxu0 %v621
      %638 = vmatprep.subr.bf16.mxu0 0
      %639 = vmatpush1.bf16.msra.mxu0 %v620
      %640 = vmatprep.subr.bf16.mxu0 0
      %641 = vmatpush1.bf16.msra.mxu0 %v619
      %642 = vmatprep.subr.bf16.mxu0 0
      %643 = vmatpush1.bf16.msra.mxu0 %v618
      %644 = vmatprep.subr.bf16.mxu0 0
      %645 = vmatpush1.bf16.msra.mxu0 %v617
      %646 = vmatprep.subr.bf16.mxu0 0
      %647 = vmatpush1.bf16.msra.mxu0 %v616
      %648 = vmatprep.subr.bf16.mxu0 0
      %649 = vmatpush2.bf16.msra.mxu0 0
      %650 = vmatprep.subr.bf16.mxu0 0
      %651 = vmatpush2.bf16.msra.mxu0 0
      %652 = vmatprep.subr.bf16.mxu0 0
      %653 = vmatpush2.bf16.msra.mxu0 0
      %654 = vmatprep.subr.bf16.mxu0 0
      %655 = vmatpush2.bf16.msra.mxu0 0
      %656 = vmatprep.subr.bf16.mxu0 0
      %657 = vmatpush2.bf16.msra.mxu0 0
      %658 = vmatprep.subr.bf16.mxu0 0
      %659 = vmatpush2.bf16.msra.mxu0 0
      %660 = vmatprep.subr.bf16.mxu0 0
      %661 = vmatpush2.bf16.msra.mxu0 0
      %662 = vmatprep.subr.bf16.mxu0 0
      %663 = vmatpush2.bf16.msra.mxu0 0
      %664 = vmatprep.mubr.bf16.mxu0 0
      %665 = vmatmul.mubr.bf16.gmra.mxu0 %v568
      %v666 = vpop.f32.mrf.mxu0
      %v667 = vadd.f32 0.0, %v666
      %v668 = vpop.f32.mrf.mxu0
      %v669 = vpop.f32.mrf.mxu0
      %v670 = vadd.f32 0.0, %v669
      %v671 = vpop.f32.mrf.mxu0
      %672 = vmatprep.mubr.bf16.mxu0 0
      %673 = vmatmul.mubr.bf16.gmra.mxu0 %v569
      %v674 = vpop.f32.mrf.mxu0
      %v675 = vadd.f32 0.0, %v674
      %v676 = vpop.f32.mrf.mxu0
      %v677 = vpop.f32.mrf.mxu0
      %v678 = vadd.f32 0.0, %v677
      %v679 = vpop.f32.mrf.mxu0
      %680 = vmatprep.mubr.bf16.mxu0 0
      %681 = vmatmul.mubr.bf16.gmra.mxu0 %v570
      %v682 = vpop.f32.mrf.mxu0
      %v683 = vadd.f32 0.0, %v682
      %v684 = vpop.f32.mrf.mxu0
      %v685 = vpop.f32.mrf.mxu0
      %v686 = vadd.f32 0.0, %v685
      %v687 = vpop.f32.mrf.mxu0
      %688 = vmatprep.mubr.bf16.mxu0 0
      %689 = vmatmul.mubr.bf16.gmra.mxu0 %v571
      %v690 = vpop.f32.mrf.mxu0
      %v691 = vadd.f32 0.0, %v690
      %v692 = vpop.f32.mrf.mxu0
      %v693 = vpop.f32.mrf.mxu0
      %v694 = vadd.f32 0.0, %v693
      %v695 = vpop.f32.mrf.mxu0
      %696 = vmatprep.mubr.bf16.mxu0 0
      %697 = vmatmul.mubr.bf16.gmra.mxu0 %v572
      %v698 = vpop.f32.mrf.mxu0
      %v699 = vadd.f32 0.0, %v698
      %v700 = vpop.f32.mrf.mxu0
      %v701 = vpop.f32.mrf.mxu0
      %v702 = vadd.f32 0.0, %v701
      %v703 = vpop.f32.mrf.mxu0
      %704 = vmatprep.mubr.bf16.mxu0 0
      %705 = vmatmul.mubr.bf16.gmra.mxu0 %v573
      %v706 = vpop.f32.mrf.mxu0
      %v707 = vadd.f32 0.0, %v706
      %v708 = vpop.f32.mrf.mxu0
      %v709 = vpop.f32.mrf.mxu0
      %v710 = vadd.f32 0.0, %v709
      %v711 = vpop.f32.mrf.mxu0
      %712 = vmatprep.mubr.bf16.mxu0 0
      %713 = vmatmul.mubr.bf16.gmra.mxu0 %v574
      %v714 = vpop.f32.mrf.mxu0
      %v715 = vadd.f32 0.0, %v714
      %v716 = vpop.f32.mrf.mxu0
      %v717 = vpop.f32.mrf.mxu0
      %v718 = vadd.f32 0.0, %v717
      %v719 = vpop.f32.mrf.mxu0
      %720 = vmatprep.mubr.bf16.mxu0 0
      %721 = vmatmul.mubr.bf16.gmra.mxu0 %v575
      %v722 = vpop.f32.mrf.mxu0
      %v723 = vadd.f32 0.0, %v722
      %v724 = vpop.f32.mrf.mxu0
      %v725 = vpop.f32.mrf.mxu0
      %v726 = vadd.f32 0.0, %v725
      %v727 = vpop.f32.mrf.mxu0
      %728 = vdwg.mxu0
      %v730 = vlaneseq
      %v731 = vshrl.u32 %v730, 7
      %v732 = vsub.s32 0, %v731
      %v733 = vrot.slane %v518, %v732
      %v735 = vmul.f32 %v667, %v733
      %v736 = vmul.f32 %v670, %v733
      %v737 = vmul.f32 %v675, %v733
      %v738 = vmul.f32 %v678, %v733
      %v739 = vmul.f32 %v683, %v733
      %v740 = vmul.f32 %v686, %v733
      %v741 = vmul.f32 %v691, %v733
      %v742 = vmul.f32 %v694, %v733
      %v743 = vmul.f32 %v699, %v733
      %v744 = vmul.f32 %v702, %v733
      %v745 = vmul.f32 %v707, %v733
      %v746 = vmul.f32 %v710, %v733
      %v747 = vmul.f32 %v715, %v733
      %v748 = vmul.f32 %v718, %v733
      %v749 = vmul.f32 %v723, %v733
      %v750 = vmul.f32 %v726, %v733
      %v752 = vlaneseq
      %v753 = vshrl.u32 %v752, 7
      %v754 = vsub.s32 0, %v753
      %v755 = vrot.slane %v519, %v754
      %v757 = vadd.f32 %v735, %v755
      %v758 = vadd.f32 %v736, %v755
      %v759 = vadd.f32 %v737, %v755
      %v760 = vadd.f32 %v738, %v755
      %v761 = vadd.f32 %v739, %v755
      %v762 = vadd.f32 %v740, %v755
      %v763 = vadd.f32 %v741, %v755
      %v764 = vadd.f32 %v742, %v755
      %v765 = vadd.f32 %v743, %v755
      %v766 = vadd.f32 %v744, %v755
      %v767 = vadd.f32 %v745, %v755
      %v768 = vadd.f32 %v746, %v755
      %v769 = vadd.f32 %v747, %v755
      %v770 = vadd.f32 %v748, %v755
      %v771 = vadd.f32 %v749, %v755
      %v772 = vadd.f32 %v750, %v755
      %v773 = vmax.f32 %v757, 0.0
      %v774 = vmax.f32 %v758, 0.0
      %v775 = vmax.f32 %v759, 0.0
      %v776 = vmax.f32 %v760, 0.0
      %v777 = vmax.f32 %v761, 0.0
      %v778 = vmax.f32 %v762, 0.0
      %v779 = vmax.f32 %v763, 0.0
      %v780 = vmax.f32 %v764, 0.0
      %v781 = vmax.f32 %v765, 0.0
      %v782 = vmax.f32 %v766, 0.0
      %v783 = vmax.f32 %v767, 0.0
      %v784 = vmax.f32 %v768, 0.0
      %v785 = vmax.f32 %v769, 0.0
      %v786 = vmax.f32 %v770, 0.0
      %v787 = vmax.f32 %v771, 0.0
      %v788 = vmax.f32 %v772, 0.0
      %v789 = vld [vmem:[%s468] sm:$0xf]
      %v790 = vld [vmem:[%s468 + $0x4] sm:$0xf]
      %v793 = vunpack.c.l.b16 %v789
      %v794 = vunpack.c.l.b16 %v790
      %v795 = vpack.c.b16 %v794, %v793
      %797 = vmatprep.subr.bf16.mxu0 0
      %798 = vmatpush1.bf16.msra.mxu0 %v623
      %799 = vmatprep.subr.bf16.mxu0 0
      %800 = vmatpush1.bf16.msra.mxu0 %v622
      %801 = vmatprep.subr.bf16.mxu0 0
      %802 = vmatpush1.bf16.msra.mxu0 %v621
      %803 = vmatprep.subr.bf16.mxu0 0
      %804 = vmatpush1.bf16.msra.mxu0 %v620
      %805 = vmatprep.subr.bf16.mxu0 0
      %806 = vmatpush1.bf16.msra.mxu0 %v619
      %807 = vmatprep.subr.bf16.mxu0 0
      %808 = vmatpush1.bf16.msra.mxu0 %v618
      %809 = vmatprep.subr.bf16.mxu0 0
      %810 = vmatpush1.bf16.msra.mxu0 %v617
      %811 = vmatprep.subr.bf16.mxu0 0
      %812 = vmatpush1.bf16.msra.mxu0 %v616
      %813 = vmatprep.subr.bf16.mxu0 0
      %814 = vmatpush2.bf16.msra.mxu0 0
      %815 = vmatprep.subr.bf16.mxu0 0
      %816 = vmatpush2.bf16.msra.mxu0 0
      %817 = vmatprep.subr.bf16.mxu0 0
      %818 = vmatpush2.bf16.msra.mxu0 0
      %819 = vmatprep.subr.bf16.mxu0 0
      %820 = vmatpush2.bf16.msra.mxu0 0
      %821 = vmatprep.subr.bf16.mxu0 0
      %822 = vmatpush2.bf16.msra.mxu0 0
      %823 = vmatprep.subr.bf16.mxu0 0
      %824 = vmatpush2.bf16.msra.mxu0 0
      %825 = vmatprep.subr.bf16.mxu0 0
      %826 = vmatpush2.bf16.msra.mxu0 0
      %827 = vmatprep.subr.bf16.mxu0 0
      %828 = vmatpush2.bf16.msra.mxu0 0
      %829 = vmatprep.mubr.bf16.mxu0 0
      %830 = vmatmul.mubr.bf16.gmra.mxu0 %v795
      %v831 = vpop.f32.mrf.mxu0
      %v832 = vadd.f32 0.0, %v831
      %v833 = vpop.f32.mrf.mxu0
      %v834 = vpop.f32.mrf.mxu0
      %v835 = vadd.f32 0.0, %v834
      %v836 = vpop.f32.mrf.mxu0
      %837 = vdwg.mxu0
      %v838 = vmul.f32 %v832, %v733
      %v839 = vmul.f32 %v835, %v733
      %v840 = vadd.f32 %v838, %v755
      %v841 = vadd.f32 %v839, %v755
      %v842 = vmax.f32 %v840, 0.0
      %v843 = vmax.f32 %v841, 0.0
      %v844 = vld [vmem:[%s485] sm:$0xf]
      %v845 = vld [vmem:[%s485 + $0x4] sm:$0xf]
      %v848 = vunpack.c.l.b16 %v844
      %v849 = vunpack.c.l.b16 %v845
      %v850 = vpack.c.b16 %v849, %v848
      %852 = vmatprep.subr.bf16.mxu0 0
      %853 = vmatpush1.bf16.msra.mxu0 %v623
      %854 = vmatprep.subr.bf16.mxu0 0
      %855 = vmatpush1.bf16.msra.mxu0 %v622
      %856 = vmatprep.subr.bf16.mxu0 0
      %857 = vmatpush1.bf16.msra.mxu0 %v621
      %858 = vmatprep.subr.bf16.mxu0 0
      %859 = vmatpush1.bf16.msra.mxu0 %v620
      %860 = vmatprep.subr.bf16.mxu0 0
      %861 = vmatpush1.bf16.msra.mxu0 %v619
      %862 = vmatprep.subr.bf16.mxu0 0
      %863 = vmatpush1.bf16.msra.mxu0 %v618
      %864 = vmatprep.subr.bf16.mxu0 0
      %865 = vmatpush1.bf16.msra.mxu0 %v617
      %866 = vmatprep.subr.bf16.mxu0 0
      %867 = vmatpush1.bf16.msra.mxu0 %v616
      %868 = vmatprep.subr.bf16.mxu0 0
      %869 = vmatpush2.bf16.msra.mxu0 0
      %870 = vmatprep.subr.bf16.mxu0 0
      %871 = vmatpush2.bf16.msra.mxu0 0
      %872 = vmatprep.subr.bf16.mxu0 0
      %873 = vmatpush2.bf16.msra.mxu0 0
      %874 = vmatprep.subr.bf16.mxu0 0
      %875 = vmatpush2.bf16.msra.mxu0 0
      %876 = vmatprep.subr.bf16.mxu0 0
      %877 = vmatpush2.bf16.msra.mxu0 0
      %878 = vmatprep.subr.bf16.mxu0 0
      %879 = vmatpush2.bf16.msra.mxu0 0
      %880 = vmatprep.subr.bf16.mxu0 0
      %881 = vmatpush2.bf16.msra.mxu0 0
      %882 = vmatprep.subr.bf16.mxu0 0
      %883 = vmatpush2.bf16.msra.mxu0 0
      %884 = vmatprep.mubr.bf16.mxu0 0
      %885 = vmatmul.mubr.bf16.gmra.mxu0 %v850
      %v886 = vpop.f32.mrf.mxu0
      %v887 = vadd.f32 0.0, %v886
      %v888 = vpop.f32.mrf.mxu0
      %v889 = vpop.f32.mrf.mxu0
      %v890 = vadd.f32 0.0, %v889
      %v891 = vpop.f32.mrf.mxu0
      %892 = vdwg.mxu0
      %v893 = vmul.f32 %v887, %v733
      %v894 = vmul.f32 %v890, %v733
      %v895 = vadd.f32 %v893, %v755
      %v896 = vadd.f32 %v894, %v755
      %v897 = vmax.f32 %v895, 0.0
      %v898 = vmax.f32 %v896, 0.0
      %p899 = scmp.gt.s32.totalorder %s25, 0
      %s900 = scalar_select %p899, 1, 0
      %v901 = vstv %s900
      %vm902 = vcmp.eq.s32.totalorder %v901, 1
      %v903 = vsel %vm902, %v842, 0.0
      %v904 = vsel %vm902, %v843, 0.0
      %s905 = sadd.s32 %s25, 1
      %s906 = smul.u32 %s905, 8
      %p907 = scmp.lt.s32.totalorder %s906, 16
      %s908 = scalar_select %p907, 1, 0
      %v909 = vstv %s908
      %vm910 = vcmp.eq.s32.totalorder %v909, 1
      %v911 = vsel %vm910, %v897, 0.0
      %v912 = vsel %vm910, %v898, 0.0
      %vm913 = vcmask 1040384
      %vm914 = vsmask.f32 256
      %vm915 = vmand %vm913, %vm914
      %v916 = vld [vmem:[#allocation2] sm:$0x1]
      %v917 = vsel %vm915, 0, %v916
      %918 = vst [vmem:[#allocation2] sm:$0x1] %v917
      %v919 = vld [vmem:[#allocation2 + $0xc] sm:$0x1]
      %v920 = vsel %vm915, 0, %v919
      %921 = vst [vmem:[#allocation2 + $0xc] sm:$0x1] %v920
      %v922 = vld [vmem:[#allocation2 + $0x18] sm:$0x1]
      %v923 = vsel %vm915, 0, %v922
      %924 = vst [vmem:[#allocation2 + $0x18] sm:$0x1] %v923
      %v925 = vld [vmem:[#allocation2 + $0x24] sm:$0x1]
      %v926 = vsel %vm915, 0, %v925
      %927 = vst [vmem:[#allocation2 + $0x24] sm:$0x1] %v926
      %v928 = vld [vmem:[#allocation2 + $0x30] sm:$0x1]
      %v929 = vsel %vm915, 0, %v928
      %930 = vst [vmem:[#allocation2 + $0x30] sm:$0x1] %v929
      %v931 = vld [vmem:[#allocation2 + $0x3c] sm:$0x1]
      %v932 = vsel %vm915, 0, %v931
      %933 = vst [vmem:[#allocation2 + $0x3c] sm:$0x1] %v932
      %v934 = vld [vmem:[#allocation2 + $0x48] sm:$0x1]
      %v935 = vsel %vm915, 0, %v934
      %936 = vst [vmem:[#allocation2 + $0x48] sm:$0x1] %v935
      %v937 = vld [vmem:[#allocation2 + $0x54] sm:$0x1]
      %v938 = vsel %vm915, 0, %v937
      %939 = vst [vmem:[#allocation2 + $0x54] sm:$0x1] %v938
      %v940 = vld [vmem:[#allocation2 + $0x60] sm:$0x1]
      %v941 = vsel %vm915, 0, %v940
      %942 = vst [vmem:[#allocation2 + $0x60] sm:$0x1] %v941
      %v943 = vld [vmem:[#allocation2 + $0x6c] sm:$0x1]
      %v944 = vsel %vm915, 0, %v943
      %945 = vst [vmem:[#allocation2 + $0x6c] sm:$0x1] %v944
      %vm946 = vsmask.f32 7938
      %vm947 = vmand %vm913, %vm946
      %v948 = vld [vmem:[#allocation2 + $0x8] sm:$0x1]
      %v949 = vsel %vm947, 0, %v948
      %950 = vst [vmem:[#allocation2 + $0x8] sm:$0x1] %v949
      %v951 = vld [vmem:[#allocation2 + $0x14] sm:$0x1]
      %v952 = vsel %vm947, 0, %v951
      %953 = vst [vmem:[#allocation2 + $0x14] sm:$0x1] %v952
      %v954 = vld [vmem:[#allocation2 + $0x20] sm:$0x1]
      %v955 = vsel %vm947, 0, %v954
      %956 = vst [vmem:[#allocation2 + $0x20] sm:$0x1] %v955
      %v957 = vld [vmem:[#allocation2 + $0x2c] sm:$0x1]
      %v958 = vsel %vm947, 0, %v957
      %959 = vst [vmem:[#allocation2 + $0x2c] sm:$0x1] %v958
      %v960 = vld [vmem:[#allocation2 + $0x38] sm:$0x1]
      %v961 = vsel %vm947, 0, %v960
      %962 = vst [vmem:[#allocation2 + $0x38] sm:$0x1] %v961
      %v963 = vld [vmem:[#allocation2 + $0x44] sm:$0x1]
      %v964 = vsel %vm947, 0, %v963
      %965 = vst [vmem:[#allocation2 + $0x44] sm:$0x1] %v964
      %v966 = vld [vmem:[#allocation2 + $0x50] sm:$0x1]
      %v967 = vsel %vm947, 0, %v966
      %968 = vst [vmem:[#allocation2 + $0x50] sm:$0x1] %v967
      %v969 = vld [vmem:[#allocation2 + $0x5c] sm:$0x1]
      %v970 = vsel %vm947, 0, %v969
      %971 = vst [vmem:[#allocation2 + $0x5c] sm:$0x1] %v970
      %v972 = vld [vmem:[#allocation2 + $0x68] sm:$0x1]
      %v973 = vsel %vm947, 0, %v972
      %974 = vst [vmem:[#allocation2 + $0x68] sm:$0x1] %v973
      %v975 = vld [vmem:[#allocation2 + $0x74] sm:$0x1]
      %v976 = vsel %vm947, 0, %v975
      %977 = vst [vmem:[#allocation2 + $0x74] sm:$0x1] %v976
      %v978 = vpack.c.bf16 %v904, %v903
      %v980 = vunpack.c.l.b16 %v978
      %v981 = vunpack.c.h.b16 %v978
      %v982 = vpack.c.b16 %v980, %v980
      %v983 = vpack.c.b16 %v981, %v981
      %vm984 = vsmask.f32 4368
      %vm985 = vmor %vm914, %vm984
      %v987 = vshrl.u32 %v982, 16
      %v989 = vrot.slane %v987, 7
      %v990 = vshll.u32 %v982, 16
      %v992 = vor.u32 %v989, %v990
      %v993 = vrot.slane %v989, 4
      %v995 = vshrl.u32 %v983, 16
      %v997 = vrot.slane %v995, 7
      %v998 = vshll.u32 %v983, 16
      %v1000 = vor.u32 %v997, %v998
      %v1001 = vsel %vm985, %v993, %v1000
      %v1002 = vrot.slane %v997, 4
      %vm1006 = vcmask 1043456
      %vm1007 = vmand %vm1006, %vm946
      %v1008 = vld [vmem:[#allocation2] sm:$0xf]
      %v1009 = vsel %vm1007, %v992, %v1008
      %1010 = vst [vmem:[#allocation2] sm:$0xf] %v1009
      %1011 = vst [vmem:[#allocation2 + $0x4] sm:$0xf] %v1001
      %v1012 = vld [vmem:[#allocation2 + $0x8] sm:$0x1]
      %v1013 = vsel %vm915, %v1002, %v1012
      %1014 = vst [vmem:[#allocation2 + $0x8] sm:$0x1] %v1013
      %v1015 = vpack.c.bf16 %v774, %v773
      %v1016 = vpack.c.bf16 %v776, %v775
      %v1017 = vpack.c.bf16 %v778, %v777
      %v1018 = vpack.c.bf16 %v780, %v779
      %v1019 = vpack.c.bf16 %v782, %v781
      %v1020 = vpack.c.bf16 %v784, %v783
      %v1021 = vpack.c.bf16 %v786, %v785
      %v1022 = vpack.c.bf16 %v788, %v787
      %v1031 = vunpack.c.l.b16 %v1015
      %v1032 = vunpack.c.h.b16 %v1015
      %v1033 = vunpack.c.l.b16 %v1016
      %v1034 = vunpack.c.h.b16 %v1016
      %v1035 = vunpack.c.l.b16 %v1017
      %v1036 = vunpack.c.h.b16 %v1017
      %v1037 = vunpack.c.l.b16 %v1018
      %v1038 = vunpack.c.h.b16 %v1018
      %v1039 = vunpack.c.l.b16 %v1019
      %v1040 = vunpack.c.h.b16 %v1019
      %v1041 = vunpack.c.l.b16 %v1020
      %v1042 = vunpack.c.h.b16 %v1020
      %v1043 = vunpack.c.l.b16 %v1021
      %v1044 = vunpack.c.h.b16 %v1021
      %v1045 = vunpack.c.l.b16 %v1022
      %v1046 = vunpack.c.h.b16 %v1022
      %v1047 = vpack.c.b16 %v1031, %v1031
      %v1048 = vpack.c.b16 %v1032, %v1032
      %v1049 = vpack.c.b16 %v1033, %v1033
      %v1050 = vpack.c.b16 %v1034, %v1034
      %v1051 = vpack.c.b16 %v1035, %v1035
      %v1052 = vpack.c.b16 %v1036, %v1036
      %v1053 = vpack.c.b16 %v1037, %v1037
      %v1054 = vpack.c.b16 %v1038, %v1038
      %v1055 = vpack.c.b16 %v1039, %v1039
      %v1056 = vpack.c.b16 %v1040, %v1040
      %v1057 = vpack.c.b16 %v1041, %v1041
      %v1058 = vpack.c.b16 %v1042, %v1042
      %v1059 = vpack.c.b16 %v1043, %v1043
      %v1060 = vpack.c.b16 %v1044, %v1044
      %v1061 = vpack.c.b16 %v1045, %v1045
      %v1062 = vpack.c.b16 %v1046, %v1046
      %v1064 = vshrl.u32 %v1047, 16
      %v1066 = vrot.slane %v1064, 7
      %v1067 = vshll.u32 %v1047, 16
      %v1069 = vor.u32 %v1066, %v1067
      %v1070 = vrot.slane %v1066, 4
      %v1072 = vshrl.u32 %v1048, 16
      %v1074 = vrot.slane %v1072, 7
      %v1075 = vshll.u32 %v1048, 16
      %v1077 = vor.u32 %v1074, %v1075
      %v1078 = vsel %vm985, %v1070, %v1077
      %v1079 = vrot.slane %v1074, 4
      %v1081 = vshrl.u32 %v1049, 16
      %v1083 = vrot.slane %v1081, 7
      %v1084 = vshll.u32 %v1049, 16
      %v1086 = vor.u32 %v1083, %v1084
      %v1087 = vrot.slane %v1083, 4
      %v1089 = vshrl.u32 %v1050, 16
      %v1091 = vrot.slane %v1089, 7
      %v1092 = vshll.u32 %v1050, 16
      %v1094 = vor.u32 %v1091, %v1092
      %v1095 = vsel %vm985, %v1087, %v1094
      %v1096 = vrot.slane %v1091, 4
      %v1098 = vshrl.u32 %v1051, 16
      %v1100 = vrot.slane %v1098, 7
      %v1101 = vshll.u32 %v1051, 16
      %v1103 = vor.u32 %v1100, %v1101
      %v1104 = vrot.slane %v1100, 4
      %v1106 = vshrl.u32 %v1052, 16
      %v1108 = vrot.slane %v1106, 7
      %v1109 = vshll.u32 %v1052, 16
      %v1111 = vor.u32 %v1108, %v1109
      %v1112 = vsel %vm985, %v1104, %v1111
      %v1113 = vrot.slane %v1108, 4
      %v1115 = vshrl.u32 %v1053, 16
      %v1117 = vrot.slane %v1115, 7
      %v1118 = vshll.u32 %v1053, 16
      %v1120 = vor.u32 %v1117, %v1118
      %v1121 = vrot.slane %v1117, 4
      %v1123 = vshrl.u32 %v1054, 16
      %v1125 = vrot.slane %v1123, 7
      %v1126 = vshll.u32 %v1054, 16
      %v1128 = vor.u32 %v1125, %v1126
      %v1129 = vsel %vm985, %v1121, %v1128
      %v1130 = vrot.slane %v1125, 4
      %v1132 = vshrl.u32 %v1055, 16
      %v1134 = vrot.slane %v1132, 7
      %v1135 = vshll.u32 %v1055, 16
      %v1137 = vor.u32 %v1134, %v1135
      %v1138 = vrot.slane %v1134, 4
      %v1140 = vshrl.u32 %v1056, 16
      %v1142 = vrot.slane %v1140, 7
      %v1143 = vshll.u32 %v1056, 16
      %v1145 = vor.u32 %v1142, %v1143
      %v1146 = vsel %vm985, %v1138, %v1145
      %v1147 = vrot.slane %v1142, 4
      %v1149 = vshrl.u32 %v1057, 16
      %v1151 = vrot.slane %v1149, 7
      %v1152 = vshll.u32 %v1057, 16
      %v1154 = vor.u32 %v1151, %v1152
      %v1155 = vrot.slane %v1151, 4
      %v1157 = vshrl.u32 %v1058, 16
      %v1159 = vrot.slane %v1157, 7
      %v1160 = vshll.u32 %v1058, 16
      %v1162 = vor.u32 %v1159, %v1160
      %v1163 = vsel %vm985, %v1155, %v1162
      %v1164 = vrot.slane %v1159, 4
      %v1166 = vshrl.u32 %v1059, 16
      %v1168 = vrot.slane %v1166, 7
      %v1169 = vshll.u32 %v1059, 16
      %v1171 = vor.u32 %v1168, %v1169
      %v1172 = vrot.slane %v1168, 4
      %v1174 = vshrl.u32 %v1060, 16
      %v1176 = vrot.slane %v1174, 7
      %v1177 = vshll.u32 %v1060, 16
      %v1179 = vor.u32 %v1176, %v1177
      %v1180 = vsel %vm985, %v1172, %v1179
      %v1181 = vrot.slane %v1176, 4
      %v1183 = vshrl.u32 %v1061, 16
      %v1185 = vrot.slane %v1183, 7
      %v1186 = vshll.u32 %v1061, 16
      %v1188 = vor.u32 %v1185, %v1186
      %v1189 = vrot.slane %v1185, 4
      %v1191 = vshrl.u32 %v1062, 16
      %v1193 = vrot.slane %v1191, 7
      %v1194 = vshll.u32 %v1062, 16
      %v1196 = vor.u32 %v1193, %v1194
      %v1197 = vsel %vm985, %v1189, %v1196
      %v1198 = vrot.slane %v1193, 4
      %s1223 = scalar_lea.vmem [#allocation2], 12
      %v1224 = vld [vmem:[%s1223] sm:$0xf]
      %v1225 = vsel %vm1007, %v1069, %v1224
      %1226 = vst [vmem:[%s1223] sm:$0xf] %v1225
      %1227 = vst [vmem:[%s1223 + $0x4] sm:$0xf] %v1078
      %v1228 = vld [vmem:[%s1223 + $0x8] sm:$0x1]
      %v1229 = vsel %vm915, %v1079, %v1228
      %1230 = vst [vmem:[%s1223 + $0x8] sm:$0x1] %v1229
      %v1231 = vld [vmem:[%s1223 + $0xc] sm:$0xf]
      %v1232 = vsel %vm1007, %v1086, %v1231
      %1233 = vst [vmem:[%s1223 + $0xc] sm:$0xf] %v1232
      %1234 = vst [vmem:[%s1223 + $0x10] sm:$0xf] %v1095
      %v1235 = vld [vmem:[%s1223 + $0x14] sm:$0x1]
      %v1236 = vsel %vm915, %v1096, %v1235
      %1237 = vst [vmem:[%s1223 + $0x14] sm:$0x1] %v1236
      %v1238 = vld [vmem:[%s1223 + $0x18] sm:$0xf]
      %v1239 = vsel %vm1007, %v1103, %v1238
      %1240 = vst [vmem:[%s1223 + $0x18] sm:$0xf] %v1239
      %1241 = vst [vmem:[%s1223 + $0x1c] sm:$0xf] %v1112
      %v1242 = vld [vmem:[%s1223 + $0x20] sm:$0x1]
      %v1243 = vsel %vm915, %v1113, %v1242
      %1244 = vst [vmem:[%s1223 + $0x20] sm:$0x1] %v1243
      %v1245 = vld [vmem:[%s1223 + $0x24] sm:$0xf]
      %v1246 = vsel %vm1007, %v1120, %v1245
      %1247 = vst [vmem:[%s1223 + $0x24] sm:$0xf] %v1246
      %1248 = vst [vmem:[%s1223 + $0x28] sm:$0xf] %v1129
      %v1249 = vld [vmem:[%s1223 + $0x2c] sm:$0x1]
      %v1250 = vsel %vm915, %v1130, %v1249
      %1251 = vst [vmem:[%s1223 + $0x2c] sm:$0x1] %v1250
      %v1252 = vld [vmem:[%s1223 + $0x30] sm:$0xf]
      %v1253 = vsel %vm1007, %v1137, %v1252
      %1254 = vst [vmem:[%s1223 + $0x30] sm:$0xf] %v1253
      %1255 = vst [vmem:[%s1223 + $0x34] sm:$0xf] %v1146
      %v1256 = vld [vmem:[%s1223 + $0x38] sm:$0x1]
      %v1257 = vsel %vm915, %v1147, %v1256
      %1258 = vst [vmem:[%s1223 + $0x38] sm:$0x1] %v1257
      %v1259 = vld [vmem:[%s1223 + $0x3c] sm:$0xf]
      %v1260 = vsel %vm1007, %v1154, %v1259
      %1261 = vst [vmem:[%s1223 + $0x3c] sm:$0xf] %v1260
      %1262 = vst [vmem:[%s1223 + $0x40] sm:$0xf] %v1163
      %v1263 = vld [vmem:[%s1223 + $0x44] sm:$0x1]
      %v1264 = vsel %vm915, %v1164, %v1263
      %1265 = vst [vmem:[%s1223 + $0x44] sm:$0x1] %v1264
      %v1266 = vld [vmem:[%s1223 + $0x48] sm:$0xf]
      %v1267 = vsel %vm1007, %v1171, %v1266
      %1268 = vst [vmem:[%s1223 + $0x48] sm:$0xf] %v1267
      %1269 = vst [vmem:[%s1223 + $0x4c] sm:$0xf] %v1180
      %v1270 = vld [vmem:[%s1223 + $0x50] sm:$0x1]
      %v1271 = vsel %vm915, %v1181, %v1270
      %1272 = vst [vmem:[%s1223 + $0x50] sm:$0x1] %v1271
      %v1273 = vld [vmem:[%s1223 + $0x54] sm:$0xf]
      %v1274 = vsel %vm1007, %v1188, %v1273
      %1275 = vst [vmem:[%s1223 + $0x54] sm:$0xf] %v1274
      %1276 = vst [vmem:[%s1223 + $0x58] sm:$0xf] %v1197
      %v1277 = vld [vmem:[%s1223 + $0x5c] sm:$0x1]
      %v1278 = vsel %vm915, %v1198, %v1277
      %1279 = vst [vmem:[%s1223 + $0x5c] sm:$0x1] %v1278
      %v1280 = vpack.c.bf16 %v912, %v911
      %v1282 = vunpack.c.l.b16 %v1280
      %v1283 = vunpack.c.h.b16 %v1280
      %v1284 = vpack.c.b16 %v1282, %v1282
      %v1285 = vpack.c.b16 %v1283, %v1283
      %v1287 = vshrl.u32 %v1284, 16
      %v1289 = vrot.slane %v1287, 7
      %v1290 = vshll.u32 %v1284, 16
      %v1292 = vor.u32 %v1289, %v1290
      %v1293 = vrot.slane %v1289, 4
      %v1295 = vshrl.u32 %v1285, 16
      %v1297 = vrot.slane %v1295, 7
      %v1298 = vshll.u32 %v1285, 16
      %v1300 = vor.u32 %v1297, %v1298
      %v1301 = vsel %vm985, %v1293, %v1300
      %v1302 = vrot.slane %v1297, 4
      %s1306 = scalar_lea.vmem [#allocation2], 108
      %v1307 = vld [vmem:[%s1306] sm:$0xf]
      %v1308 = vsel %vm1007, %v1292, %v1307
      %1309 = vst [vmem:[%s1306] sm:$0xf] %v1308
      %1310 = vst [vmem:[%s1306 + $0x4] sm:$0xf] %v1301
      %v1311 = vld [vmem:[%s1306 + $0x8] sm:$0x1]
      %v1312 = vsel %vm915, %v1302, %v1311
      %1313 = vst [vmem:[%s1306 + $0x8] sm:$0x1] %v1312
      %v1314 = vld [vmem:[#allocation2] sm:$0xf]
      %v1315 = vld [vmem:[#allocation2 + $0x4] sm:$0xf]
      %v1316 = vld [vmem:[#allocation2 + $0xc] sm:$0xf]
      %v1317 = vld [vmem:[#allocation2 + $0x10] sm:$0xf]
      %v1318 = vld [vmem:[#allocation2 + $0x18] sm:$0xf]
      %v1319 = vld [vmem:[#allocation2 + $0x1c] sm:$0xf]
      %v1320 = vld [vmem:[#allocation2 + $0x24] sm:$0xf]
      %v1321 = vld [vmem:[#allocation2 + $0x28] sm:$0xf]
      %v1322 = vld [vmem:[#allocation2 + $0x30] sm:$0xf]
      %v1323 = vld [vmem:[#allocation2 + $0x34] sm:$0xf]
      %v1324 = vld [vmem:[#allocation2 + $0x3c] sm:$0xf]
      %v1325 = vld [vmem:[#allocation2 + $0x40] sm:$0xf]
      %v1326 = vld [vmem:[#allocation2 + $0x48] sm:$0xf]
      %v1327 = vld [vmem:[#allocation2 + $0x4c] sm:$0xf]
      %v1328 = vld [vmem:[#allocation2 + $0x54] sm:$0xf]
      %v1329 = vld [vmem:[#allocation2 + $0x58] sm:$0xf]
      %v1330 = vld [vmem:[%s6] sm:$0xf]
      %v1331 = vld [vmem:[%s6 + $0x4] sm:$0xf]
      %v1332 = vld [vmem:[%s6 + $0x8] sm:$0xf]
      %v1333 = vld [vmem:[%s6 + $0xc] sm:$0xf]
      %v1334 = vld [vmem:[%s6 + $0x10] sm:$0xf]
      %v1335 = vld [vmem:[%s6 + $0x14] sm:$0xf]
      %v1336 = vld [vmem:[%s6 + $0x18] sm:$0xf]
      %v1337 = vld [vmem:[%s6 + $0x1c] sm:$0xf]
      %v1338 = vld [vmem:[%s6 + $0x20] sm:$0xf]
      %v1339 = vld [vmem:[%s6 + $0x24] sm:$0xf]
      %v1340 = vld [vmem:[%s6 + $0x28] sm:$0xf]
      %v1341 = vld [vmem:[%s6 + $0x2c] sm:$0xf]
      %v1342 = vld [vmem:[%s6 + $0x30] sm:$0xf]
      %v1343 = vld [vmem:[%s6 + $0x34] sm:$0xf]
      %v1344 = vld [vmem:[%s6 + $0x38] sm:$0xf]
      %v1345 = vld [vmem:[%s6 + $0x3c] sm:$0xf]
      %v1346 = vld [vmem:[#allocation2 + $0x8] sm:$0x1]
      %v1347 = vld [vmem:[#allocation2 + $0x14] sm:$0x1]
      %v1348 = vld [vmem:[#allocation2 + $0x20] sm:$0x1]
      %v1349 = vld [vmem:[#allocation2 + $0x2c] sm:$0x1]
      %v1350 = vld [vmem:[#allocation2 + $0x38] sm:$0x1]
      %v1351 = vld [vmem:[#allocation2 + $0x44] sm:$0x1]
      %v1352 = vld [vmem:[#allocation2 + $0x50] sm:$0x1]
      %v1353 = vld [vmem:[#allocation2 + $0x5c] sm:$0x1]
      %vm1354 = vsmask.f32 3328
      %vm1355 = vsmask.f32 7440
      %vm1356 = vmor %vm1354, %vm1355
      %v1358 = vshrl.u32 %v1314, 16
      %v1360 = vrot.slane %v1358, 4
      %v1361 = vshll.u32 %v1314, 16
      %v1363 = vrot.slane %v1361, 5
      %v1364 = vor.u32 %v1360, %v1363
      %v1365 = vrot.slane %v1364, 4
      %v1367 = vshll.u32 %v1315, 16
      %v1369 = vrot.slane %v1367, 5
      %v1370 = vsel %vm1356, %v1365, %v1369
      %v1371 = vshrl.u32 %v1315, 16
      %v1373 = vrot.slane %v1371, 4
      %v1374 = vor.u32 %v1373, %v1369
      %v1375 = vrot.slane %v1374, 4
      %v1377 = vshll.u32 %v1346, 16
      %v1379 = vrot.slane %v1377, 5
      %v1380 = vsel %vm1356, %v1375, %v1379
      %v1382 = vshrl.u32 %v1316, 16
      %v1384 = vrot.slane %v1382, 4
      %v1385 = vshll.u32 %v1316, 16
      %v1387 = vrot.slane %v1385, 5
      %v1388 = vor.u32 %v1384, %v1387
      %v1389 = vrot.slane %v1388, 4
      %v1391 = vshll.u32 %v1317, 16
      %v1393 = vrot.slane %v1391, 5
      %v1394 = vsel %vm1356, %v1389, %v1393
      %v1395 = vshrl.u32 %v1317, 16
      %v1397 = vrot.slane %v1395, 4
      %v1398 = vor.u32 %v1397, %v1393
      %v1399 = vrot.slane %v1398, 4
      %v1401 = vshll.u32 %v1347, 16
      %v1403 = vrot.slane %v1401, 5
      %v1404 = vsel %vm1356, %v1399, %v1403
      %v1406 = vshrl.u32 %v1318, 16
      %v1408 = vrot.slane %v1406, 4
      %v1409 = vshll.u32 %v1318, 16
      %v1411 = vrot.slane %v1409, 5
      %v1412 = vor.u32 %v1408, %v1411
      %v1413 = vrot.slane %v1412, 4
      %v1415 = vshll.u32 %v1319, 16
      %v1417 = vrot.slane %v1415, 5
      %v1418 = vsel %vm1356, %v1413, %v1417
      %v1419 = vshrl.u32 %v1319, 16
      %v1421 = vrot.slane %v1419, 4
      %v1422 = vor.u32 %v1421, %v1417
      %v1423 = vrot.slane %v1422, 4
      %v1425 = vshll.u32 %v1348, 16
      %v1427 = vrot.slane %v1425, 5
      %v1428 = vsel %vm1356, %v1423, %v1427
      %v1430 = vshrl.u32 %v1320, 16
      %v1432 = vrot.slane %v1430, 4
      %v1433 = vshll.u32 %v1320, 16
      %v1435 = vrot.slane %v1433, 5
      %v1436 = vor.u32 %v1432, %v1435
      %v1437 = vrot.slane %v1436, 4
      %v1439 = vshll.u32 %v1321, 16
      %v1441 = vrot.slane %v1439, 5
      %v1442 = vsel %vm1356, %v1437, %v1441
      %v1443 = vshrl.u32 %v1321, 16
      %v1445 = vrot.slane %v1443, 4
      %v1446 = vor.u32 %v1445, %v1441
      %v1447 = vrot.slane %v1446, 4
      %v1449 = vshll.u32 %v1349, 16
      %v1451 = vrot.slane %v1449, 5
      %v1452 = vsel %vm1356, %v1447, %v1451
      %v1454 = vshrl.u32 %v1322, 16
      %v1456 = vrot.slane %v1454, 4
      %v1457 = vshll.u32 %v1322, 16
      %v1459 = vrot.slane %v1457, 5
      %v1460 = vor.u32 %v1456, %v1459
      %v1461 = vrot.slane %v1460, 4
      %v1463 = vshll.u32 %v1323, 16
      %v1465 = vrot.slane %v1463, 5
      %v1466 = vsel %vm1356, %v1461, %v1465
      %v1467 = vshrl.u32 %v1323, 16
      %v1469 = vrot.slane %v1467, 4
      %v1470 = vor.u32 %v1469, %v1465
      %v1471 = vrot.slane %v1470, 4
      %v1473 = vshll.u32 %v1350, 16
      %v1475 = vrot.slane %v1473, 5
      %v1476 = vsel %vm1356, %v1471, %v1475
      %v1478 = vshrl.u32 %v1324, 16
      %v1480 = vrot.slane %v1478, 4
      %v1481 = vshll.u32 %v1324, 16
      %v1483 = vrot.slane %v1481, 5
      %v1484 = vor.u32 %v1480, %v1483
      %v1485 = vrot.slane %v1484, 4
      %v1487 = vshll.u32 %v1325, 16
      %v1489 = vrot.slane %v1487, 5
      %v1490 = vsel %vm1356, %v1485, %v1489
      %v1491 = vshrl.u32 %v1325, 16
      %v1493 = vrot.slane %v1491, 4
      %v1494 = vor.u32 %v1493, %v1489
      %v1495 = vrot.slane %v1494, 4
      %v1497 = vshll.u32 %v1351, 16
      %v1499 = vrot.slane %v1497, 5
      %v1500 = vsel %vm1356, %v1495, %v1499
      %v1502 = vshrl.u32 %v1326, 16
      %v1504 = vrot.slane %v1502, 4
      %v1505 = vshll.u32 %v1326, 16
      %v1507 = vrot.slane %v1505, 5
      %v1508 = vor.u32 %v1504, %v1507
      %v1509 = vrot.slane %v1508, 4
      %v1511 = vshll.u32 %v1327, 16
      %v1513 = vrot.slane %v1511, 5
      %v1514 = vsel %vm1356, %v1509, %v1513
      %v1515 = vshrl.u32 %v1327, 16
      %v1517 = vrot.slane %v1515, 4
      %v1518 = vor.u32 %v1517, %v1513
      %v1519 = vrot.slane %v1518, 4
      %v1521 = vshll.u32 %v1352, 16
      %v1523 = vrot.slane %v1521, 5
      %v1524 = vsel %vm1356, %v1519, %v1523
      %v1526 = vshrl.u32 %v1328, 16
      %v1528 = vrot.slane %v1526, 4
      %v1529 = vshll.u32 %v1328, 16
      %v1531 = vrot.slane %v1529, 5
      %v1532 = vor.u32 %v1528, %v1531
      %v1533 = vrot.slane %v1532, 4
      %v1535 = vshll.u32 %v1329, 16
      %v1537 = vrot.slane %v1535, 5
      %v1538 = vsel %vm1356, %v1533, %v1537
      %v1539 = vshrl.u32 %v1329, 16
      %v1541 = vrot.slane %v1539, 4
      %v1542 = vor.u32 %v1541, %v1537
      %v1543 = vrot.slane %v1542, 4
      %v1545 = vshll.u32 %v1353, 16
      %v1547 = vrot.slane %v1545, 5
      %v1548 = vsel %vm1356, %v1543, %v1547
      %s1549 = scalar_lea.vmem %s6, 64
      %v1550 = vld [vmem:[%s1549] sm:$0xf]
      %v1551 = vld [vmem:[%s1549 + $0x4] sm:$0xf]
      %v1552 = vld [vmem:[%s1549 + $0x8] sm:$0xf]
      %v1553 = vld [vmem:[%s1549 + $0xc] sm:$0xf]
      %v1554 = vld [vmem:[%s1549 + $0x10] sm:$0xf]
      %v1555 = vld [vmem:[%s1549 + $0x14] sm:$0xf]
      %v1556 = vld [vmem:[%s1549 + $0x18] sm:$0xf]
      %v1557 = vld [vmem:[%s1549 + $0x1c] sm:$0xf]
      %v1558 = vld [vmem:[%s1549 + $0x20] sm:$0xf]
      %v1559 = vld [vmem:[%s1549 + $0x24] sm:$0xf]
      %v1560 = vld [vmem:[%s1549 + $0x28] sm:$0xf]
      %v1561 = vld [vmem:[%s1549 + $0x2c] sm:$0xf]
      %v1562 = vld [vmem:[%s1549 + $0x30] sm:$0xf]
      %v1563 = vld [vmem:[%s1549 + $0x34] sm:$0xf]
      %v1564 = vld [vmem:[%s1549 + $0x38] sm:$0xf]
      %v1565 = vld [vmem:[%s1549 + $0x3c] sm:$0xf]
      %v1566 = vunpack.c.l.b16 %v1370
      %v1567 = vunpack.c.l.b16 %v1380
      %v1568 = vunpack.c.l.b16 %v1394
      %v1569 = vunpack.c.l.b16 %v1404
      %v1570 = vunpack.c.l.b16 %v1418
      %v1571 = vunpack.c.l.b16 %v1428
      %v1572 = vunpack.c.l.b16 %v1442
      %v1573 = vunpack.c.l.b16 %v1452
      %v1574 = vunpack.c.l.b16 %v1466
      %v1575 = vunpack.c.l.b16 %v1476
      %v1576 = vunpack.c.l.b16 %v1490
      %v1577 = vunpack.c.l.b16 %v1500
      %v1578 = vunpack.c.l.b16 %v1514
      %v1579 = vunpack.c.l.b16 %v1524
      %v1580 = vunpack.c.l.b16 %v1538
      %v1581 = vunpack.c.l.b16 %v1548
      %v1582 = vpack.c.b16 %v1567, %v1566
      %v1583 = vpack.c.b16 %v1569, %v1568
      %v1584 = vpack.c.b16 %v1571, %v1570
      %v1585 = vpack.c.b16 %v1573, %v1572
      %v1586 = vpack.c.b16 %v1575, %v1574
      %v1587 = vpack.c.b16 %v1577, %v1576
      %v1588 = vpack.c.b16 %v1579, %v1578
      %v1589 = vpack.c.b16 %v1581, %v1580
      %v1614 = vunpack.c.l.b16 %v1550
      %v1615 = vunpack.c.l.b16 %v1551
      %v1616 = vunpack.c.l.b16 %v1552
      %v1617 = vunpack.c.l.b16 %v1553
      %v1618 = vunpack.c.l.b16 %v1554
      %v1619 = vunpack.c.l.b16 %v1555
      %v1620 = vunpack.c.l.b16 %v1556
      %v1621 = vunpack.c.l.b16 %v1557
      %v1622 = vunpack.c.l.b16 %v1558
      %v1623 = vunpack.c.l.b16 %v1559
      %v1624 = vunpack.c.l.b16 %v1560
      %v1625 = vunpack.c.l.b16 %v1561
      %v1626 = vunpack.c.l.b16 %v1562
      %v1627 = vunpack.c.l.b16 %v1563
      %v1628 = vunpack.c.l.b16 %v1564
      %v1629 = vunpack.c.l.b16 %v1565
      %v1630 = vpack.c.b16 %v1615, %v1614
      %v1631 = vpack.c.b16 %v1617, %v1616
      %v1632 = vpack.c.b16 %v1619, %v1618
      %v1633 = vpack.c.b16 %v1621, %v1620
      %v1634 = vpack.c.b16 %v1623, %v1622
      %v1635 = vpack.c.b16 %v1625, %v1624
      %v1636 = vpack.c.b16 %v1627, %v1626
      %v1637 = vpack.c.b16 %v1629, %v1628
      %1646 = vmatprep.subr.bf16.mxu0 0
      %1647 = vmatpush1.bf16.msra.mxu0 %v1637
      %1648 = vmatprep.subr.bf16.mxu0 0
      %1649 = vmatpush1.bf16.msra.mxu0 %v1636
      %1650 = vmatprep.subr.bf16.mxu0 0
      %1651 = vmatpush1.bf16.msra.mxu0 %v1635
      %1652 = vmatprep.subr.bf16.mxu0 0
      %1653 = vmatpush1.bf16.msra.mxu0 %v1634
      %1654 = vmatprep.subr.bf16.mxu0 0
      %1655 = vmatpush1.bf16.msra.mxu0 %v1633
      %1656 = vmatprep.subr.bf16.mxu0 0
      %1657 = vmatpush1.bf16.msra.mxu0 %v1632
      %1658 = vmatprep.subr.bf16.mxu0 0
      %1659 = vmatpush1.bf16.msra.mxu0 %v1631
      %1660 = vmatprep.subr.bf16.mxu0 0
      %1661 = vmatpush1.bf16.msra.mxu0 %v1630
      %1662 = vmatprep.subr.bf16.mxu0 0
      %1663 = vmatpush2.bf16.msra.mxu0 0
      %1664 = vmatprep.subr.bf16.mxu0 0
      %1665 = vmatpush2.bf16.msra.mxu0 0
      %1666 = vmatprep.subr.bf16.mxu0 0
      %1667 = vmatpush2.bf16.msra.mxu0 0
      %1668 = vmatprep.subr.bf16.mxu0 0
      %1669 = vmatpush2.bf16.msra.mxu0 0
      %1670 = vmatprep.subr.bf16.mxu0 0
      %1671 = vmatpush2.bf16.msra.mxu0 0
      %1672 = vmatprep.subr.bf16.mxu0 0
      %1673 = vmatpush2.bf16.msra.mxu0 0
      %1674 = vmatprep.subr.bf16.mxu0 0
      %1675 = vmatpush2.bf16.msra.mxu0 0
      %1676 = vmatprep.subr.bf16.mxu0 0
      %1677 = vmatpush2.bf16.msra.mxu0 0
      %1678 = vmatprep.mubr.bf16.mxu0 0
      %1679 = vmatmul.mubr.bf16.gmra.mxu0 %v1582
      %v1680 = vpop.f32.mrf.mxu0
      %v1681 = vadd.f32 0.0, %v1680
      %v1682 = vpop.f32.mrf.mxu0
      %v1683 = vpop.f32.mrf.mxu0
      %v1684 = vadd.f32 0.0, %v1683
      %v1685 = vpop.f32.mrf.mxu0
      %1686 = vmatprep.mubr.bf16.mxu0 0
      %1687 = vmatmul.mubr.bf16.gmra.mxu0 %v1583
      %v1688 = vpop.f32.mrf.mxu0
      %v1689 = vadd.f32 0.0, %v1688
      %v1690 = vpop.f32.mrf.mxu0
      %v1691 = vpop.f32.mrf.mxu0
      %v1692 = vadd.f32 0.0, %v1691
      %v1693 = vpop.f32.mrf.mxu0
      %1694 = vmatprep.mubr.bf16.mxu0 0
      %1695 = vmatmul.mubr.bf16.gmra.mxu0 %v1584
      %v1696 = vpop.f32.mrf.mxu0
      %v1697 = vadd.f32 0.0, %v1696
      %v1698 = vpop.f32.mrf.mxu0
      %v1699 = vpop.f32.mrf.mxu0
      %v1700 = vadd.f32 0.0, %v1699
      %v1701 = vpop.f32.mrf.mxu0
      %1702 = vmatprep.mubr.bf16.mxu0 0
      %1703 = vmatmul.mubr.bf16.gmra.mxu0 %v1585
      %v1704 = vpop.f32.mrf.mxu0
      %v1705 = vadd.f32 0.0, %v1704
      %v1706 = vpop.f32.mrf.mxu0
      %v1707 = vpop.f32.mrf.mxu0
      %v1708 = vadd.f32 0.0, %v1707
      %v1709 = vpop.f32.mrf.mxu0
      %1710 = vmatprep.mubr.bf16.mxu0 0
      %1711 = vmatmul.mubr.bf16.gmra.mxu0 %v1586
      %v1712 = vpop.f32.mrf.mxu0
      %v1713 = vadd.f32 0.0, %v1712
      %v1714 = vpop.f32.mrf.mxu0
      %v1715 = vpop.f32.mrf.mxu0
      %v1716 = vadd.f32 0.0, %v1715
      %v1717 = vpop.f32.mrf.mxu0
      %1718 = vmatprep.mubr.bf16.mxu0 0
      %1719 = vmatmul.mubr.bf16.gmra.mxu0 %v1587
      %v1720 = vpop.f32.mrf.mxu0
      %v1721 = vadd.f32 0.0, %v1720
      %v1722 = vpop.f32.mrf.mxu0
      %v1723 = vpop.f32.mrf.mxu0
      %v1724 = vadd.f32 0.0, %v1723
      %v1725 = vpop.f32.mrf.mxu0
      %1726 = vmatprep.mubr.bf16.mxu0 0
      %1727 = vmatmul.mubr.bf16.gmra.mxu0 %v1588
      %v1728 = vpop.f32.mrf.mxu0
      %v1729 = vadd.f32 0.0, %v1728
      %v1730 = vpop.f32.mrf.mxu0
      %v1731 = vpop.f32.mrf.mxu0
      %v1732 = vadd.f32 0.0, %v1731
      %v1733 = vpop.f32.mrf.mxu0
      %1734 = vmatprep.mubr.bf16.mxu0 0
      %1735 = vmatmul.mubr.bf16.gmra.mxu0 %v1589
      %v1736 = vpop.f32.mrf.mxu0
      %v1737 = vadd.f32 0.0, %v1736
      %v1738 = vpop.f32.mrf.mxu0
      %v1739 = vpop.f32.mrf.mxu0
      %v1740 = vadd.f32 0.0, %v1739
      %v1741 = vpop.f32.mrf.mxu0
      %1742 = vdwg.mxu0
      %v1759 = vunpack.c.l.b16 %v1314
      %v1760 = vunpack.c.l.b16 %v1315
      %v1761 = vunpack.c.l.b16 %v1316
      %v1762 = vunpack.c.l.b16 %v1317
      %v1763 = vunpack.c.l.b16 %v1318
      %v1764 = vunpack.c.l.b16 %v1319
      %v1765 = vunpack.c.l.b16 %v1320
      %v1766 = vunpack.c.l.b16 %v1321
      %v1767 = vunpack.c.l.b16 %v1322
      %v1768 = vunpack.c.l.b16 %v1323
      %v1769 = vunpack.c.l.b16 %v1324
      %v1770 = vunpack.c.l.b16 %v1325
      %v1771 = vunpack.c.l.b16 %v1326
      %v1772 = vunpack.c.l.b16 %v1327
      %v1773 = vunpack.c.l.b16 %v1328
      %v1774 = vunpack.c.l.b16 %v1329
      %v1775 = vpack.c.b16 %v1760, %v1759
      %v1776 = vpack.c.b16 %v1762, %v1761
      %v1777 = vpack.c.b16 %v1764, %v1763
      %v1778 = vpack.c.b16 %v1766, %v1765
      %v1779 = vpack.c.b16 %v1768, %v1767
      %v1780 = vpack.c.b16 %v1770, %v1769
      %v1781 = vpack.c.b16 %v1772, %v1771
      %v1782 = vpack.c.b16 %v1774, %v1773
      %v1807 = vunpack.c.l.b16 %v1330
      %v1808 = vunpack.c.l.b16 %v1331
      %v1809 = vunpack.c.l.b16 %v1332
      %v1810 = vunpack.c.l.b16 %v1333
      %v1811 = vunpack.c.l.b16 %v1334
      %v1812 = vunpack.c.l.b16 %v1335
      %v1813 = vunpack.c.l.b16 %v1336
      %v1814 = vunpack.c.l.b16 %v1337
      %v1815 = vunpack.c.l.b16 %v1338
      %v1816 = vunpack.c.l.b16 %v1339
      %v1817 = vunpack.c.l.b16 %v1340
      %v1818 = vunpack.c.l.b16 %v1341
      %v1819 = vunpack.c.l.b16 %v1342
      %v1820 = vunpack.c.l.b16 %v1343
      %v1821 = vunpack.c.l.b16 %v1344
      %v1822 = vunpack.c.l.b16 %v1345
      %v1823 = vpack.c.b16 %v1808, %v1807
      %v1824 = vpack.c.b16 %v1810, %v1809
      %v1825 = vpack.c.b16 %v1812, %v1811
      %v1826 = vpack.c.b16 %v1814, %v1813
      %v1827 = vpack.c.b16 %v1816, %v1815
      %v1828 = vpack.c.b16 %v1818, %v1817
      %v1829 = vpack.c.b16 %v1820, %v1819
      %v1830 = vpack.c.b16 %v1822, %v1821
      %1839 = vmatprep.subr.bf16.mxu0 0
      %1840 = vmatpush1.bf16.msra.mxu0 %v1830
      %1841 = vmatprep.subr.bf16.mxu0 0
      %1842 = vmatpush1.bf16.msra.mxu0 %v1829
      %1843 = vmatprep.subr.bf16.mxu0 0
      %1844 = vmatpush1.bf16.msra.mxu0 %v1828
      %1845 = vmatprep.subr.bf16.mxu0 0
      %1846 = vmatpush1.bf16.msra.mxu0 %v1827
      %1847 = vmatprep.subr.bf16.mxu0 0
      %1848 = vmatpush1.bf16.msra.mxu0 %v1826
      %1849 = vmatprep.subr.bf16.mxu0 0
      %1850 = vmatpush1.bf16.msra.mxu0 %v1825
      %1851 = vmatprep.subr.bf16.mxu0 0
      %1852 = vmatpush1.bf16.msra.mxu0 %v1824
      %1853 = vmatprep.subr.bf16.mxu0 0
      %1854 = vmatpush1.bf16.msra.mxu0 %v1823
      %1855 = vmatprep.subr.bf16.mxu0 0
      %1856 = vmatpush2.bf16.msra.mxu0 0
      %1857 = vmatprep.subr.bf16.mxu0 0
      %1858 = vmatpush2.bf16.msra.mxu0 0
      %1859 = vmatprep.subr.bf16.mxu0 0
      %1860 = vmatpush2.bf16.msra.mxu0 0
      %1861 = vmatprep.subr.bf16.mxu0 0
      %1862 = vmatpush2.bf16.msra.mxu0 0
      %1863 = vmatprep.subr.bf16.mxu0 0
      %1864 = vmatpush2.bf16.msra.mxu0 0
      %1865 = vmatprep.subr.bf16.mxu0 0
      %1866 = vmatpush2.bf16.msra.mxu0 0
      %1867 = vmatprep.subr.bf16.mxu0 0
      %1868 = vmatpush2.bf16.msra.mxu0 0
      %1869 = vmatprep.subr.bf16.mxu0 0
      %1870 = vmatpush2.bf16.msra.mxu0 0
      %1871 = vmatprep.mubr.bf16.mxu0 0
      %1872 = vmatmul.mubr.bf16.gmra.mxu0 %v1775
      %v1873 = vpop.f32.mrf.mxu0
      %v1874 = vadd.f32 %v1681, %v1873
      %v1875 = vpop.f32.mrf.mxu0
      %v1876 = vpop.f32.mrf.mxu0
      %v1877 = vadd.f32 %v1684, %v1876
      %v1878 = vpop.f32.mrf.mxu0
      %1879 = vmatprep.mubr.bf16.mxu0 0
      %1880 = vmatmul.mubr.bf16.gmra.mxu0 %v1776
      %v1881 = vpop.f32.mrf.mxu0
      %v1882 = vadd.f32 %v1689, %v1881
      %v1883 = vpop.f32.mrf.mxu0
      %v1884 = vpop.f32.mrf.mxu0
      %v1885 = vadd.f32 %v1692, %v1884
      %v1886 = vpop.f32.mrf.mxu0
      %1887 = vmatprep.mubr.bf16.mxu0 0
      %1888 = vmatmul.mubr.bf16.gmra.mxu0 %v1777
      %v1889 = vpop.f32.mrf.mxu0
      %v1890 = vadd.f32 %v1697, %v1889
      %v1891 = vpop.f32.mrf.mxu0
      %v1892 = vpop.f32.mrf.mxu0
      %v1893 = vadd.f32 %v1700, %v1892
      %v1894 = vpop.f32.mrf.mxu0
      %1895 = vmatprep.mubr.bf16.mxu0 0
      %1896 = vmatmul.mubr.bf16.gmra.mxu0 %v1778
      %v1897 = vpop.f32.mrf.mxu0
      %v1898 = vadd.f32 %v1705, %v1897
      %v1899 = vpop.f32.mrf.mxu0
      %v1900 = vpop.f32.mrf.mxu0
      %v1901 = vadd.f32 %v1708, %v1900
      %v1902 = vpop.f32.mrf.mxu0
      %1903 = vmatprep.mubr.bf16.mxu0 0
      %1904 = vmatmul.mubr.bf16.gmra.mxu0 %v1779
      %v1905 = vpop.f32.mrf.mxu0
      %v1906 = vadd.f32 %v1713, %v1905
      %v1907 = vpop.f32.mrf.mxu0
      %v1908 = vpop.f32.mrf.mxu0
      %v1909 = vadd.f32 %v1716, %v1908
      %v1910 = vpop.f32.mrf.mxu0
      %1911 = vmatprep.mubr.bf16.mxu0 0
      %1912 = vmatmul.mubr.bf16.gmra.mxu0 %v1780
      %v1913 = vpop.f32.mrf.mxu0
      %v1914 = vadd.f32 %v1721, %v1913
      %v1915 = vpop.f32.mrf.mxu0
      %v1916 = vpop.f32.mrf.mxu0
      %v1917 = vadd.f32 %v1724, %v1916
      %v1918 = vpop.f32.mrf.mxu0
      %1919 = vmatprep.mubr.bf16.mxu0 0
      %1920 = vmatmul.mubr.bf16.gmra.mxu0 %v1781
      %v1921 = vpop.f32.mrf.mxu0
      %v1922 = vadd.f32 %v1729, %v1921
      %v1923 = vpop.f32.mrf.mxu0
      %v1924 = vpop.f32.mrf.mxu0
      %v1925 = vadd.f32 %v1732, %v1924
      %v1926 = vpop.f32.mrf.mxu0
      %1927 = vmatprep.mubr.bf16.mxu0 0
      %1928 = vmatmul.mubr.bf16.gmra.mxu0 %v1782
      %v1929 = vpop.f32.mrf.mxu0
      %v1930 = vadd.f32 %v1737, %v1929
      %v1931 = vpop.f32.mrf.mxu0
      %v1932 = vpop.f32.mrf.mxu0
      %v1933 = vadd.f32 %v1740, %v1932
      %v1934 = vpop.f32.mrf.mxu0
      %1935 = vdwg.mxu0
      %v1936 = vld [vmem:[#allocation2] sm:$0xe]
      %v1937 = vld [vmem:[#allocation2 + $0xc] sm:$0xe]
      %v1938 = vld [vmem:[#allocation2 + $0x18] sm:$0xe]
      %v1939 = vld [vmem:[#allocation2 + $0x24] sm:$0xe]
      %v1940 = vld [vmem:[#allocation2 + $0x30] sm:$0xe]
      %v1941 = vld [vmem:[#allocation2 + $0x3c] sm:$0xe]
      %v1942 = vld [vmem:[#allocation2 + $0x48] sm:$0xe]
      %v1943 = vld [vmem:[#allocation2 + $0x54] sm:$0xe]
      %vm1960 = vcmask 1042432
      %vm1961 = vcmask 1046532
      %vm1962 = vmor %vm1960, %vm1961
      %v1963 = vrot.slane %v1936, 5
      %v1964 = vrot.slane %v1963, 4
      %v1965 = vrot.slane %v1315, 5
      %v1966 = vsel %vm1962, %v1964, %v1965
      %v1967 = vrot.slane %v1965, 4
      %v1968 = vrot.slane %v1346, 5
      %v1969 = vsel %vm1962, %v1967, %v1968
      %v1970 = vrot.slane %v1937, 5
      %v1971 = vrot.slane %v1970, 4
      %v1972 = vrot.slane %v1317, 5
      %v1973 = vsel %vm1962, %v1971, %v1972
      %v1974 = vrot.slane %v1972, 4
      %v1975 = vrot.slane %v1347, 5
      %v1976 = vsel %vm1962, %v1974, %v1975
      %v1977 = vrot.slane %v1938, 5
      %v1978 = vrot.slane %v1977, 4
      %v1979 = vrot.slane %v1319, 5
      %v1980 = vsel %vm1962, %v1978, %v1979
      %v1981 = vrot.slane %v1979, 4
      %v1982 = vrot.slane %v1348, 5
      %v1983 = vsel %vm1962, %v1981, %v1982
      %v1984 = vrot.slane %v1939, 5
      %v1985 = vrot.slane %v1984, 4
      %v1986 = vrot.slane %v1321, 5
      %v1987 = vsel %vm1962, %v1985, %v1986
      %v1988 = vrot.slane %v1986, 4
      %v1989 = vrot.slane %v1349, 5
      %v1990 = vsel %vm1962, %v1988, %v1989
      %v1991 = vrot.slane %v1940, 5
      %v1992 = vrot.slane %v1991, 4
      %v1993 = vrot.slane %v1323, 5
      %v1994 = vsel %vm1962, %v1992, %v1993
      %v1995 = vrot.slane %v1993, 4
      %v1996 = vrot.slane %v1350, 5
      %v1997 = vsel %vm1962, %v1995, %v1996
      %v1998 = vrot.slane %v1941, 5
      %v1999 = vrot.slane %v1998, 4
      %v2000 = vrot.slane %v1325, 5
      %v2001 = vsel %vm1962, %v1999, %v2000
      %v2002 = vrot.slane %v2000, 4
      %v2003 = vrot.slane %v1351, 5
      %v2004 = vsel %vm1962, %v2002, %v2003
      %v2005 = vrot.slane %v1942, 5
      %v2006 = vrot.slane %v2005, 4
      %v2007 = vrot.slane %v1327, 5
      %v2008 = vsel %vm1962, %v2006, %v2007
      %v2009 = vrot.slane %v2007, 4
      %v2010 = vrot.slane %v1352, 5
      %v2011 = vsel %vm1962, %v2009, %v2010
      %v2012 = vrot.slane %v1943, 5
      %v2013 = vrot.slane %v2012, 4
      %v2014 = vrot.slane %v1329, 5
      %v2015 = vsel %vm1962, %v2013, %v2014
      %v2016 = vrot.slane %v2014, 4
      %v2017 = vrot.slane %v1353, 5
      %v2018 = vsel %vm1962, %v2016, %v2017
      %s2019 = scalar_lea.vmem %s6, 128
      %v2020 = vld [vmem:[%s2019] sm:$0xf]
      %v2021 = vld [vmem:[%s2019 + $0x4] sm:$0xf]
      %v2022 = vld [vmem:[%s2019 + $0x8] sm:$0xf]
      %v2023 = vld [vmem:[%s2019 + $0xc] sm:$0xf]
      %v2024 = vld [vmem:[%s2019 + $0x10] sm:$0xf]
      %v2025 = vld [vmem:[%s2019 + $0x14] sm:$0xf]
      %v2026 = vld [vmem:[%s2019 + $0x18] sm:$0xf]
      %v2027 = vld [vmem:[%s2019 + $0x1c] sm:$0xf]
      %v2028 = vld [vmem:[%s2019 + $0x20] sm:$0xf]
      %v2029 = vld [vmem:[%s2019 + $0x24] sm:$0xf]
      %v2030 = vld [vmem:[%s2019 + $0x28] sm:$0xf]
      %v2031 = vld [vmem:[%s2019 + $0x2c] sm:$0xf]
      %v2032 = vld [vmem:[%s2019 + $0x30] sm:$0xf]
      %v2033 = vld [vmem:[%s2019 + $0x34] sm:$0xf]
      %v2034 = vld [vmem:[%s2019 + $0x38] sm:$0xf]
      %v2035 = vld [vmem:[%s2019 + $0x3c] sm:$0xf]
      %v2036 = vunpack.c.l.b16 %v1966
      %v2037 = vunpack.c.l.b16 %v1969
      %v2038 = vunpack.c.l.b16 %v1973
      %v2039 = vunpack.c.l.b16 %v1976
      %v2040 = vunpack.c.l.b16 %v1980
      %v2041 = vunpack.c.l.b16 %v1983
      %v2042 = vunpack.c.l.b16 %v1987
      %v2043 = vunpack.c.l.b16 %v1990
      %v2044 = vunpack.c.l.b16 %v1994
      %v2045 = vunpack.c.l.b16 %v1997
      %v2046 = vunpack.c.l.b16 %v2001
      %v2047 = vunpack.c.l.b16 %v2004
      %v2048 = vunpack.c.l.b16 %v2008
      %v2049 = vunpack.c.l.b16 %v2011
      %v2050 = vunpack.c.l.b16 %v2015
      %v2051 = vunpack.c.l.b16 %v2018
      %v2052 = vpack.c.b16 %v2037, %v2036
      %v2053 = vpack.c.b16 %v2039, %v2038
      %v2054 = vpack.c.b16 %v2041, %v2040
      %v2055 = vpack.c.b16 %v2043, %v2042
      %v2056 = vpack.c.b16 %v2045, %v2044
      %v2057 = vpack.c.b16 %v2047, %v2046
      %v2058 = vpack.c.b16 %v2049, %v2048
      %v2059 = vpack.c.b16 %v2051, %v2050
      %v2084 = vunpack.c.l.b16 %v2020
      %v2085 = vunpack.c.l.b16 %v2021
      %v2086 = vunpack.c.l.b16 %v2022
      %v2087 = vunpack.c.l.b16 %v2023
      %v2088 = vunpack.c.l.b16 %v2024
      %v2089 = vunpack.c.l.b16 %v2025
      %v2090 = vunpack.c.l.b16 %v2026
      %v2091 = vunpack.c.l.b16 %v2027
      %v2092 = vunpack.c.l.b16 %v2028
      %v2093 = vunpack.c.l.b16 %v2029
      %v2094 = vunpack.c.l.b16 %v2030
      %v2095 = vunpack.c.l.b16 %v2031
      %v2096 = vunpack.c.l.b16 %v2032
      %v2097 = vunpack.c.l.b16 %v2033
      %v2098 = vunpack.c.l.b16 %v2034
      %v2099 = vunpack.c.l.b16 %v2035
      %v2100 = vpack.c.b16 %v2085, %v2084
      %v2101 = vpack.c.b16 %v2087, %v2086
      %v2102 = vpack.c.b16 %v2089, %v2088
      %v2103 = vpack.c.b16 %v2091, %v2090
      %v2104 = vpack.c.b16 %v2093, %v2092
      %v2105 = vpack.c.b16 %v2095, %v2094
      %v2106 = vpack.c.b16 %v2097, %v2096
      %v2107 = vpack.c.b16 %v2099, %v2098
      %2116 = vmatprep.subr.bf16.mxu0 0
      %2117 = vmatpush1.bf16.msra.mxu0 %v2107
      %2118 = vmatprep.subr.bf16.mxu0 0
      %2119 = vmatpush1.bf16.msra.mxu0 %v2106
      %2120 = vmatprep.subr.bf16.mxu0 0
      %2121 = vmatpush1.bf16.msra.mxu0 %v2105
      %2122 = vmatprep.subr.bf16.mxu0 0
      %2123 = vmatpush1.bf16.msra.mxu0 %v2104
      %2124 = vmatprep.subr.bf16.mxu0 0
      %2125 = vmatpush1.bf16.msra.mxu0 %v2103
      %2126 = vmatprep.subr.bf16.mxu0 0
      %2127 = vmatpush1.bf16.msra.mxu0 %v2102
      %2128 = vmatprep.subr.bf16.mxu0 0
      %2129 = vmatpush1.bf16.msra.mxu0 %v2101
      %2130 = vmatprep.subr.bf16.mxu0 0
      %2131 = vmatpush1.bf16.msra.mxu0 %v2100
      %2132 = vmatprep.subr.bf16.mxu0 0
      %2133 = vmatpush2.bf16.msra.mxu0 0
      %2134 = vmatprep.subr.bf16.mxu0 0
      %2135 = vmatpush2.bf16.msra.mxu0 0
      %2136 = vmatprep.subr.bf16.mxu0 0
      %2137 = vmatpush2.bf16.msra.mxu0 0
      %2138 = vmatprep.subr.bf16.mxu0 0
      %2139 = vmatpush2.bf16.msra.mxu0 0
      %2140 = vmatprep.subr.bf16.mxu0 0
      %2141 = vmatpush2.bf16.msra.mxu0 0
      %2142 = vmatprep.subr.bf16.mxu0 0
      %2143 = vmatpush2.bf16.msra.mxu0 0
      %2144 = vmatprep.subr.bf16.mxu0 0
      %2145 = vmatpush2.bf16.msra.mxu0 0
      %2146 = vmatprep.subr.bf16.mxu0 0
      %2147 = vmatpush2.bf16.msra.mxu0 0
      %2148 = vmatprep.mubr.bf16.mxu0 0
      %2149 = vmatmul.mubr.bf16.gmra.mxu0 %v2052
      %v2150 = vpop.f32.mrf.mxu0
      %v2151 = vadd.f32 0.0, %v2150
      %v2152 = vpop.f32.mrf.mxu0
      %v2153 = vpop.f32.mrf.mxu0
      %v2154 = vadd.f32 0.0, %v2153
      %v2155 = vpop.f32.mrf.mxu0
      %2156 = vmatprep.mubr.bf16.mxu0 0
      %2157 = vmatmul.mubr.bf16.gmra.mxu0 %v2053
      %v2158 = vpop.f32.mrf.mxu0
      %v2159 = vadd.f32 0.0, %v2158
      %v2160 = vpop.f32.mrf.mxu0
      %v2161 = vpop.f32.mrf.mxu0
      %v2162 = vadd.f32 0.0, %v2161
      %v2163 = vpop.f32.mrf.mxu0
      %2164 = vmatprep.mubr.bf16.mxu0 0
      %2165 = vmatmul.mubr.bf16.gmra.mxu0 %v2054
      %v2166 = vpop.f32.mrf.mxu0
      %v2167 = vadd.f32 0.0, %v2166
      %v2168 = vpop.f32.mrf.mxu0
      %v2169 = vpop.f32.mrf.mxu0
      %v2170 = vadd.f32 0.0, %v2169
      %v2171 = vpop.f32.mrf.mxu0
      %2172 = vmatprep.mubr.bf16.mxu0 0
      %2173 = vmatmul.mubr.bf16.gmra.mxu0 %v2055
      %v2174 = vpop.f32.mrf.mxu0
      %v2175 = vadd.f32 0.0, %v2174
      %v2176 = vpop.f32.mrf.mxu0
      %v2177 = vpop.f32.mrf.mxu0
      %v2178 = vadd.f32 0.0, %v2177
      %v2179 = vpop.f32.mrf.mxu0
      %2180 = vmatprep.mubr.bf16.mxu0 0
      %2181 = vmatmul.mubr.bf16.gmra.mxu0 %v2056
      %v2182 = vpop.f32.mrf.mxu0
      %v2183 = vadd.f32 0.0, %v2182
      %v2184 = vpop.f32.mrf.mxu0
      %v2185 = vpop.f32.mrf.mxu0
      %v2186 = vadd.f32 0.0, %v2185
      %v2187 = vpop.f32.mrf.mxu0
      %2188 = vmatprep.mubr.bf16.mxu0 0
      %2189 = vmatmul.mubr.bf16.gmra.mxu0 %v2057
      %v2190 = vpop.f32.mrf.mxu0
      %v2191 = vadd.f32 0.0, %v2190
      %v2192 = vpop.f32.mrf.mxu0
      %v2193 = vpop.f32.mrf.mxu0
      %v2194 = vadd.f32 0.0, %v2193
      %v2195 = vpop.f32.mrf.mxu0
      %2196 = vmatprep.mubr.bf16.mxu0 0
      %2197 = vmatmul.mubr.bf16.gmra.mxu0 %v2058
      %v2198 = vpop.f32.mrf.mxu0
      %v2199 = vadd.f32 0.0, %v2198
      %v2200 = vpop.f32.mrf.mxu0
      %v2201 = vpop.f32.mrf.mxu0
      %v2202 = vadd.f32 0.0, %v2201
      %v2203 = vpop.f32.mrf.mxu0
      %2204 = vmatprep.mubr.bf16.mxu0 0
      %2205 = vmatmul.mubr.bf16.gmra.mxu0 %v2059
      %v2206 = vpop.f32.mrf.mxu0
      %v2207 = vadd.f32 0.0, %v2206
      %v2208 = vpop.f32.mrf.mxu0
      %v2209 = vpop.f32.mrf.mxu0
      %v2210 = vadd.f32 0.0, %v2209
      %v2211 = vpop.f32.mrf.mxu0
      %2212 = vdwg.mxu0
      %v2213 = vadd.f32 %v1874, %v2151
      %v2214 = vadd.f32 %v1877, %v2154
      %v2215 = vadd.f32 %v1882, %v2159
      %v2216 = vadd.f32 %v1885, %v2162
      %v2217 = vadd.f32 %v1890, %v2167
      %v2218 = vadd.f32 %v1893, %v2170
      %v2219 = vadd.f32 %v1898, %v2175
      %v2220 = vadd.f32 %v1901, %v2178
      %v2221 = vadd.f32 %v1906, %v2183
      %v2222 = vadd.f32 %v1909, %v2186
      %v2223 = vadd.f32 %v1914, %v2191
      %v2224 = vadd.f32 %v1917, %v2194
      %v2225 = vadd.f32 %v1922, %v2199
      %v2226 = vadd.f32 %v1925, %v2202
      %v2227 = vadd.f32 %v1930, %v2207
      %v2228 = vadd.f32 %v1933, %v2210
      %v2229 = vld [vmem:[%s1223] sm:$0xf]
      %v2230 = vld [vmem:[%s1223 + $0x4] sm:$0xf]
      %v2231 = vld [vmem:[%s1223 + $0xc] sm:$0xf]
      %v2232 = vld [vmem:[%s1223 + $0x10] sm:$0xf]
      %v2233 = vld [vmem:[%s1223 + $0x18] sm:$0xf]
      %v2234 = vld [vmem:[%s1223 + $0x1c] sm:$0xf]
      %v2235 = vld [vmem:[%s1223 + $0x24] sm:$0xf]
      %v2236 = vld [vmem:[%s1223 + $0x28] sm:$0xf]
      %v2237 = vld [vmem:[%s1223 + $0x30] sm:$0xf]
      %v2238 = vld [vmem:[%s1223 + $0x34] sm:$0xf]
      %v2239 = vld [vmem:[%s1223 + $0x3c] sm:$0xf]
      %v2240 = vld [vmem:[%s1223 + $0x40] sm:$0xf]
      %v2241 = vld [vmem:[%s1223 + $0x48] sm:$0xf]
      %v2242 = vld [vmem:[%s1223 + $0x4c] sm:$0xf]
      %v2243 = vld [vmem:[%s1223 + $0x54] sm:$0xf]
      %v2244 = vld [vmem:[%s1223 + $0x58] sm:$0xf]
      %s2245 = scalar_lea.vmem %s6, 192
      %v2246 = vld [vmem:[%s2245] sm:$0xf]
      %v2247 = vld [vmem:[%s2245 + $0x4] sm:$0xf]
      %v2248 = vld [vmem:[%s2245 + $0x8] sm:$0xf]
      %v2249 = vld [vmem:[%s2245 + $0xc] sm:$0xf]
      %v2250 = vld [vmem:[%s2245 + $0x10] sm:$0xf]
      %v2251 = vld [vmem:[%s2245 + $0x14] sm:$0xf]
      %v2252 = vld [vmem:[%s2245 + $0x18] sm:$0xf]
      %v2253 = vld [vmem:[%s2245 + $0x1c] sm:$0xf]
      %v2254 = vld [vmem:[%s2245 + $0x20] sm:$0xf]
      %v2255 = vld [vmem:[%s2245 + $0x24] sm:$0xf]
      %v2256 = vld [vmem:[%s2245 + $0x28] sm:$0xf]
      %v2257 = vld [vmem:[%s2245 + $0x2c] sm:$0xf]
      %v2258 = vld [vmem:[%s2245 + $0x30] sm:$0xf]
      %v2259 = vld [vmem:[%s2245 + $0x34] sm:$0xf]
      %v2260 = vld [vmem:[%s2245 + $0x38] sm:$0xf]
      %v2261 = vld [vmem:[%s2245 + $0x3c] sm:$0xf]
      %v2278 = vunpack.c.l.b16 %v2229
      %v2279 = vunpack.c.l.b16 %v2230
      %v2280 = vunpack.c.l.b16 %v2231
      %v2281 = vunpack.c.l.b16 %v2232
      %v2282 = vunpack.c.l.b16 %v2233
      %v2283 = vunpack.c.l.b16 %v2234
      %v2284 = vunpack.c.l.b16 %v2235
      %v2285 = vunpack.c.l.b16 %v2236
      %v2286 = vunpack.c.l.b16 %v2237
      %v2287 = vunpack.c.l.b16 %v2238
      %v2288 = vunpack.c.l.b16 %v2239
      %v2289 = vunpack.c.l.b16 %v2240
      %v2290 = vunpack.c.l.b16 %v2241
      %v2291 = vunpack.c.l.b16 %v2242
      %v2292 = vunpack.c.l.b16 %v2243
      %v2293 = vunpack.c.l.b16 %v2244
      %v2294 = vpack.c.b16 %v2279, %v2278
      %v2295 = vpack.c.b16 %v2281, %v2280
      %v2296 = vpack.c.b16 %v2283, %v2282
      %v2297 = vpack.c.b16 %v2285, %v2284
      %v2298 = vpack.c.b16 %v2287, %v2286
      %v2299 = vpack.c.b16 %v2289, %v2288
      %v2300 = vpack.c.b16 %v2291, %v2290
      %v2301 = vpack.c.b16 %v2293, %v2292
      %v2326 = vunpack.c.l.b16 %v2246
      %v2327 = vunpack.c.l.b16 %v2247
      %v2328 = vunpack.c.l.b16 %v2248
      %v2329 = vunpack.c.l.b16 %v2249
      %v2330 = vunpack.c.l.b16 %v2250
      %v2331 = vunpack.c.l.b16 %v2251
      %v2332 = vunpack.c.l.b16 %v2252
      %v2333 = vunpack.c.l.b16 %v2253
      %v2334 = vunpack.c.l.b16 %v2254
      %v2335 = vunpack.c.l.b16 %v2255
      %v2336 = vunpack.c.l.b16 %v2256
      %v2337 = vunpack.c.l.b16 %v2257
      %v2338 = vunpack.c.l.b16 %v2258
      %v2339 = vunpack.c.l.b16 %v2259
      %v2340 = vunpack.c.l.b16 %v2260
      %v2341 = vunpack.c.l.b16 %v2261
      %v2342 = vpack.c.b16 %v2327, %v2326
      %v2343 = vpack.c.b16 %v2329, %v2328
      %v2344 = vpack.c.b16 %v2331, %v2330
      %v2345 = vpack.c.b16 %v2333, %v2332
      %v2346 = vpack.c.b16 %v2335, %v2334
      %v2347 = vpack.c.b16 %v2337, %v2336
      %v2348 = vpack.c.b16 %v2339, %v2338
      %v2349 = vpack.c.b16 %v2341, %v2340
      %2358 = vmatprep.subr.bf16.mxu0 0
      %2359 = vmatpush1.bf16.msra.mxu0 %v2349
      %2360 = vmatprep.subr.bf16.mxu0 0
      %2361 = vmatpush1.bf16.msra.mxu0 %v2348
      %2362 = vmatprep.subr.bf16.mxu0 0
      %2363 = vmatpush1.bf16.msra.mxu0 %v2347
      %2364 = vmatprep.subr.bf16.mxu0 0
      %2365 = vmatpush1.bf16.msra.mxu0 %v2346
      %2366 = vmatprep.subr.bf16.mxu0 0
      %2367 = vmatpush1.bf16.msra.mxu0 %v2345
      %2368 = vmatprep.subr.bf16.mxu0 0
      %2369 = vmatpush1.bf16.msra.mxu0 %v2344
      %2370 = vmatprep.subr.bf16.mxu0 0
      %2371 = vmatpush1.bf16.msra.mxu0 %v2343
      %2372 = vmatprep.subr.bf16.mxu0 0
      %2373 = vmatpush1.bf16.msra.mxu0 %v2342
      %2374 = vmatprep.subr.bf16.mxu0 0
      %2375 = vmatpush2.bf16.msra.mxu0 0
      %2376 = vmatprep.subr.bf16.mxu0 0
      %2377 = vmatpush2.bf16.msra.mxu0 0
      %2378 = vmatprep.subr.bf16.mxu0 0
      %2379 = vmatpush2.bf16.msra.mxu0 0
      %2380 = vmatprep.subr.bf16.mxu0 0
      %2381 = vmatpush2.bf16.msra.mxu0 0
      %2382 = vmatprep.subr.bf16.mxu0 0
      %2383 = vmatpush2.bf16.msra.mxu0 0
      %2384 = vmatprep.subr.bf16.mxu0 0
      %2385 = vmatpush2.bf16.msra.mxu0 0
      %2386 = vmatprep.subr.bf16.mxu0 0
      %2387 = vmatpush2.bf16.msra.mxu0 0
      %2388 = vmatprep.subr.bf16.mxu0 0
      %2389 = vmatpush2.bf16.msra.mxu0 0
      %2390 = vmatprep.mubr.bf16.mxu0 0
      %2391 = vmatmul.mubr.bf16.gmra.mxu0 %v2294
      %v2392 = vpop.f32.mrf.mxu0
      %v2393 = vadd.f32 0.0, %v2392
      %v2394 = vpop.f32.mrf.mxu0
      %v2395 = vpop.f32.mrf.mxu0
      %v2396 = vadd.f32 0.0, %v2395
      %v2397 = vpop.f32.mrf.mxu0
      %2398 = vmatprep.mubr.bf16.mxu0 0
      %2399 = vmatmul.mubr.bf16.gmra.mxu0 %v2295
      %v2400 = vpop.f32.mrf.mxu0
      %v2401 = vadd.f32 0.0, %v2400
      %v2402 = vpop.f32.mrf.mxu0
      %v2403 = vpop.f32.mrf.mxu0
      %v2404 = vadd.f32 0.0, %v2403
      %v2405 = vpop.f32.mrf.mxu0
      %2406 = vmatprep.mubr.bf16.mxu0 0
      %2407 = vmatmul.mubr.bf16.gmra.mxu0 %v2296
      %v2408 = vpop.f32.mrf.mxu0
      %v2409 = vadd.f32 0.0, %v2408
      %v2410 = vpop.f32.mrf.mxu0
      %v2411 = vpop.f32.mrf.mxu0
      %v2412 = vadd.f32 0.0, %v2411
      %v2413 = vpop.f32.mrf.mxu0
      %2414 = vmatprep.mubr.bf16.mxu0 0
      %2415 = vmatmul.mubr.bf16.gmra.mxu0 %v2297
      %v2416 = vpop.f32.mrf.mxu0
      %v2417 = vadd.f32 0.0, %v2416
      %v2418 = vpop.f32.mrf.mxu0
      %v2419 = vpop.f32.mrf.mxu0
      %v2420 = vadd.f32 0.0, %v2419
      %v2421 = vpop.f32.mrf.mxu0
      %2422 = vmatprep.mubr.bf16.mxu0 0
      %2423 = vmatmul.mubr.bf16.gmra.mxu0 %v2298
      %v2424 = vpop.f32.mrf.mxu0
      %v2425 = vadd.f32 0.0, %v2424
      %v2426 = vpop.f32.mrf.mxu0
      %v2427 = vpop.f32.mrf.mxu0
      %v2428 = vadd.f32 0.0, %v2427
      %v2429 = vpop.f32.mrf.mxu0
      %2430 = vmatprep.mubr.bf16.mxu0 0
      %2431 = vmatmul.mubr.bf16.gmra.mxu0 %v2299
      %v2432 = vpop.f32.mrf.mxu0
      %v2433 = vadd.f32 0.0, %v2432
      %v2434 = vpop.f32.mrf.mxu0
      %v2435 = vpop.f32.mrf.mxu0
      %v2436 = vadd.f32 0.0, %v2435
      %v2437 = vpop.f32.mrf.mxu0
      %2438 = vmatprep.mubr.bf16.mxu0 0
      %2439 = vmatmul.mubr.bf16.gmra.mxu0 %v2300
      %v2440 = vpop.f32.mrf.mxu0
      %v2441 = vadd.f32 0.0, %v2440
      %v2442 = vpop.f32.mrf.mxu0
      %v2443 = vpop.f32.mrf.mxu0
      %v2444 = vadd.f32 0.0, %v2443
      %v2445 = vpop.f32.mrf.mxu0
      %2446 = vmatprep.mubr.bf16.mxu0 0
      %2447 = vmatmul.mubr.bf16.gmra.mxu0 %v2301
      %v2448 = vpop.f32.mrf.mxu0
      %v2449 = vadd.f32 0.0, %v2448
      %v2450 = vpop.f32.mrf.mxu0
      %v2451 = vpop.f32.mrf.mxu0
      %v2452 = vadd.f32 0.0, %v2451
      %v2453 = vpop.f32.mrf.mxu0
      %2454 = vdwg.mxu0
      %v2455 = vadd.f32 %v2213, %v2393
      %v2456 = vadd.f32 %v2214, %v2396
      %v2457 = vadd.f32 %v2215, %v2401
      %v2458 = vadd.f32 %v2216, %v2404
      %v2459 = vadd.f32 %v2217, %v2409
      %v2460 = vadd.f32 %v2218, %v2412
      %v2461 = vadd.f32 %v2219, %v2417
      %v2462 = vadd.f32 %v2220, %v2420
      %v2463 = vadd.f32 %v2221, %v2425
      %v2464 = vadd.f32 %v2222, %v2428
      %v2465 = vadd.f32 %v2223, %v2433
      %v2466 = vadd.f32 %v2224, %v2436
      %v2467 = vadd.f32 %v2225, %v2441
      %v2468 = vadd.f32 %v2226, %v2444
      %v2469 = vadd.f32 %v2227, %v2449
      %v2470 = vadd.f32 %v2228, %v2452
      %v2471 = vld [vmem:[%s1223] sm:$0xf]
      %v2472 = vld [vmem:[%s1223 + $0x4] sm:$0xf]
      %v2473 = vld [vmem:[%s1223 + $0x8] sm:$0x1]
      %v2474 = vld [vmem:[%s1223 + $0xc] sm:$0xf]
      %v2475 = vld [vmem:[%s1223 + $0x10] sm:$0xf]
      %v2476 = vld [vmem:[%s1223 + $0x14] sm:$0x1]
      %v2477 = vld [vmem:[%s1223 + $0x18] sm:$0xf]
      %v2478 = vld [vmem:[%s1223 + $0x1c] sm:$0xf]
      %v2479 = vld [vmem:[%s1223 + $0x20] sm:$0x1]
      %v2480 = vld [vmem:[%s1223 + $0x24] sm:$0xf]
      %v2481 = vld [vmem:[%s1223 + $0x28] sm:$0xf]
      %v2482 = vld [vmem:[%s1223 + $0x2c] sm:$0x1]
      %v2483 = vld [vmem:[%s1223 + $0x30] sm:$0xf]
      %v2484 = vld [vmem:[%s1223 + $0x34] sm:$0xf]
      %v2485 = vld [vmem:[%s1223 + $0x38] sm:$0x1]
      %v2486 = vld [vmem:[%s1223 + $0x3c] sm:$0xf]
      %v2487 = vld [vmem:[%s1223 + $0x40] sm:$0xf]
      %v2488 = vld [vmem:[%s1223 + $0x44] sm:$0x1]
      %v2489 = vld [vmem:[%s1223 + $0x48] sm:$0xf]
      %v2490 = vld [vmem:[%s1223 + $0x4c] sm:$0xf]
      %v2491 = vld [vmem:[%s1223 + $0x50] sm:$0x1]
      %v2492 = vld [vmem:[%s1223 + $0x54] sm:$0xf]
      %v2493 = vld [vmem:[%s1223 + $0x58] sm:$0xf]
      %v2494 = vld [vmem:[%s1223 + $0x5c] sm:$0x1]
      %v2496 = vshrl.u32 %v2471, 16
      %v2498 = vrot.slane %v2496, 4
      %v2499 = vshll.u32 %v2471, 16
      %v2501 = vrot.slane %v2499, 5
      %v2502 = vor.u32 %v2498, %v2501
      %v2503 = vrot.slane %v2502, 4
      %v2505 = vshll.u32 %v2472, 16
      %v2507 = vrot.slane %v2505, 5
      %v2508 = vsel %vm1356, %v2503, %v2507
      %v2509 = vshrl.u32 %v2472, 16
      %v2511 = vrot.slane %v2509, 4
      %v2512 = vor.u32 %v2511, %v2507
      %v2513 = vrot.slane %v2512, 4
      %v2515 = vshll.u32 %v2473, 16
      %v2517 = vrot.slane %v2515, 5
      %v2518 = vsel %vm1356, %v2513, %v2517
      %v2520 = vshrl.u32 %v2474, 16
      %v2522 = vrot.slane %v2520, 4
      %v2523 = vshll.u32 %v2474, 16
      %v2525 = vrot.slane %v2523, 5
      %v2526 = vor.u32 %v2522, %v2525
      %v2527 = vrot.slane %v2526, 4
      %v2529 = vshll.u32 %v2475, 16
      %v2531 = vrot.slane %v2529, 5
      %v2532 = vsel %vm1356, %v2527, %v2531
      %v2533 = vshrl.u32 %v2475, 16
      %v2535 = vrot.slane %v2533, 4
      %v2536 = vor.u32 %v2535, %v2531
      %v2537 = vrot.slane %v2536, 4
      %v2539 = vshll.u32 %v2476, 16
      %v2541 = vrot.slane %v2539, 5
      %v2542 = vsel %vm1356, %v2537, %v2541
      %v2544 = vshrl.u32 %v2477, 16
      %v2546 = vrot.slane %v2544, 4
      %v2547 = vshll.u32 %v2477, 16
      %v2549 = vrot.slane %v2547, 5
      %v2550 = vor.u32 %v2546, %v2549
      %v2551 = vrot.slane %v2550, 4
      %v2553 = vshll.u32 %v2478, 16
      %v2555 = vrot.slane %v2553, 5
      %v2556 = vsel %vm1356, %v2551, %v2555
      %v2557 = vshrl.u32 %v2478, 16
      %v2559 = vrot.slane %v2557, 4
      %v2560 = vor.u32 %v2559, %v2555
      %v2561 = vrot.slane %v2560, 4
      %v2563 = vshll.u32 %v2479, 16
      %v2565 = vrot.slane %v2563, 5
      %v2566 = vsel %vm1356, %v2561, %v2565
      %v2568 = vshrl.u32 %v2480, 16
      %v2570 = vrot.slane %v2568, 4
      %v2571 = vshll.u32 %v2480, 16
      %v2573 = vrot.slane %v2571, 5
      %v2574 = vor.u32 %v2570, %v2573
      %v2575 = vrot.slane %v2574, 4
      %v2577 = vshll.u32 %v2481, 16
      %v2579 = vrot.slane %v2577, 5
      %v2580 = vsel %vm1356, %v2575, %v2579
      %v2581 = vshrl.u32 %v2481, 16
      %v2583 = vrot.slane %v2581, 4
      %v2584 = vor.u32 %v2583, %v2579
      %v2585 = vrot.slane %v2584, 4
      %v2587 = vshll.u32 %v2482, 16
      %v2589 = vrot.slane %v2587, 5
      %v2590 = vsel %vm1356, %v2585, %v2589
      %v2592 = vshrl.u32 %v2483, 16
      %v2594 = vrot.slane %v2592, 4
      %v2595 = vshll.u32 %v2483, 16
      %v2597 = vrot.slane %v2595, 5
      %v2598 = vor.u32 %v2594, %v2597
      %v2599 = vrot.slane %v2598, 4
      %v2601 = vshll.u32 %v2484, 16
      %v2603 = vrot.slane %v2601, 5
      %v2604 = vsel %vm1356, %v2599, %v2603
      %v2605 = vshrl.u32 %v2484, 16
      %v2607 = vrot.slane %v2605, 4
      %v2608 = vor.u32 %v2607, %v2603
      %v2609 = vrot.slane %v2608, 4
      %v2611 = vshll.u32 %v2485, 16
      %v2613 = vrot.slane %v2611, 5
      %v2614 = vsel %vm1356, %v2609, %v2613
      %v2616 = vshrl.u32 %v2486, 16
      %v2618 = vrot.slane %v2616, 4
      %v2619 = vshll.u32 %v2486, 16
      %v2621 = vrot.slane %v2619, 5
      %v2622 = vor.u32 %v2618, %v2621
      %v2623 = vrot.slane %v2622, 4
      %v2625 = vshll.u32 %v2487, 16
      %v2627 = vrot.slane %v2625, 5
      %v2628 = vsel %vm1356, %v2623, %v2627
      %v2629 = vshrl.u32 %v2487, 16
      %v2631 = vrot.slane %v2629, 4
      %v2632 = vor.u32 %v2631, %v2627
      %v2633 = vrot.slane %v2632, 4
      %v2635 = vshll.u32 %v2488, 16
      %v2637 = vrot.slane %v2635, 5
      %v2638 = vsel %vm1356, %v2633, %v2637
      %v2640 = vshrl.u32 %v2489, 16
      %v2642 = vrot.slane %v2640, 4
      %v2643 = vshll.u32 %v2489, 16
      %v2645 = vrot.slane %v2643, 5
      %v2646 = vor.u32 %v2642, %v2645
      %v2647 = vrot.slane %v2646, 4
      %v2649 = vshll.u32 %v2490, 16
      %v2651 = vrot.slane %v2649, 5
      %v2652 = vsel %vm1356, %v2647, %v2651
      %v2653 = vshrl.u32 %v2490, 16
      %v2655 = vrot.slane %v2653, 4
      %v2656 = vor.u32 %v2655, %v2651
      %v2657 = vrot.slane %v2656, 4
      %v2659 = vshll.u32 %v2491, 16
      %v2661 = vrot.slane %v2659, 5
      %v2662 = vsel %vm1356, %v2657, %v2661
      %v2664 = vshrl.u32 %v2492, 16
      %v2666 = vrot.slane %v2664, 4
      %v2667 = vshll.u32 %v2492, 16
      %v2669 = vrot.slane %v2667, 5
      %v2670 = vor.u32 %v2666, %v2669
      %v2671 = vrot.slane %v2670, 4
      %v2673 = vshll.u32 %v2493, 16
      %v2675 = vrot.slane %v2673, 5
      %v2676 = vsel %vm1356, %v2671, %v2675
      %v2677 = vshrl.u32 %v2493, 16
      %v2679 = vrot.slane %v2677, 4
      %v2680 = vor.u32 %v2679, %v2675
      %v2681 = vrot.slane %v2680, 4
      %v2683 = vshll.u32 %v2494, 16
      %v2685 = vrot.slane %v2683, 5
      %v2686 = vsel %vm1356, %v2681, %v2685
      %s2687 = scalar_lea.vmem %s6, 256
      %v2688 = vld [vmem:[%s2687] sm:$0xf]
      %v2689 = vld [vmem:[%s2687 + $0x4] sm:$0xf]
      %v2690 = vld [vmem:[%s2687 + $0x8] sm:$0xf]
      %v2691 = vld [vmem:[%s2687 + $0xc] sm:$0xf]
      %v2692 = vld [vmem:[%s2687 + $0x10] sm:$0xf]
      %v2693 = vld [vmem:[%s2687 + $0x14] sm:$0xf]
      %v2694 = vld [vmem:[%s2687 + $0x18] sm:$0xf]
      %v2695 = vld [vmem:[%s2687 + $0x1c] sm:$0xf]
      %v2696 = vld [vmem:[%s2687 + $0x20] sm:$0xf]
      %v2697 = vld [vmem:[%s2687 + $0x24] sm:$0xf]
      %v2698 = vld [vmem:[%s2687 + $0x28] sm:$0xf]
      %v2699 = vld [vmem:[%s2687 + $0x2c] sm:$0xf]
      %v2700 = vld [vmem:[%s2687 + $0x30] sm:$0xf]
      %v2701 = vld [vmem:[%s2687 + $0x34] sm:$0xf]
      %v2702 = vld [vmem:[%s2687 + $0x38] sm:$0xf]
      %v2703 = vld [vmem:[%s2687 + $0x3c] sm:$0xf]
      %v2704 = vunpack.c.l.b16 %v2508
      %v2705 = vunpack.c.l.b16 %v2518
      %v2706 = vunpack.c.l.b16 %v2532
      %v2707 = vunpack.c.l.b16 %v2542
      %v2708 = vunpack.c.l.b16 %v2556
      %v2709 = vunpack.c.l.b16 %v2566
      %v2710 = vunpack.c.l.b16 %v2580
      %v2711 = vunpack.c.l.b16 %v2590
      %v2712 = vunpack.c.l.b16 %v2604
      %v2713 = vunpack.c.l.b16 %v2614
      %v2714 = vunpack.c.l.b16 %v2628
      %v2715 = vunpack.c.l.b16 %v2638
      %v2716 = vunpack.c.l.b16 %v2652
      %v2717 = vunpack.c.l.b16 %v2662
      %v2718 = vunpack.c.l.b16 %v2676
      %v2719 = vunpack.c.l.b16 %v2686
      %v2720 = vpack.c.b16 %v2705, %v2704
      %v2721 = vpack.c.b16 %v2707, %v2706
      %v2722 = vpack.c.b16 %v2709, %v2708
      %v2723 = vpack.c.b16 %v2711, %v2710
      %v2724 = vpack.c.b16 %v2713, %v2712
      %v2725 = vpack.c.b16 %v2715, %v2714
      %v2726 = vpack.c.b16 %v2717, %v2716
      %v2727 = vpack.c.b16 %v2719, %v2718
      %v2752 = vunpack.c.l.b16 %v2688
      %v2753 = vunpack.c.l.b16 %v2689
      %v2754 = vunpack.c.l.b16 %v2690
      %v2755 = vunpack.c.l.b16 %v2691
      %v2756 = vunpack.c.l.b16 %v2692
      %v2757 = vunpack.c.l.b16 %v2693
      %v2758 = vunpack.c.l.b16 %v2694
      %v2759 = vunpack.c.l.b16 %v2695
      %v2760 = vunpack.c.l.b16 %v2696
      %v2761 = vunpack.c.l.b16 %v2697
      %v2762 = vunpack.c.l.b16 %v2698
      %v2763 = vunpack.c.l.b16 %v2699
      %v2764 = vunpack.c.l.b16 %v2700
      %v2765 = vunpack.c.l.b16 %v2701
      %v2766 = vunpack.c.l.b16 %v2702
      %v2767 = vunpack.c.l.b16 %v2703
      %v2768 = vpack.c.b16 %v2753, %v2752
      %v2769 = vpack.c.b16 %v2755, %v2754
      %v2770 = vpack.c.b16 %v2757, %v2756
      %v2771 = vpack.c.b16 %v2759, %v2758
      %v2772 = vpack.c.b16 %v2761, %v2760
      %v2773 = vpack.c.b16 %v2763, %v2762
      %v2774 = vpack.c.b16 %v2765, %v2764
      %v2775 = vpack.c.b16 %v2767, %v2766
      %2784 = vmatprep.subr.bf16.mxu0 0
      %2785 = vmatpush1.bf16.msra.mxu0 %v2775
      %2786 = vmatprep.subr.bf16.mxu0 0
      %2787 = vmatpush1.bf16.msra.mxu0 %v2774
      %2788 = vmatprep.subr.bf16.mxu0 0
      %2789 = vmatpush1.bf16.msra.mxu0 %v2773
      %2790 = vmatprep.subr.bf16.mxu0 0
      %2791 = vmatpush1.bf16.msra.mxu0 %v2772
      %2792 = vmatprep.subr.bf16.mxu0 0
      %2793 = vmatpush1.bf16.msra.mxu0 %v2771
      %2794 = vmatprep.subr.bf16.mxu0 0
      %2795 = vmatpush1.bf16.msra.mxu0 %v2770
      %2796 = vmatprep.subr.bf16.mxu0 0
      %2797 = vmatpush1.bf16.msra.mxu0 %v2769
      %2798 = vmatprep.subr.bf16.mxu0 0
      %2799 = vmatpush1.bf16.msra.mxu0 %v2768
      %2800 = vmatprep.subr.bf16.mxu0 0
      %2801 = vmatpush2.bf16.msra.mxu0 0
      %2802 = vmatprep.subr.bf16.mxu0 0
      %2803 = vmatpush2.bf16.msra.mxu0 0
      %2804 = vmatprep.subr.bf16.mxu0 0
      %2805 = vmatpush2.bf16.msra.mxu0 0
      %2806 = vmatprep.subr.bf16.mxu0 0
      %2807 = vmatpush2.bf16.msra.mxu0 0
      %2808 = vmatprep.subr.bf16.mxu0 0
      %2809 = vmatpush2.bf16.msra.mxu0 0
      %2810 = vmatprep.subr.bf16.mxu0 0
      %2811 = vmatpush2.bf16.msra.mxu0 0
      %2812 = vmatprep.subr.bf16.mxu0 0
      %2813 = vmatpush2.bf16.msra.mxu0 0
      %2814 = vmatprep.subr.bf16.mxu0 0
      %2815 = vmatpush2.bf16.msra.mxu0 0
      %2816 = vmatprep.mubr.bf16.mxu0 0
      %2817 = vmatmul.mubr.bf16.gmra.mxu0 %v2720
      %v2818 = vpop.f32.mrf.mxu0
      %v2819 = vadd.f32 0.0, %v2818
      %v2820 = vpop.f32.mrf.mxu0
      %v2821 = vpop.f32.mrf.mxu0
      %v2822 = vadd.f32 0.0, %v2821
      %v2823 = vpop.f32.mrf.mxu0
      %2824 = vmatprep.mubr.bf16.mxu0 0
      %2825 = vmatmul.mubr.bf16.gmra.mxu0 %v2721
      %v2826 = vpop.f32.mrf.mxu0
      %v2827 = vadd.f32 0.0, %v2826
      %v2828 = vpop.f32.mrf.mxu0
      %v2829 = vpop.f32.mrf.mxu0
      %v2830 = vadd.f32 0.0, %v2829
      %v2831 = vpop.f32.mrf.mxu0
      %2832 = vmatprep.mubr.bf16.mxu0 0
      %2833 = vmatmul.mubr.bf16.gmra.mxu0 %v2722
      %v2834 = vpop.f32.mrf.mxu0
      %v2835 = vadd.f32 0.0, %v2834
      %v2836 = vpop.f32.mrf.mxu0
      %v2837 = vpop.f32.mrf.mxu0
      %v2838 = vadd.f32 0.0, %v2837
      %v2839 = vpop.f32.mrf.mxu0
      %2840 = vmatprep.mubr.bf16.mxu0 0
      %2841 = vmatmul.mubr.bf16.gmra.mxu0 %v2723
      %v2842 = vpop.f32.mrf.mxu0
      %v2843 = vadd.f32 0.0, %v2842
      %v2844 = vpop.f32.mrf.mxu0
      %v2845 = vpop.f32.mrf.mxu0
      %v2846 = vadd.f32 0.0, %v2845
      %v2847 = vpop.f32.mrf.mxu0
      %2848 = vmatprep.mubr.bf16.mxu0 0
      %2849 = vmatmul.mubr.bf16.gmra.mxu0 %v2724
      %v2850 = vpop.f32.mrf.mxu0
      %v2851 = vadd.f32 0.0, %v2850
      %v2852 = vpop.f32.mrf.mxu0
      %v2853 = vpop.f32.mrf.mxu0
      %v2854 = vadd.f32 0.0, %v2853
      %v2855 = vpop.f32.mrf.mxu0
      %2856 = vmatprep.mubr.bf16.mxu0 0
      %2857 = vmatmul.mubr.bf16.gmra.mxu0 %v2725
      %v2858 = vpop.f32.mrf.mxu0
      %v2859 = vadd.f32 0.0, %v2858
      %v2860 = vpop.f32.mrf.mxu0
      %v2861 = vpop.f32.mrf.mxu0
      %v2862 = vadd.f32 0.0, %v2861
      %v2863 = vpop.f32.mrf.mxu0
      %2864 = vmatprep.mubr.bf16.mxu0 0
      %2865 = vmatmul.mubr.bf16.gmra.mxu0 %v2726
      %v2866 = vpop.f32.mrf.mxu0
      %v2867 = vadd.f32 0.0, %v2866
      %v2868 = vpop.f32.mrf.mxu0
      %v2869 = vpop.f32.mrf.mxu0
      %v2870 = vadd.f32 0.0, %v2869
      %v2871 = vpop.f32.mrf.mxu0
      %2872 = vmatprep.mubr.bf16.mxu0 0
      %2873 = vmatmul.mubr.bf16.gmra.mxu0 %v2727
      %v2874 = vpop.f32.mrf.mxu0
      %v2875 = vadd.f32 0.0, %v2874
      %v2876 = vpop.f32.mrf.mxu0
      %v2877 = vpop.f32.mrf.mxu0
      %v2878 = vadd.f32 0.0, %v2877
      %v2879 = vpop.f32.mrf.mxu0
      %2880 = vdwg.mxu0
      %v2881 = vadd.f32 %v2455, %v2819
      %v2882 = vadd.f32 %v2456, %v2822
      %v2883 = vadd.f32 %v2457, %v2827
      %v2884 = vadd.f32 %v2458, %v2830
      %v2885 = vadd.f32 %v2459, %v2835
      %v2886 = vadd.f32 %v2460, %v2838
      %v2887 = vadd.f32 %v2461, %v2843
      %v2888 = vadd.f32 %v2462, %v2846
      %v2889 = vadd.f32 %v2463, %v2851
      %v2890 = vadd.f32 %v2464, %v2854
      %v2891 = vadd.f32 %v2465, %v2859
      %v2892 = vadd.f32 %v2466, %v2862
      %v2893 = vadd.f32 %v2467, %v2867
      %v2894 = vadd.f32 %v2468, %v2870
      %v2895 = vadd.f32 %v2469, %v2875
      %v2896 = vadd.f32 %v2470, %v2878
      %v2897 = vld [vmem:[%s1223] sm:$0xe]
      %v2898 = vld [vmem:[%s1223 + $0xc] sm:$0xe]
      %v2899 = vld [vmem:[%s1223 + $0x18] sm:$0xe]
      %v2900 = vld [vmem:[%s1223 + $0x24] sm:$0xe]
      %v2901 = vld [vmem:[%s1223 + $0x30] sm:$0xe]
      %v2902 = vld [vmem:[%s1223 + $0x3c] sm:$0xe]
      %v2903 = vld [vmem:[%s1223 + $0x48] sm:$0xe]
      %v2904 = vld [vmem:[%s1223 + $0x54] sm:$0xe]
      %v2929 = vrot.slane %v2897, 5
      %v2930 = vrot.slane %v2929, 4
      %v2931 = vrot.slane %v2472, 5
      %v2932 = vsel %vm1962, %v2930, %v2931
      %v2933 = vrot.slane %v2931, 4
      %v2934 = vrot.slane %v2473, 5
      %v2935 = vsel %vm1962, %v2933, %v2934
      %v2936 = vrot.slane %v2898, 5
      %v2937 = vrot.slane %v2936, 4
      %v2938 = vrot.slane %v2475, 5
      %v2939 = vsel %vm1962, %v2937, %v2938
      %v2940 = vrot.slane %v2938, 4
      %v2941 = vrot.slane %v2476, 5
      %v2942 = vsel %vm1962, %v2940, %v2941
      %v2943 = vrot.slane %v2899, 5
      %v2944 = vrot.slane %v2943, 4
      %v2945 = vrot.slane %v2478, 5
      %v2946 = vsel %vm1962, %v2944, %v2945
      %v2947 = vrot.slane %v2945, 4
      %v2948 = vrot.slane %v2479, 5
      %v2949 = vsel %vm1962, %v2947, %v2948
      %v2950 = vrot.slane %v2900, 5
      %v2951 = vrot.slane %v2950, 4
      %v2952 = vrot.slane %v2481, 5
      %v2953 = vsel %vm1962, %v2951, %v2952
      %v2954 = vrot.slane %v2952, 4
      %v2955 = vrot.slane %v2482, 5
      %v2956 = vsel %vm1962, %v2954, %v2955
      %v2957 = vrot.slane %v2901, 5
      %v2958 = vrot.slane %v2957, 4
      %v2959 = vrot.slane %v2484, 5
      %v2960 = vsel %vm1962, %v2958, %v2959
      %v2961 = vrot.slane %v2959, 4
      %v2962 = vrot.slane %v2485, 5
      %v2963 = vsel %vm1962, %v2961, %v2962
      %v2964 = vrot.slane %v2902, 5
      %v2965 = vrot.slane %v2964, 4
      %v2966 = vrot.slane %v2487, 5
      %v2967 = vsel %vm1962, %v2965, %v2966
      %v2968 = vrot.slane %v2966, 4
      %v2969 = vrot.slane %v2488, 5
      %v2970 = vsel %vm1962, %v2968, %v2969
      %v2971 = vrot.slane %v2903, 5
      %v2972 = vrot.slane %v2971, 4
      %v2973 = vrot.slane %v2490, 5
      %v2974 = vsel %vm1962, %v2972, %v2973
      %v2975 = vrot.slane %v2973, 4
      %v2976 = vrot.slane %v2491, 5
      %v2977 = vsel %vm1962, %v2975, %v2976
      %v2978 = vrot.slane %v2904, 5
      %v2979 = vrot.slane %v2978, 4
      %v2980 = vrot.slane %v2493, 5
      %v2981 = vsel %vm1962, %v2979, %v2980
      %v2982 = vrot.slane %v2980, 4
      %v2983 = vrot.slane %v2494, 5
      %v2984 = vsel %vm1962, %v2982, %v2983
      %s2985 = scalar_lea.vmem %s6, 320
      %v2986 = vld [vmem:[%s2985] sm:$0xf]
      %v2987 = vld [vmem:[%s2985 + $0x4] sm:$0xf]
      %v2988 = vld [vmem:[%s2985 + $0x8] sm:$0xf]
      %v2989 = vld [vmem:[%s2985 + $0xc] sm:$0xf]
      %v2990 = vld [vmem:[%s2985 + $0x10] sm:$0xf]
      %v2991 = vld [vmem:[%s2985 + $0x14] sm:$0xf]
      %v2992 = vld [vmem:[%s2985 + $0x18] sm:$0xf]
      %v2993 = vld [vmem:[%s2985 + $0x1c] sm:$0xf]
      %v2994 = vld [vmem:[%s2985 + $0x20] sm:$0xf]
      %v2995 = vld [vmem:[%s2985 + $0x24] sm:$0xf]
      %v2996 = vld [vmem:[%s2985 + $0x28] sm:$0xf]
      %v2997 = vld [vmem:[%s2985 + $0x2c] sm:$0xf]
      %v2998 = vld [vmem:[%s2985 + $0x30] sm:$0xf]
      %v2999 = vld [vmem:[%s2985 + $0x34] sm:$0xf]
      %v3000 = vld [vmem:[%s2985 + $0x38] sm:$0xf]
      %v3001 = vld [vmem:[%s2985 + $0x3c] sm:$0xf]
      %v3002 = vunpack.c.l.b16 %v2932
      %v3003 = vunpack.c.l.b16 %v2935
      %v3004 = vunpack.c.l.b16 %v2939
      %v3005 = vunpack.c.l.b16 %v2942
      %v3006 = vunpack.c.l.b16 %v2946
      %v3007 = vunpack.c.l.b16 %v2949
      %v3008 = vunpack.c.l.b16 %v2953
      %v3009 = vunpack.c.l.b16 %v2956
      %v3010 = vunpack.c.l.b16 %v2960
      %v3011 = vunpack.c.l.b16 %v2963
      %v3012 = vunpack.c.l.b16 %v2967
      %v3013 = vunpack.c.l.b16 %v2970
      %v3014 = vunpack.c.l.b16 %v2974
      %v3015 = vunpack.c.l.b16 %v2977
      %v3016 = vunpack.c.l.b16 %v2981
      %v3017 = vunpack.c.l.b16 %v2984
      %v3018 = vpack.c.b16 %v3003, %v3002
      %v3019 = vpack.c.b16 %v3005, %v3004
      %v3020 = vpack.c.b16 %v3007, %v3006
      %v3021 = vpack.c.b16 %v3009, %v3008
      %v3022 = vpack.c.b16 %v3011, %v3010
      %v3023 = vpack.c.b16 %v3013, %v3012
      %v3024 = vpack.c.b16 %v3015, %v3014
      %v3025 = vpack.c.b16 %v3017, %v3016
      %v3050 = vunpack.c.l.b16 %v2986
      %v3051 = vunpack.c.l.b16 %v2987
      %v3052 = vunpack.c.l.b16 %v2988
      %v3053 = vunpack.c.l.b16 %v2989
      %v3054 = vunpack.c.l.b16 %v2990
      %v3055 = vunpack.c.l.b16 %v2991
      %v3056 = vunpack.c.l.b16 %v2992
      %v3057 = vunpack.c.l.b16 %v2993
      %v3058 = vunpack.c.l.b16 %v2994
      %v3059 = vunpack.c.l.b16 %v2995
      %v3060 = vunpack.c.l.b16 %v2996
      %v3061 = vunpack.c.l.b16 %v2997
      %v3062 = vunpack.c.l.b16 %v2998
      %v3063 = vunpack.c.l.b16 %v2999
      %v3064 = vunpack.c.l.b16 %v3000
      %v3065 = vunpack.c.l.b16 %v3001
      %v3066 = vpack.c.b16 %v3051, %v3050
      %v3067 = vpack.c.b16 %v3053, %v3052
      %v3068 = vpack.c.b16 %v3055, %v3054
      %v3069 = vpack.c.b16 %v3057, %v3056
      %v3070 = vpack.c.b16 %v3059, %v3058
      %v3071 = vpack.c.b16 %v3061, %v3060
      %v3072 = vpack.c.b16 %v3063, %v3062
      %v3073 = vpack.c.b16 %v3065, %v3064
      %3082 = vmatprep.subr.bf16.mxu0 0
      %3083 = vmatpush1.bf16.msra.mxu0 %v3073
      %3084 = vmatprep.subr.bf16.mxu0 0
      %3085 = vmatpush1.bf16.msra.mxu0 %v3072
      %3086 = vmatprep.subr.bf16.mxu0 0
      %3087 = vmatpush1.bf16.msra.mxu0 %v3071
      %3088 = vmatprep.subr.bf16.mxu0 0
      %3089 = vmatpush1.bf16.msra.mxu0 %v3070
      %3090 = vmatprep.subr.bf16.mxu0 0
      %3091 = vmatpush1.bf16.msra.mxu0 %v3069
      %3092 = vmatprep.subr.bf16.mxu0 0
      %3093 = vmatpush1.bf16.msra.mxu0 %v3068
      %3094 = vmatprep.subr.bf16.mxu0 0
      %3095 = vmatpush1.bf16.msra.mxu0 %v3067
      %3096 = vmatprep.subr.bf16.mxu0 0
      %3097 = vmatpush1.bf16.msra.mxu0 %v3066
      %3098 = vmatprep.subr.bf16.mxu0 0
      %3099 = vmatpush2.bf16.msra.mxu0 0
      %3100 = vmatprep.subr.bf16.mxu0 0
      %3101 = vmatpush2.bf16.msra.mxu0 0
      %3102 = vmatprep.subr.bf16.mxu0 0
      %3103 = vmatpush2.bf16.msra.mxu0 0
      %3104 = vmatprep.subr.bf16.mxu0 0
      %3105 = vmatpush2.bf16.msra.mxu0 0
      %3106 = vmatprep.subr.bf16.mxu0 0
      %3107 = vmatpush2.bf16.msra.mxu0 0
      %3108 = vmatprep.subr.bf16.mxu0 0
      %3109 = vmatpush2.bf16.msra.mxu0 0
      %3110 = vmatprep.subr.bf16.mxu0 0
      %3111 = vmatpush2.bf16.msra.mxu0 0
      %3112 = vmatprep.subr.bf16.mxu0 0
      %3113 = vmatpush2.bf16.msra.mxu0 0
      %3114 = vmatprep.mubr.bf16.mxu0 0
      %3115 = vmatmul.mubr.bf16.gmra.mxu0 %v3018
      %v3116 = vpop.f32.mrf.mxu0
      %v3117 = vadd.f32 0.0, %v3116
      %v3118 = vpop.f32.mrf.mxu0
      %v3119 = vpop.f32.mrf.mxu0
      %v3120 = vadd.f32 0.0, %v3119
      %v3121 = vpop.f32.mrf.mxu0
      %3122 = vmatprep.mubr.bf16.mxu0 0
      %3123 = vmatmul.mubr.bf16.gmra.mxu0 %v3019
      %v3124 = vpop.f32.mrf.mxu0
      %v3125 = vadd.f32 0.0, %v3124
      %v3126 = vpop.f32.mrf.mxu0
      %v3127 = vpop.f32.mrf.mxu0
      %v3128 = vadd.f32 0.0, %v3127
      %v3129 = vpop.f32.mrf.mxu0
      %3130 = vmatprep.mubr.bf16.mxu0 0
      %3131 = vmatmul.mubr.bf16.gmra.mxu0 %v3020
      %v3132 = vpop.f32.mrf.mxu0
      %v3133 = vadd.f32 0.0, %v3132
      %v3134 = vpop.f32.mrf.mxu0
      %v3135 = vpop.f32.mrf.mxu0
      %v3136 = vadd.f32 0.0, %v3135
      %v3137 = vpop.f32.mrf.mxu0
      %3138 = vmatprep.mubr.bf16.mxu0 0
      %3139 = vmatmul.mubr.bf16.gmra.mxu0 %v3021
      %v3140 = vpop.f32.mrf.mxu0
      %v3141 = vadd.f32 0.0, %v3140
      %v3142 = vpop.f32.mrf.mxu0
      %v3143 = vpop.f32.mrf.mxu0
      %v3144 = vadd.f32 0.0, %v3143
      %v3145 = vpop.f32.mrf.mxu0
      %3146 = vmatprep.mubr.bf16.mxu0 0
      %3147 = vmatmul.mubr.bf16.gmra.mxu0 %v3022
      %v3148 = vpop.f32.mrf.mxu0
      %v3149 = vadd.f32 0.0, %v3148
      %v3150 = vpop.f32.mrf.mxu0
      %v3151 = vpop.f32.mrf.mxu0
      %v3152 = vadd.f32 0.0, %v3151
      %v3153 = vpop.f32.mrf.mxu0
      %3154 = vmatprep.mubr.bf16.mxu0 0
      %3155 = vmatmul.mubr.bf16.gmra.mxu0 %v3023
      %v3156 = vpop.f32.mrf.mxu0
      %v3157 = vadd.f32 0.0, %v3156
      %v3158 = vpop.f32.mrf.mxu0
      %v3159 = vpop.f32.mrf.mxu0
      %v3160 = vadd.f32 0.0, %v3159
      %v3161 = vpop.f32.mrf.mxu0
      %3162 = vmatprep.mubr.bf16.mxu0 0
      %3163 = vmatmul.mubr.bf16.gmra.mxu0 %v3024
      %v3164 = vpop.f32.mrf.mxu0
      %v3165 = vadd.f32 0.0, %v3164
      %v3166 = vpop.f32.mrf.mxu0
      %v3167 = vpop.f32.mrf.mxu0
      %v3168 = vadd.f32 0.0, %v3167
      %v3169 = vpop.f32.mrf.mxu0
      %3170 = vmatprep.mubr.bf16.mxu0 0
      %3171 = vmatmul.mubr.bf16.gmra.mxu0 %v3025
      %v3172 = vpop.f32.mrf.mxu0
      %v3173 = vadd.f32 0.0, %v3172
      %v3174 = vpop.f32.mrf.mxu0
      %v3175 = vpop.f32.mrf.mxu0
      %v3176 = vadd.f32 0.0, %v3175
      %v3177 = vpop.f32.mrf.mxu0
      %3178 = vdwg.mxu0
      %v3179 = vadd.f32 %v2881, %v3117
      %v3180 = vadd.f32 %v2882, %v3120
      %v3181 = vadd.f32 %v2883, %v3125
      %v3182 = vadd.f32 %v2884, %v3128
      %v3183 = vadd.f32 %v2885, %v3133
      %v3184 = vadd.f32 %v2886, %v3136
      %v3185 = vadd.f32 %v2887, %v3141
      %v3186 = vadd.f32 %v2888, %v3144
      %v3187 = vadd.f32 %v2889, %v3149
      %v3188 = vadd.f32 %v2890, %v3152
      %v3189 = vadd.f32 %v2891, %v3157
      %v3190 = vadd.f32 %v2892, %v3160
      %v3191 = vadd.f32 %v2893, %v3165
      %v3192 = vadd.f32 %v2894, %v3168
      %v3193 = vadd.f32 %v2895, %v3173
      %v3194 = vadd.f32 %v2896, %v3176
      %s3195 = scalar_lea.vmem [#allocation2], 24
      %v3196 = vld [vmem:[%s3195] sm:$0xf]
      %v3197 = vld [vmem:[%s3195 + $0x4] sm:$0xf]
      %v3198 = vld [vmem:[%s3195 + $0xc] sm:$0xf]
      %v3199 = vld [vmem:[%s3195 + $0x10] sm:$0xf]
      %v3200 = vld [vmem:[%s3195 + $0x18] sm:$0xf]
      %v3201 = vld [vmem:[%s3195 + $0x1c] sm:$0xf]
      %v3202 = vld [vmem:[%s3195 + $0x24] sm:$0xf]
      %v3203 = vld [vmem:[%s3195 + $0x28] sm:$0xf]
      %v3204 = vld [vmem:[%s3195 + $0x30] sm:$0xf]
      %v3205 = vld [vmem:[%s3195 + $0x34] sm:$0xf]
      %v3206 = vld [vmem:[%s3195 + $0x3c] sm:$0xf]
      %v3207 = vld [vmem:[%s3195 + $0x40] sm:$0xf]
      %v3208 = vld [vmem:[%s3195 + $0x48] sm:$0xf]
      %v3209 = vld [vmem:[%s3195 + $0x4c] sm:$0xf]
      %v3210 = vld [vmem:[%s3195 + $0x54] sm:$0xf]
      %v3211 = vld [vmem:[%s3195 + $0x58] sm:$0xf]
      %s3212 = scalar_lea.vmem %s6, 384
      %v3213 = vld [vmem:[%s3212] sm:$0xf]
      %v3214 = vld [vmem:[%s3212 + $0x4] sm:$0xf]
      %v3215 = vld [vmem:[%s3212 + $0x8] sm:$0xf]
      %v3216 = vld [vmem:[%s3212 + $0xc] sm:$0xf]
      %v3217 = vld [vmem:[%s3212 + $0x10] sm:$0xf]
      %v3218 = vld [vmem:[%s3212 + $0x14] sm:$0xf]
      %v3219 = vld [vmem:[%s3212 + $0x18] sm:$0xf]
      %v3220 = vld [vmem:[%s3212 + $0x1c] sm:$0xf]
      %v3221 = vld [vmem:[%s3212 + $0x20] sm:$0xf]
      %v3222 = vld [vmem:[%s3212 + $0x24] sm:$0xf]
      %v3223 = vld [vmem:[%s3212 + $0x28] sm:$0xf]
      %v3224 = vld [vmem:[%s3212 + $0x2c] sm:$0xf]
      %v3225 = vld [vmem:[%s3212 + $0x30] sm:$0xf]
      %v3226 = vld [vmem:[%s3212 + $0x34] sm:$0xf]
      %v3227 = vld [vmem:[%s3212 + $0x38] sm:$0xf]
      %v3228 = vld [vmem:[%s3212 + $0x3c] sm:$0xf]
      %v3245 = vunpack.c.l.b16 %v3196
      %v3246 = vunpack.c.l.b16 %v3197
      %v3247 = vunpack.c.l.b16 %v3198
      %v3248 = vunpack.c.l.b16 %v3199
      %v3249 = vunpack.c.l.b16 %v3200
      %v3250 = vunpack.c.l.b16 %v3201
      %v3251 = vunpack.c.l.b16 %v3202
      %v3252 = vunpack.c.l.b16 %v3203
      %v3253 = vunpack.c.l.b16 %v3204
      %v3254 = vunpack.c.l.b16 %v3205
      %v3255 = vunpack.c.l.b16 %v3206
      %v3256 = vunpack.c.l.b16 %v3207
      %v3257 = vunpack.c.l.b16 %v3208
      %v3258 = vunpack.c.l.b16 %v3209
      %v3259 = vunpack.c.l.b16 %v3210
      %v3260 = vunpack.c.l.b16 %v3211
      %v3261 = vpack.c.b16 %v3246, %v3245
      %v3262 = vpack.c.b16 %v3248, %v3247
      %v3263 = vpack.c.b16 %v3250, %v3249
      %v3264 = vpack.c.b16 %v3252, %v3251
      %v3265 = vpack.c.b16 %v3254, %v3253
      %v3266 = vpack.c.b16 %v3256, %v3255
      %v3267 = vpack.c.b16 %v3258, %v3257
      %v3268 = vpack.c.b16 %v3260, %v3259
      %v3293 = vunpack.c.l.b16 %v3213
      %v3294 = vunpack.c.l.b16 %v3214
      %v3295 = vunpack.c.l.b16 %v3215
      %v3296 = vunpack.c.l.b16 %v3216
      %v3297 = vunpack.c.l.b16 %v3217
      %v3298 = vunpack.c.l.b16 %v3218
      %v3299 = vunpack.c.l.b16 %v3219
      %v3300 = vunpack.c.l.b16 %v3220
      %v3301 = vunpack.c.l.b16 %v3221
      %v3302 = vunpack.c.l.b16 %v3222
      %v3303 = vunpack.c.l.b16 %v3223
      %v3304 = vunpack.c.l.b16 %v3224
      %v3305 = vunpack.c.l.b16 %v3225
      %v3306 = vunpack.c.l.b16 %v3226
      %v3307 = vunpack.c.l.b16 %v3227
      %v3308 = vunpack.c.l.b16 %v3228
      %v3309 = vpack.c.b16 %v3294, %v3293
      %v3310 = vpack.c.b16 %v3296, %v3295
      %v3311 = vpack.c.b16 %v3298, %v3297
      %v3312 = vpack.c.b16 %v3300, %v3299
      %v3313 = vpack.c.b16 %v3302, %v3301
      %v3314 = vpack.c.b16 %v3304, %v3303
      %v3315 = vpack.c.b16 %v3306, %v3305
      %v3316 = vpack.c.b16 %v3308, %v3307
      %3325 = vmatprep.subr.bf16.mxu0 0
      %3326 = vmatpush1.bf16.msra.mxu0 %v3316
      %3327 = vmatprep.subr.bf16.mxu0 0
      %3328 = vmatpush1.bf16.msra.mxu0 %v3315
      %3329 = vmatprep.subr.bf16.mxu0 0
      %3330 = vmatpush1.bf16.msra.mxu0 %v3314
      %3331 = vmatprep.subr.bf16.mxu0 0
      %3332 = vmatpush1.bf16.msra.mxu0 %v3313
      %3333 = vmatprep.subr.bf16.mxu0 0
      %3334 = vmatpush1.bf16.msra.mxu0 %v3312
      %3335 = vmatprep.subr.bf16.mxu0 0
      %3336 = vmatpush1.bf16.msra.mxu0 %v3311
      %3337 = vmatprep.subr.bf16.mxu0 0
      %3338 = vmatpush1.bf16.msra.mxu0 %v3310
      %3339 = vmatprep.subr.bf16.mxu0 0
      %3340 = vmatpush1.bf16.msra.mxu0 %v3309
      %3341 = vmatprep.subr.bf16.mxu0 0
      %3342 = vmatpush2.bf16.msra.mxu0 0
      %3343 = vmatprep.subr.bf16.mxu0 0
      %3344 = vmatpush2.bf16.msra.mxu0 0
      %3345 = vmatprep.subr.bf16.mxu0 0
      %3346 = vmatpush2.bf16.msra.mxu0 0
      %3347 = vmatprep.subr.bf16.mxu0 0
      %3348 = vmatpush2.bf16.msra.mxu0 0
      %3349 = vmatprep.subr.bf16.mxu0 0
      %3350 = vmatpush2.bf16.msra.mxu0 0
      %3351 = vmatprep.subr.bf16.mxu0 0
      %3352 = vmatpush2.bf16.msra.mxu0 0
      %3353 = vmatprep.subr.bf16.mxu0 0
      %3354 = vmatpush2.bf16.msra.mxu0 0
      %3355 = vmatprep.subr.bf16.mxu0 0
      %3356 = vmatpush2.bf16.msra.mxu0 0
      %3357 = vmatprep.mubr.bf16.mxu0 0
      %3358 = vmatmul.mubr.bf16.gmra.mxu0 %v3261
      %v3359 = vpop.f32.mrf.mxu0
      %v3360 = vadd.f32 0.0, %v3359
      %v3361 = vpop.f32.mrf.mxu0
      %v3362 = vpop.f32.mrf.mxu0
      %v3363 = vadd.f32 0.0, %v3362
      %v3364 = vpop.f32.mrf.mxu0
      %3365 = vmatprep.mubr.bf16.mxu0 0
      %3366 = vmatmul.mubr.bf16.gmra.mxu0 %v3262
      %v3367 = vpop.f32.mrf.mxu0
      %v3368 = vadd.f32 0.0, %v3367
      %v3369 = vpop.f32.mrf.mxu0
      %v3370 = vpop.f32.mrf.mxu0
      %v3371 = vadd.f32 0.0, %v3370
      %v3372 = vpop.f32.mrf.mxu0
      %3373 = vmatprep.mubr.bf16.mxu0 0
      %3374 = vmatmul.mubr.bf16.gmra.mxu0 %v3263
      %v3375 = vpop.f32.mrf.mxu0
      %v3376 = vadd.f32 0.0, %v3375
      %v3377 = vpop.f32.mrf.mxu0
      %v3378 = vpop.f32.mrf.mxu0
      %v3379 = vadd.f32 0.0, %v3378
      %v3380 = vpop.f32.mrf.mxu0
      %3381 = vmatprep.mubr.bf16.mxu0 0
      %3382 = vmatmul.mubr.bf16.gmra.mxu0 %v3264
      %v3383 = vpop.f32.mrf.mxu0
      %v3384 = vadd.f32 0.0, %v3383
      %v3385 = vpop.f32.mrf.mxu0
      %v3386 = vpop.f32.mrf.mxu0
      %v3387 = vadd.f32 0.0, %v3386
      %v3388 = vpop.f32.mrf.mxu0
      %3389 = vmatprep.mubr.bf16.mxu0 0
      %3390 = vmatmul.mubr.bf16.gmra.mxu0 %v3265
      %v3391 = vpop.f32.mrf.mxu0
      %v3392 = vadd.f32 0.0, %v3391
      %v3393 = vpop.f32.mrf.mxu0
      %v3394 = vpop.f32.mrf.mxu0
      %v3395 = vadd.f32 0.0, %v3394
      %v3396 = vpop.f32.mrf.mxu0
      %3397 = vmatprep.mubr.bf16.mxu0 0
      %3398 = vmatmul.mubr.bf16.gmra.mxu0 %v3266
      %v3399 = vpop.f32.mrf.mxu0
      %v3400 = vadd.f32 0.0, %v3399
      %v3401 = vpop.f32.mrf.mxu0
      %v3402 = vpop.f32.mrf.mxu0
      %v3403 = vadd.f32 0.0, %v3402
      %v3404 = vpop.f32.mrf.mxu0
      %3405 = vmatprep.mubr.bf16.mxu0 0
      %3406 = vmatmul.mubr.bf16.gmra.mxu0 %v3267
      %v3407 = vpop.f32.mrf.mxu0
      %v3408 = vadd.f32 0.0, %v3407
      %v3409 = vpop.f32.mrf.mxu0
      %v3410 = vpop.f32.mrf.mxu0
      %v3411 = vadd.f32 0.0, %v3410
      %v3412 = vpop.f32.mrf.mxu0
      %3413 = vmatprep.mubr.bf16.mxu0 0
      %3414 = vmatmul.mubr.bf16.gmra.mxu0 %v3268
      %v3415 = vpop.f32.mrf.mxu0
      %v3416 = vadd.f32 0.0, %v3415
      %v3417 = vpop.f32.mrf.mxu0
      %v3418 = vpop.f32.mrf.mxu0
      %v3419 = vadd.f32 0.0, %v3418
      %v3420 = vpop.f32.mrf.mxu0
      %3421 = vdwg.mxu0
      %v3422 = vadd.f32 %v3179, %v3360
      %v3423 = vadd.f32 %v3180, %v3363
      %v3424 = vadd.f32 %v3181, %v3368
      %v3425 = vadd.f32 %v3182, %v3371
      %v3426 = vadd.f32 %v3183, %v3376
      %v3427 = vadd.f32 %v3184, %v3379
      %v3428 = vadd.f32 %v3185, %v3384
      %v3429 = vadd.f32 %v3186, %v3387
      %v3430 = vadd.f32 %v3187, %v3392
      %v3431 = vadd.f32 %v3188, %v3395
      %v3432 = vadd.f32 %v3189, %v3400
      %v3433 = vadd.f32 %v3190, %v3403
      %v3434 = vadd.f32 %v3191, %v3408
      %v3435 = vadd.f32 %v3192, %v3411
      %v3436 = vadd.f32 %v3193, %v3416
      %v3437 = vadd.f32 %v3194, %v3419
      %v3438 = vld [vmem:[%s3195] sm:$0xf]
      %v3439 = vld [vmem:[%s3195 + $0x4] sm:$0xf]
      %v3440 = vld [vmem:[%s3195 + $0x8] sm:$0x1]
      %v3441 = vld [vmem:[%s3195 + $0xc] sm:$0xf]
      %v3442 = vld [vmem:[%s3195 + $0x10] sm:$0xf]
      %v3443 = vld [vmem:[%s3195 + $0x14] sm:$0x1]
      %v3444 = vld [vmem:[%s3195 + $0x18] sm:$0xf]
      %v3445 = vld [vmem:[%s3195 + $0x1c] sm:$0xf]
      %v3446 = vld [vmem:[%s3195 + $0x20] sm:$0x1]
      %v3447 = vld [vmem:[%s3195 + $0x24] sm:$0xf]
      %v3448 = vld [vmem:[%s3195 + $0x28] sm:$0xf]
      %v3449 = vld [vmem:[%s3195 + $0x2c] sm:$0x1]
      %v3450 = vld [vmem:[%s3195 + $0x30] sm:$0xf]
      %v3451 = vld [vmem:[%s3195 + $0x34] sm:$0xf]
      %v3452 = vld [vmem:[%s3195 + $0x38] sm:$0x1]
      %v3453 = vld [vmem:[%s3195 + $0x3c] sm:$0xf]
      %v3454 = vld [vmem:[%s3195 + $0x40] sm:$0xf]
      %v3455 = vld [vmem:[%s3195 + $0x44] sm:$0x1]
      %v3456 = vld [vmem:[%s3195 + $0x48] sm:$0xf]
      %v3457 = vld [vmem:[%s3195 + $0x4c] sm:$0xf]
      %v3458 = vld [vmem:[%s3195 + $0x50] sm:$0x1]
      %v3459 = vld [vmem:[%s3195 + $0x54] sm:$0xf]
      %v3460 = vld [vmem:[%s3195 + $0x58] sm:$0xf]
      %v3461 = vld [vmem:[%s3195 + $0x5c] sm:$0x1]
      %v3463 = vshrl.u32 %v3438, 16
      %v3465 = vrot.slane %v3463, 4
      %v3466 = vshll.u32 %v3438, 16
      %v3468 = vrot.slane %v3466, 5
      %v3469 = vor.u32 %v3465, %v3468
      %v3470 = vrot.slane %v3469, 4
      %v3472 = vshll.u32 %v3439, 16
      %v3474 = vrot.slane %v3472, 5
      %v3475 = vsel %vm1356, %v3470, %v3474
      %v3476 = vshrl.u32 %v3439, 16
      %v3478 = vrot.slane %v3476, 4
      %v3479 = vor.u32 %v3478, %v3474
      %v3480 = vrot.slane %v3479, 4
      %v3482 = vshll.u32 %v3440, 16
      %v3484 = vrot.slane %v3482, 5
      %v3485 = vsel %vm1356, %v3480, %v3484
      %v3487 = vshrl.u32 %v3441, 16
      %v3489 = vrot.slane %v3487, 4
      %v3490 = vshll.u32 %v3441, 16
      %v3492 = vrot.slane %v3490, 5
      %v3493 = vor.u32 %v3489, %v3492
      %v3494 = vrot.slane %v3493, 4
      %v3496 = vshll.u32 %v3442, 16
      %v3498 = vrot.slane %v3496, 5
      %v3499 = vsel %vm1356, %v3494, %v3498
      %v3500 = vshrl.u32 %v3442, 16
      %v3502 = vrot.slane %v3500, 4
      %v3503 = vor.u32 %v3502, %v3498
      %v3504 = vrot.slane %v3503, 4
      %v3506 = vshll.u32 %v3443, 16
      %v3508 = vrot.slane %v3506, 5
      %v3509 = vsel %vm1356, %v3504, %v3508
      %v3511 = vshrl.u32 %v3444, 16
      %v3513 = vrot.slane %v3511, 4
      %v3514 = vshll.u32 %v3444, 16
      %v3516 = vrot.slane %v3514, 5
      %v3517 = vor.u32 %v3513, %v3516
      %v3518 = vrot.slane %v3517, 4
      %v3520 = vshll.u32 %v3445, 16
      %v3522 = vrot.slane %v3520, 5
      %v3523 = vsel %vm1356, %v3518, %v3522
      %v3524 = vshrl.u32 %v3445, 16
      %v3526 = vrot.slane %v3524, 4
      %v3527 = vor.u32 %v3526, %v3522
      %v3528 = vrot.slane %v3527, 4
      %v3530 = vshll.u32 %v3446, 16
      %v3532 = vrot.slane %v3530, 5
      %v3533 = vsel %vm1356, %v3528, %v3532
      %v3535 = vshrl.u32 %v3447, 16
      %v3537 = vrot.slane %v3535, 4
      %v3538 = vshll.u32 %v3447, 16
      %v3540 = vrot.slane %v3538, 5
      %v3541 = vor.u32 %v3537, %v3540
      %v3542 = vrot.slane %v3541, 4
      %v3544 = vshll.u32 %v3448, 16
      %v3546 = vrot.slane %v3544, 5
      %v3547 = vsel %vm1356, %v3542, %v3546
      %v3548 = vshrl.u32 %v3448, 16
      %v3550 = vrot.slane %v3548, 4
      %v3551 = vor.u32 %v3550, %v3546
      %v3552 = vrot.slane %v3551, 4
      %v3554 = vshll.u32 %v3449, 16
      %v3556 = vrot.slane %v3554, 5
      %v3557 = vsel %vm1356, %v3552, %v3556
      %v3559 = vshrl.u32 %v3450, 16
      %v3561 = vrot.slane %v3559, 4
      %v3562 = vshll.u32 %v3450, 16
      %v3564 = vrot.slane %v3562, 5
      %v3565 = vor.u32 %v3561, %v3564
      %v3566 = vrot.slane %v3565, 4
      %v3568 = vshll.u32 %v3451, 16
      %v3570 = vrot.slane %v3568, 5
      %v3571 = vsel %vm1356, %v3566, %v3570
      %v3572 = vshrl.u32 %v3451, 16
      %v3574 = vrot.slane %v3572, 4
      %v3575 = vor.u32 %v3574, %v3570
      %v3576 = vrot.slane %v3575, 4
      %v3578 = vshll.u32 %v3452, 16
      %v3580 = vrot.slane %v3578, 5
      %v3581 = vsel %vm1356, %v3576, %v3580
      %v3583 = vshrl.u32 %v3453, 16
      %v3585 = vrot.slane %v3583, 4
      %v3586 = vshll.u32 %v3453, 16
      %v3588 = vrot.slane %v3586, 5
      %v3589 = vor.u32 %v3585, %v3588
      %v3590 = vrot.slane %v3589, 4
      %v3592 = vshll.u32 %v3454, 16
      %v3594 = vrot.slane %v3592, 5
      %v3595 = vsel %vm1356, %v3590, %v3594
      %v3596 = vshrl.u32 %v3454, 16
      %v3598 = vrot.slane %v3596, 4
      %v3599 = vor.u32 %v3598, %v3594
      %v3600 = vrot.slane %v3599, 4
      %v3602 = vshll.u32 %v3455, 16
      %v3604 = vrot.slane %v3602, 5
      %v3605 = vsel %vm1356, %v3600, %v3604
      %v3607 = vshrl.u32 %v3456, 16
      %v3609 = vrot.slane %v3607, 4
      %v3610 = vshll.u32 %v3456, 16
      %v3612 = vrot.slane %v3610, 5
      %v3613 = vor.u32 %v3609, %v3612
      %v3614 = vrot.slane %v3613, 4
      %v3616 = vshll.u32 %v3457, 16
      %v3618 = vrot.slane %v3616, 5
      %v3619 = vsel %vm1356, %v3614, %v3618
      %v3620 = vshrl.u32 %v3457, 16
      %v3622 = vrot.slane %v3620, 4
      %v3623 = vor.u32 %v3622, %v3618
      %v3624 = vrot.slane %v3623, 4
      %v3626 = vshll.u32 %v3458, 16
      %v3628 = vrot.slane %v3626, 5
      %v3629 = vsel %vm1356, %v3624, %v3628
      %v3631 = vshrl.u32 %v3459, 16
      %v3633 = vrot.slane %v3631, 4
      %v3634 = vshll.u32 %v3459, 16
      %v3636 = vrot.slane %v3634, 5
      %v3637 = vor.u32 %v3633, %v3636
      %v3638 = vrot.slane %v3637, 4
      %v3640 = vshll.u32 %v3460, 16
      %v3642 = vrot.slane %v3640, 5
      %v3643 = vsel %vm1356, %v3638, %v3642
      %v3644 = vshrl.u32 %v3460, 16
      %v3646 = vrot.slane %v3644, 4
      %v3647 = vor.u32 %v3646, %v3642
      %v3648 = vrot.slane %v3647, 4
      %v3650 = vshll.u32 %v3461, 16
      %v3652 = vrot.slane %v3650, 5
      %v3653 = vsel %vm1356, %v3648, %v3652
      %s3654 = scalar_lea.vmem %s6, 448
      %v3655 = vld [vmem:[%s3654] sm:$0xf]
      %v3656 = vld [vmem:[%s3654 + $0x4] sm:$0xf]
      %v3657 = vld [vmem:[%s3654 + $0x8] sm:$0xf]
      %v3658 = vld [vmem:[%s3654 + $0xc] sm:$0xf]
      %v3659 = vld [vmem:[%s3654 + $0x10] sm:$0xf]
      %v3660 = vld [vmem:[%s3654 + $0x14] sm:$0xf]
      %v3661 = vld [vmem:[%s3654 + $0x18] sm:$0xf]
      %v3662 = vld [vmem:[%s3654 + $0x1c] sm:$0xf]
      %v3663 = vld [vmem:[%s3654 + $0x20] sm:$0xf]
      %v3664 = vld [vmem:[%s3654 + $0x24] sm:$0xf]
      %v3665 = vld [vmem:[%s3654 + $0x28] sm:$0xf]
      %v3666 = vld [vmem:[%s3654 + $0x2c] sm:$0xf]
      %v3667 = vld [vmem:[%s3654 + $0x30] sm:$0xf]
      %v3668 = vld [vmem:[%s3654 + $0x34] sm:$0xf]
      %v3669 = vld [vmem:[%s3654 + $0x38] sm:$0xf]
      %v3670 = vld [vmem:[%s3654 + $0x3c] sm:$0xf]
      %v3671 = vunpack.c.l.b16 %v3475
      %v3672 = vunpack.c.l.b16 %v3485
      %v3673 = vunpack.c.l.b16 %v3499
      %v3674 = vunpack.c.l.b16 %v3509
      %v3675 = vunpack.c.l.b16 %v3523
      %v3676 = vunpack.c.l.b16 %v3533
      %v3677 = vunpack.c.l.b16 %v3547
      %v3678 = vunpack.c.l.b16 %v3557
      %v3679 = vunpack.c.l.b16 %v3571
      %v3680 = vunpack.c.l.b16 %v3581
      %v3681 = vunpack.c.l.b16 %v3595
      %v3682 = vunpack.c.l.b16 %v3605
      %v3683 = vunpack.c.l.b16 %v3619
      %v3684 = vunpack.c.l.b16 %v3629
      %v3685 = vunpack.c.l.b16 %v3643
      %v3686 = vunpack.c.l.b16 %v3653
      %v3687 = vpack.c.b16 %v3672, %v3671
      %v3688 = vpack.c.b16 %v3674, %v3673
      %v3689 = vpack.c.b16 %v3676, %v3675
      %v3690 = vpack.c.b16 %v3678, %v3677
      %v3691 = vpack.c.b16 %v3680, %v3679
      %v3692 = vpack.c.b16 %v3682, %v3681
      %v3693 = vpack.c.b16 %v3684, %v3683
      %v3694 = vpack.c.b16 %v3686, %v3685
      %v3719 = vunpack.c.l.b16 %v3655
      %v3720 = vunpack.c.l.b16 %v3656
      %v3721 = vunpack.c.l.b16 %v3657
      %v3722 = vunpack.c.l.b16 %v3658
      %v3723 = vunpack.c.l.b16 %v3659
      %v3724 = vunpack.c.l.b16 %v3660
      %v3725 = vunpack.c.l.b16 %v3661
      %v3726 = vunpack.c.l.b16 %v3662
      %v3727 = vunpack.c.l.b16 %v3663
      %v3728 = vunpack.c.l.b16 %v3664
      %v3729 = vunpack.c.l.b16 %v3665
      %v3730 = vunpack.c.l.b16 %v3666
      %v3731 = vunpack.c.l.b16 %v3667
      %v3732 = vunpack.c.l.b16 %v3668
      %v3733 = vunpack.c.l.b16 %v3669
      %v3734 = vunpack.c.l.b16 %v3670
      %v3735 = vpack.c.b16 %v3720, %v3719
      %v3736 = vpack.c.b16 %v3722, %v3721
      %v3737 = vpack.c.b16 %v3724, %v3723
      %v3738 = vpack.c.b16 %v3726, %v3725
      %v3739 = vpack.c.b16 %v3728, %v3727
      %v3740 = vpack.c.b16 %v3730, %v3729
      %v3741 = vpack.c.b16 %v3732, %v3731
      %v3742 = vpack.c.b16 %v3734, %v3733
      %3751 = vmatprep.subr.bf16.mxu0 0
      %3752 = vmatpush1.bf16.msra.mxu0 %v3742
      %3753 = vmatprep.subr.bf16.mxu0 0
      %3754 = vmatpush1.bf16.msra.mxu0 %v3741
      %3755 = vmatprep.subr.bf16.mxu0 0
      %3756 = vmatpush1.bf16.msra.mxu0 %v3740
      %3757 = vmatprep.subr.bf16.mxu0 0
      %3758 = vmatpush1.bf16.msra.mxu0 %v3739
      %3759 = vmatprep.subr.bf16.mxu0 0
      %3760 = vmatpush1.bf16.msra.mxu0 %v3738
      %3761 = vmatprep.subr.bf16.mxu0 0
      %3762 = vmatpush1.bf16.msra.mxu0 %v3737
      %3763 = vmatprep.subr.bf16.mxu0 0
      %3764 = vmatpush1.bf16.msra.mxu0 %v3736
      %3765 = vmatprep.subr.bf16.mxu0 0
      %3766 = vmatpush1.bf16.msra.mxu0 %v3735
      %3767 = vmatprep.subr.bf16.mxu0 0
      %3768 = vmatpush2.bf16.msra.mxu0 0
      %3769 = vmatprep.subr.bf16.mxu0 0
      %3770 = vmatpush2.bf16.msra.mxu0 0
      %3771 = vmatprep.subr.bf16.mxu0 0
      %3772 = vmatpush2.bf16.msra.mxu0 0
      %3773 = vmatprep.subr.bf16.mxu0 0
      %3774 = vmatpush2.bf16.msra.mxu0 0
      %3775 = vmatprep.subr.bf16.mxu0 0
      %3776 = vmatpush2.bf16.msra.mxu0 0
      %3777 = vmatprep.subr.bf16.mxu0 0
      %3778 = vmatpush2.bf16.msra.mxu0 0
      %3779 = vmatprep.subr.bf16.mxu0 0
      %3780 = vmatpush2.bf16.msra.mxu0 0
      %3781 = vmatprep.subr.bf16.mxu0 0
      %3782 = vmatpush2.bf16.msra.mxu0 0
      %3783 = vmatprep.mubr.bf16.mxu0 0
      %3784 = vmatmul.mubr.bf16.gmra.mxu0 %v3687
      %v3785 = vpop.f32.mrf.mxu0
      %v3786 = vadd.f32 0.0, %v3785
      %v3787 = vpop.f32.mrf.mxu0
      %v3788 = vpop.f32.mrf.mxu0
      %v3789 = vadd.f32 0.0, %v3788
      %v3790 = vpop.f32.mrf.mxu0
      %3791 = vmatprep.mubr.bf16.mxu0 0
      %3792 = vmatmul.mubr.bf16.gmra.mxu0 %v3688
      %v3793 = vpop.f32.mrf.mxu0
      %v3794 = vadd.f32 0.0, %v3793
      %v3795 = vpop.f32.mrf.mxu0
      %v3796 = vpop.f32.mrf.mxu0
      %v3797 = vadd.f32 0.0, %v3796
      %v3798 = vpop.f32.mrf.mxu0
      %3799 = vmatprep.mubr.bf16.mxu0 0
      %3800 = vmatmul.mubr.bf16.gmra.mxu0 %v3689
      %v3801 = vpop.f32.mrf.mxu0
      %v3802 = vadd.f32 0.0, %v3801
      %v3803 = vpop.f32.mrf.mxu0
      %v3804 = vpop.f32.mrf.mxu0
      %v3805 = vadd.f32 0.0, %v3804
      %v3806 = vpop.f32.mrf.mxu0
      %3807 = vmatprep.mubr.bf16.mxu0 0
      %3808 = vmatmul.mubr.bf16.gmra.mxu0 %v3690
      %v3809 = vpop.f32.mrf.mxu0
      %v3810 = vadd.f32 0.0, %v3809
      %v3811 = vpop.f32.mrf.mxu0
      %v3812 = vpop.f32.mrf.mxu0
      %v3813 = vadd.f32 0.0, %v3812
      %v3814 = vpop.f32.mrf.mxu0
      %3815 = vmatprep.mubr.bf16.mxu0 0
      %3816 = vmatmul.mubr.bf16.gmra.mxu0 %v3691
      %v3817 = vpop.f32.mrf.mxu0
      %v3818 = vadd.f32 0.0, %v3817
      %v3819 = vpop.f32.mrf.mxu0
      %v3820 = vpop.f32.mrf.mxu0
      %v3821 = vadd.f32 0.0, %v3820
      %v3822 = vpop.f32.mrf.mxu0
      %3823 = vmatprep.mubr.bf16.mxu0 0
      %3824 = vmatmul.mubr.bf16.gmra.mxu0 %v3692
      %v3825 = vpop.f32.mrf.mxu0
      %v3826 = vadd.f32 0.0, %v3825
      %v3827 = vpop.f32.mrf.mxu0
      %v3828 = vpop.f32.mrf.mxu0
      %v3829 = vadd.f32 0.0, %v3828
      %v3830 = vpop.f32.mrf.mxu0
      %3831 = vmatprep.mubr.bf16.mxu0 0
      %3832 = vmatmul.mubr.bf16.gmra.mxu0 %v3693
      %v3833 = vpop.f32.mrf.mxu0
      %v3834 = vadd.f32 0.0, %v3833
      %v3835 = vpop.f32.mrf.mxu0
      %v3836 = vpop.f32.mrf.mxu0
      %v3837 = vadd.f32 0.0, %v3836
      %v3838 = vpop.f32.mrf.mxu0
      %3839 = vmatprep.mubr.bf16.mxu0 0
      %3840 = vmatmul.mubr.bf16.gmra.mxu0 %v3694
      %v3841 = vpop.f32.mrf.mxu0
      %v3842 = vadd.f32 0.0, %v3841
      %v3843 = vpop.f32.mrf.mxu0
      %v3844 = vpop.f32.mrf.mxu0
      %v3845 = vadd.f32 0.0, %v3844
      %v3846 = vpop.f32.mrf.mxu0
      %3847 = vdwg.mxu0
      %v3848 = vadd.f32 %v3422, %v3786
      %v3849 = vadd.f32 %v3423, %v3789
      %v3850 = vadd.f32 %v3424, %v3794
      %v3851 = vadd.f32 %v3425, %v3797
      %v3852 = vadd.f32 %v3426, %v3802
      %v3853 = vadd.f32 %v3427, %v3805
      %v3854 = vadd.f32 %v3428, %v3810
      %v3855 = vadd.f32 %v3429, %v3813
      %v3856 = vadd.f32 %v3430, %v3818
      %v3857 = vadd.f32 %v3431, %v3821
      %v3858 = vadd.f32 %v3432, %v3826
      %v3859 = vadd.f32 %v3433, %v3829
      %v3860 = vadd.f32 %v3434, %v3834
      %v3861 = vadd.f32 %v3435, %v3837
      %v3862 = vadd.f32 %v3436, %v3842
      %v3863 = vadd.f32 %v3437, %v3845
      %v3864 = vld [vmem:[%s3195] sm:$0xe]
      %v3865 = vld [vmem:[%s3195 + $0xc] sm:$0xe]
      %v3866 = vld [vmem:[%s3195 + $0x18] sm:$0xe]
      %v3867 = vld [vmem:[%s3195 + $0x24] sm:$0xe]
      %v3868 = vld [vmem:[%s3195 + $0x30] sm:$0xe]
      %v3869 = vld [vmem:[%s3195 + $0x3c] sm:$0xe]
      %v3870 = vld [vmem:[%s3195 + $0x48] sm:$0xe]
      %v3871 = vld [vmem:[%s3195 + $0x54] sm:$0xe]
      %v3896 = vrot.slane %v3864, 5
      %v3897 = vrot.slane %v3896, 4
      %v3898 = vrot.slane %v3439, 5
      %v3899 = vsel %vm1962, %v3897, %v3898
      %v3900 = vrot.slane %v3898, 4
      %v3901 = vrot.slane %v3440, 5
      %v3902 = vsel %vm1962, %v3900, %v3901
      %v3903 = vrot.slane %v3865, 5
      %v3904 = vrot.slane %v3903, 4
      %v3905 = vrot.slane %v3442, 5
      %v3906 = vsel %vm1962, %v3904, %v3905
      %v3907 = vrot.slane %v3905, 4
      %v3908 = vrot.slane %v3443, 5
      %v3909 = vsel %vm1962, %v3907, %v3908
      %v3910 = vrot.slane %v3866, 5
      %v3911 = vrot.slane %v3910, 4
      %v3912 = vrot.slane %v3445, 5
      %v3913 = vsel %vm1962, %v3911, %v3912
      %v3914 = vrot.slane %v3912, 4
      %v3915 = vrot.slane %v3446, 5
      %v3916 = vsel %vm1962, %v3914, %v3915
      %v3917 = vrot.slane %v3867, 5
      %v3918 = vrot.slane %v3917, 4
      %v3919 = vrot.slane %v3448, 5
      %v3920 = vsel %vm1962, %v3918, %v3919
      %v3921 = vrot.slane %v3919, 4
      %v3922 = vrot.slane %v3449, 5
      %v3923 = vsel %vm1962, %v3921, %v3922
      %v3924 = vrot.slane %v3868, 5
      %v3925 = vrot.slane %v3924, 4
      %v3926 = vrot.slane %v3451, 5
      %v3927 = vsel %vm1962, %v3925, %v3926
      %v3928 = vrot.slane %v3926, 4
      %v3929 = vrot.slane %v3452, 5
      %v3930 = vsel %vm1962, %v3928, %v3929
      %v3931 = vrot.slane %v3869, 5
      %v3932 = vrot.slane %v3931, 4
      %v3933 = vrot.slane %v3454, 5
      %v3934 = vsel %vm1962, %v3932, %v3933
      %v3935 = vrot.slane %v3933, 4
      %v3936 = vrot.slane %v3455, 5
      %v3937 = vsel %vm1962, %v3935, %v3936
      %v3938 = vrot.slane %v3870, 5
      %v3939 = vrot.slane %v3938, 4
      %v3940 = vrot.slane %v3457, 5
      %v3941 = vsel %vm1962, %v3939, %v3940
      %v3942 = vrot.slane %v3940, 4
      %v3943 = vrot.slane %v3458, 5
      %v3944 = vsel %vm1962, %v3942, %v3943
      %v3945 = vrot.slane %v3871, 5
      %v3946 = vrot.slane %v3945, 4
      %v3947 = vrot.slane %v3460, 5
      %v3948 = vsel %vm1962, %v3946, %v3947
      %v3949 = vrot.slane %v3947, 4
      %v3950 = vrot.slane %v3461, 5
      %v3951 = vsel %vm1962, %v3949, %v3950
      %s3952 = scalar_lea.vmem %s6, 512
      %v3953 = vld [vmem:[%s3952] sm:$0xf]
      %v3954 = vld [vmem:[%s3952 + $0x4] sm:$0xf]
      %v3955 = vld [vmem:[%s3952 + $0x8] sm:$0xf]
      %v3956 = vld [vmem:[%s3952 + $0xc] sm:$0xf]
      %v3957 = vld [vmem:[%s3952 + $0x10] sm:$0xf]
      %v3958 = vld [vmem:[%s3952 + $0x14] sm:$0xf]
      %v3959 = vld [vmem:[%s3952 + $0x18] sm:$0xf]
      %v3960 = vld [vmem:[%s3952 + $0x1c] sm:$0xf]
      %v3961 = vld [vmem:[%s3952 + $0x20] sm:$0xf]
      %v3962 = vld [vmem:[%s3952 + $0x24] sm:$0xf]
      %v3963 = vld [vmem:[%s3952 + $0x28] sm:$0xf]
      %v3964 = vld [vmem:[%s3952 + $0x2c] sm:$0xf]
      %v3965 = vld [vmem:[%s3952 + $0x30] sm:$0xf]
      %v3966 = vld [vmem:[%s3952 + $0x34] sm:$0xf]
      %v3967 = vld [vmem:[%s3952 + $0x38] sm:$0xf]
      %v3968 = vld [vmem:[%s3952 + $0x3c] sm:$0xf]
      %v3969 = vunpack.c.l.b16 %v3899
      %v3970 = vunpack.c.l.b16 %v3902
      %v3971 = vunpack.c.l.b16 %v3906
      %v3972 = vunpack.c.l.b16 %v3909
      %v3973 = vunpack.c.l.b16 %v3913
      %v3974 = vunpack.c.l.b16 %v3916
      %v3975 = vunpack.c.l.b16 %v3920
      %v3976 = vunpack.c.l.b16 %v3923
      %v3977 = vunpack.c.l.b16 %v3927
      %v3978 = vunpack.c.l.b16 %v3930
      %v3979 = vunpack.c.l.b16 %v3934
      %v3980 = vunpack.c.l.b16 %v3937
      %v3981 = vunpack.c.l.b16 %v3941
      %v3982 = vunpack.c.l.b16 %v3944
      %v3983 = vunpack.c.l.b16 %v3948
      %v3984 = vunpack.c.l.b16 %v3951
      %v3985 = vpack.c.b16 %v3970, %v3969
      %v3986 = vpack.c.b16 %v3972, %v3971
      %v3987 = vpack.c.b16 %v3974, %v3973
      %v3988 = vpack.c.b16 %v3976, %v3975
      %v3989 = vpack.c.b16 %v3978, %v3977
      %v3990 = vpack.c.b16 %v3980, %v3979
      %v3991 = vpack.c.b16 %v3982, %v3981
      %v3992 = vpack.c.b16 %v3984, %v3983
      %v4017 = vunpack.c.l.b16 %v3953
      %v4018 = vunpack.c.l.b16 %v3954
      %v4019 = vunpack.c.l.b16 %v3955
      %v4020 = vunpack.c.l.b16 %v3956
      %v4021 = vunpack.c.l.b16 %v3957
      %v4022 = vunpack.c.l.b16 %v3958
      %v4023 = vunpack.c.l.b16 %v3959
      %v4024 = vunpack.c.l.b16 %v3960
      %v4025 = vunpack.c.l.b16 %v3961
      %v4026 = vunpack.c.l.b16 %v3962
      %v4027 = vunpack.c.l.b16 %v3963
      %v4028 = vunpack.c.l.b16 %v3964
      %v4029 = vunpack.c.l.b16 %v3965
      %v4030 = vunpack.c.l.b16 %v3966
      %v4031 = vunpack.c.l.b16 %v3967
      %v4032 = vunpack.c.l.b16 %v3968
      %v4033 = vpack.c.b16 %v4018, %v4017
      %v4034 = vpack.c.b16 %v4020, %v4019
      %v4035 = vpack.c.b16 %v4022, %v4021
      %v4036 = vpack.c.b16 %v4024, %v4023
      %v4037 = vpack.c.b16 %v4026, %v4025
      %v4038 = vpack.c.b16 %v4028, %v4027
      %v4039 = vpack.c.b16 %v4030, %v4029
      %v4040 = vpack.c.b16 %v4032, %v4031
      %4049 = vmatprep.subr.bf16.mxu0 0
      %4050 = vmatpush1.bf16.msra.mxu0 %v4040
      %4051 = vmatprep.subr.bf16.mxu0 0
      %4052 = vmatpush1.bf16.msra.mxu0 %v4039
      %4053 = vmatprep.subr.bf16.mxu0 0
      %4054 = vmatpush1.bf16.msra.mxu0 %v4038
      %4055 = vmatprep.subr.bf16.mxu0 0
      %4056 = vmatpush1.bf16.msra.mxu0 %v4037
      %4057 = vmatprep.subr.bf16.mxu0 0
      %4058 = vmatpush1.bf16.msra.mxu0 %v4036
      %4059 = vmatprep.subr.bf16.mxu0 0
      %4060 = vmatpush1.bf16.msra.mxu0 %v4035
      %4061 = vmatprep.subr.bf16.mxu0 0
      %4062 = vmatpush1.bf16.msra.mxu0 %v4034
      %4063 = vmatprep.subr.bf16.mxu0 0
      %4064 = vmatpush1.bf16.msra.mxu0 %v4033
      %4065 = vmatprep.subr.bf16.mxu0 0
      %4066 = vmatpush2.bf16.msra.mxu0 0
      %4067 = vmatprep.subr.bf16.mxu0 0
      %4068 = vmatpush2.bf16.msra.mxu0 0
      %4069 = vmatprep.subr.bf16.mxu0 0
      %4070 = vmatpush2.bf16.msra.mxu0 0
      %4071 = vmatprep.subr.bf16.mxu0 0
      %4072 = vmatpush2.bf16.msra.mxu0 0
      %4073 = vmatprep.subr.bf16.mxu0 0
      %4074 = vmatpush2.bf16.msra.mxu0 0
      %4075 = vmatprep.subr.bf16.mxu0 0
      %4076 = vmatpush2.bf16.msra.mxu0 0
      %4077 = vmatprep.subr.bf16.mxu0 0
      %4078 = vmatpush2.bf16.msra.mxu0 0
      %4079 = vmatprep.subr.bf16.mxu0 0
      %4080 = vmatpush2.bf16.msra.mxu0 0
      %4081 = vmatprep.mubr.bf16.mxu0 0
      %4082 = vmatmul.mubr.bf16.gmra.mxu0 %v3985
      %v4083 = vpop.f32.mrf.mxu0
      %v4084 = vadd.f32 0.0, %v4083
      %v4085 = vpop.f32.mrf.mxu0
      %v4086 = vpop.f32.mrf.mxu0
      %v4087 = vadd.f32 0.0, %v4086
      %v4088 = vpop.f32.mrf.mxu0
      %4089 = vmatprep.mubr.bf16.mxu0 0
      %4090 = vmatmul.mubr.bf16.gmra.mxu0 %v3986
      %v4091 = vpop.f32.mrf.mxu0
      %v4092 = vadd.f32 0.0, %v4091
      %v4093 = vpop.f32.mrf.mxu0
      %v4094 = vpop.f32.mrf.mxu0
      %v4095 = vadd.f32 0.0, %v4094
      %v4096 = vpop.f32.mrf.mxu0
      %4097 = vmatprep.mubr.bf16.mxu0 0
      %4098 = vmatmul.mubr.bf16.gmra.mxu0 %v3987
      %v4099 = vpop.f32.mrf.mxu0
      %v4100 = vadd.f32 0.0, %v4099
      %v4101 = vpop.f32.mrf.mxu0
      %v4102 = vpop.f32.mrf.mxu0
      %v4103 = vadd.f32 0.0, %v4102
      %v4104 = vpop.f32.mrf.mxu0
      %4105 = vmatprep.mubr.bf16.mxu0 0
      %4106 = vmatmul.mubr.bf16.gmra.mxu0 %v3988
      %v4107 = vpop.f32.mrf.mxu0
      %v4108 = vadd.f32 0.0, %v4107
      %v4109 = vpop.f32.mrf.mxu0
      %v4110 = vpop.f32.mrf.mxu0
      %v4111 = vadd.f32 0.0, %v4110
      %v4112 = vpop.f32.mrf.mxu0
      %4113 = vmatprep.mubr.bf16.mxu0 0
      %4114 = vmatmul.mubr.bf16.gmra.mxu0 %v3989
      %v4115 = vpop.f32.mrf.mxu0
      %v4116 = vadd.f32 0.0, %v4115
      %v4117 = vpop.f32.mrf.mxu0
      %v4118 = vpop.f32.mrf.mxu0
      %v4119 = vadd.f32 0.0, %v4118
      %v4120 = vpop.f32.mrf.mxu0
      %4121 = vmatprep.mubr.bf16.mxu0 0
      %4122 = vmatmul.mubr.bf16.gmra.mxu0 %v3990
      %v4123 = vpop.f32.mrf.mxu0
      %v4124 = vadd.f32 0.0, %v4123
      %v4125 = vpop.f32.mrf.mxu0
      %v4126 = vpop.f32.mrf.mxu0
      %v4127 = vadd.f32 0.0, %v4126
      %v4128 = vpop.f32.mrf.mxu0
      %4129 = vmatprep.mubr.bf16.mxu0 0
      %4130 = vmatmul.mubr.bf16.gmra.mxu0 %v3991
      %v4131 = vpop.f32.mrf.mxu0
      %v4132 = vadd.f32 0.0, %v4131
      %v4133 = vpop.f32.mrf.mxu0
      %v4134 = vpop.f32.mrf.mxu0
      %v4135 = vadd.f32 0.0, %v4134
      %v4136 = vpop.f32.mrf.mxu0
      %4137 = vmatprep.mubr.bf16.mxu0 0
      %4138 = vmatmul.mubr.bf16.gmra.mxu0 %v3992
      %v4139 = vpop.f32.mrf.mxu0
      %v4140 = vadd.f32 0.0, %v4139
      %v4141 = vpop.f32.mrf.mxu0
      %v4142 = vpop.f32.mrf.mxu0
      %v4143 = vadd.f32 0.0, %v4142
      %v4144 = vpop.f32.mrf.mxu0
      %4145 = vdwg.mxu0
      %v4146 = vadd.f32 %v3848, %v4084
      %v4147 = vadd.f32 %v3849, %v4087
      %v4148 = vadd.f32 %v3850, %v4092
      %v4149 = vadd.f32 %v3851, %v4095
      %v4150 = vadd.f32 %v3852, %v4100
      %v4151 = vadd.f32 %v3853, %v4103
      %v4152 = vadd.f32 %v3854, %v4108
      %v4153 = vadd.f32 %v3855, %v4111
      %v4154 = vadd.f32 %v3856, %v4116
      %v4155 = vadd.f32 %v3857, %v4119
      %v4156 = vadd.f32 %v3858, %v4124
      %v4157 = vadd.f32 %v3859, %v4127
      %v4158 = vadd.f32 %v3860, %v4132
      %v4159 = vadd.f32 %v3861, %v4135
      %v4160 = vadd.f32 %v3862, %v4140
      %v4161 = vadd.f32 %v3863, %v4143
      %v4162 = vld [vmem:[%s7] sm:$0x1]
      %v4164 = vlaneseq
      %v4165 = vshrl.u32 %v4164, 7
      %v4166 = vsub.s32 0, %v4165
      %v4167 = vrot.slane %v4162, %v4166
      %v4169 = vmul.f32 %v4146, %v4167
      %v4170 = vmul.f32 %v4147, %v4167
      %v4171 = vmul.f32 %v4148, %v4167
      %v4172 = vmul.f32 %v4149, %v4167
      %v4173 = vmul.f32 %v4150, %v4167
      %v4174 = vmul.f32 %v4151, %v4167
      %v4175 = vmul.f32 %v4152, %v4167
      %v4176 = vmul.f32 %v4153, %v4167
      %v4177 = vmul.f32 %v4154, %v4167
      %v4178 = vmul.f32 %v4155, %v4167
      %v4179 = vmul.f32 %v4156, %v4167
      %v4180 = vmul.f32 %v4157, %v4167
      %v4181 = vmul.f32 %v4158, %v4167
      %v4182 = vmul.f32 %v4159, %v4167
      %v4183 = vmul.f32 %v4160, %v4167
      %v4184 = vmul.f32 %v4161, %v4167
      %v4185 = vld [vmem:[%s8] sm:$0x1]
      %v4187 = vlaneseq
      %v4188 = vshrl.u32 %v4187, 7
      %v4189 = vsub.s32 0, %v4188
      %v4190 = vrot.slane %v4185, %v4189
      %v4192 = vadd.f32 %v4169, %v4190
      %v4193 = vadd.f32 %v4170, %v4190
      %v4194 = vadd.f32 %v4171, %v4190
      %v4195 = vadd.f32 %v4172, %v4190
      %v4196 = vadd.f32 %v4173, %v4190
      %v4197 = vadd.f32 %v4174, %v4190
      %v4198 = vadd.f32 %v4175, %v4190
      %v4199 = vadd.f32 %v4176, %v4190
      %v4200 = vadd.f32 %v4177, %v4190
      %v4201 = vadd.f32 %v4178, %v4190
      %v4202 = vadd.f32 %v4179, %v4190
      %v4203 = vadd.f32 %v4180, %v4190
      %v4204 = vadd.f32 %v4181, %v4190
      %v4205 = vadd.f32 %v4182, %v4190
      %v4206 = vadd.f32 %v4183, %v4190
      %v4207 = vadd.f32 %v4184, %v4190
      %v4208 = vmax.f32 %v4192, 0.0
      %v4209 = vmax.f32 %v4193, 0.0
      %v4210 = vmax.f32 %v4194, 0.0
      %v4211 = vmax.f32 %v4195, 0.0
      %v4212 = vmax.f32 %v4196, 0.0
      %v4213 = vmax.f32 %v4197, 0.0
      %v4214 = vmax.f32 %v4198, 0.0
      %v4215 = vmax.f32 %v4199, 0.0
      %v4216 = vmax.f32 %v4200, 0.0
      %v4217 = vmax.f32 %v4201, 0.0
      %v4218 = vmax.f32 %v4202, 0.0
      %v4219 = vmax.f32 %v4203, 0.0
      %v4220 = vmax.f32 %v4204, 0.0
      %v4221 = vmax.f32 %v4205, 0.0
      %v4222 = vmax.f32 %v4206, 0.0
      %v4223 = vmax.f32 %v4207, 0.0
      %v4224 = vpack.c.bf16 %v4209, %v4208
      %v4225 = vpack.c.bf16 %v4211, %v4210
      %v4226 = vpack.c.bf16 %v4213, %v4212
      %v4227 = vpack.c.bf16 %v4215, %v4214
      %v4228 = vpack.c.bf16 %v4217, %v4216
      %v4229 = vpack.c.bf16 %v4219, %v4218
      %v4230 = vpack.c.bf16 %v4221, %v4220
      %v4231 = vpack.c.bf16 %v4223, %v4222
      %v4240 = vunpack.c.l.b16 %v4224
      %v4241 = vunpack.c.h.b16 %v4224
      %v4242 = vunpack.c.l.b16 %v4225
      %v4243 = vunpack.c.h.b16 %v4225
      %v4244 = vunpack.c.l.b16 %v4226
      %v4245 = vunpack.c.h.b16 %v4226
      %v4246 = vunpack.c.l.b16 %v4227
      %v4247 = vunpack.c.h.b16 %v4227
      %v4248 = vunpack.c.l.b16 %v4228
      %v4249 = vunpack.c.h.b16 %v4228
      %v4250 = vunpack.c.l.b16 %v4229
      %v4251 = vunpack.c.h.b16 %v4229
      %v4252 = vunpack.c.l.b16 %v4230
      %v4253 = vunpack.c.h.b16 %v4230
      %v4254 = vunpack.c.l.b16 %v4231
      %v4255 = vunpack.c.h.b16 %v4231
      %v4256 = vpack.c.b16 %v4240, %v4240
      %v4257 = vpack.c.b16 %v4241, %v4241
      %v4258 = vpack.c.b16 %v4242, %v4242
      %v4259 = vpack.c.b16 %v4243, %v4243
      %v4260 = vpack.c.b16 %v4244, %v4244
      %v4261 = vpack.c.b16 %v4245, %v4245
      %v4262 = vpack.c.b16 %v4246, %v4246
      %v4263 = vpack.c.b16 %v4247, %v4247
      %v4264 = vpack.c.b16 %v4248, %v4248
      %v4265 = vpack.c.b16 %v4249, %v4249
      %v4266 = vpack.c.b16 %v4250, %v4250
      %v4267 = vpack.c.b16 %v4251, %v4251
      %v4268 = vpack.c.b16 %v4252, %v4252
      %v4269 = vpack.c.b16 %v4253, %v4253
      %v4270 = vpack.c.b16 %v4254, %v4254
      %v4271 = vpack.c.b16 %v4255, %v4255
      %4288 = vst [vmem:[%s499] sm:$0xf] %v4256
      %4289 = vst [vmem:[%s499 + $0x4] sm:$0xf] %v4257
      %4290 = vst [vmem:[%s499 + $0x8] sm:$0xf] %v4258
      %4291 = vst [vmem:[%s499 + $0xc] sm:$0xf] %v4259
      %4292 = vst [vmem:[%s499 + $0x10] sm:$0xf] %v4260
      %4293 = vst [vmem:[%s499 + $0x14] sm:$0xf] %v4261
      %4294 = vst [vmem:[%s499 + $0x18] sm:$0xf] %v4262
      %4295 = vst [vmem:[%s499 + $0x1c] sm:$0xf] %v4263
      %4296 = vst [vmem:[%s499 + $0x20] sm:$0xf] %v4264
      %4297 = vst [vmem:[%s499 + $0x24] sm:$0xf] %v4265
      %4298 = vst [vmem:[%s499 + $0x28] sm:$0xf] %v4266
      %4299 = vst [vmem:[%s499 + $0x2c] sm:$0xf] %v4267
      %4300 = vst [vmem:[%s499 + $0x30] sm:$0xf] %v4268
      %4301 = vst [vmem:[%s499 + $0x34] sm:$0xf] %v4269
      %4302 = vst [vmem:[%s499 + $0x38] sm:$0xf] %v4270
      %4303 = vst [vmem:[%s499 + $0x3c] sm:$0xf] %v4271
      %s4304 = smul.u32 8, %s25
      %p4305 = scmp.lt.s32.totalorder %s24, 1
      %s4306 = scalar_select %p4305, %s24, 1
      %p4307 = scmp.lt.s32.totalorder %s4304, 15
      %s4308 = scalar_select %p4307, %s4304, 15
      %s4309 = smul.addr %s4308, 2
      %s4310 = smul.addr %s4306, 32
      %s4311 = sadd.s32 %s4309, %s4310
      %s4312 = smul.addr %s4311, 4
      %s4313 = scalar_lea.vmem %s9, %s4312
      // Predicated region
      $region57: #{_forward_impl.1} parent=55 // pred_check
        %p4314 = pneg %p278
      $region58: #{_forward_impl.1} parent=55 // pred_check_branch
        %4316 = sbr.rel (%p4314) target = $region60
      $region59: #{_forward_impl.1} parent=55 // pred_region
        %s4317 = smul.u32 8, %s25
      $region60: #{_forward_impl.1} parent=55 // pred_fallthru
        _
    $region56: #{_forward_impl.1} parent=5 // pred_fallthru
      _
    %p4318 = scmp.le.s32.totalorder 2, %s15
    // Predicated region
    $region61: #{_forward_impl.1} parent=5 // pred_check
      %p4319 = pneg %p4318
    $region62: #{_forward_impl.1} parent=5 // pred_check_branch
      %4321 = sbr.rel (%p4319) target = $region64
    $region63: #{_forward_impl.1} parent=5 // pred_region
      %s4322 = ssub.s32 %s15, 2
      // Predicated region
      $region65: #{_forward_impl.1} parent=63 // pred_check
        %p4323 = pneg %p284
      $region66: #{_forward_impl.1} parent=63 // pred_check_branch
        %4325 = sbr.rel (%p4323) target = $region68
      $region67: #{_forward_impl.1} parent=63 // pred_region
        %s4326 = smul.u32 8, %s27
        %p4327 = scmp.lt.s32.totalorder %s26, 1
        %s4328 = scalar_select %p4327, %s26, 1
        %p4329 = scmp.lt.s32.totalorder %s4326, 15
        %s4330 = scalar_select %p4329, %s4326, 15
        %s4331 = smul.addr %s4330, 2
        %s4332 = smul.addr %s4328, 32
        %s4333 = sadd.s32 %s4331, %s4332
        %s4334 = smul.addr %s4333, 4
        %s4335 = scalar_lea.vmem %s9, %s4334
      $region68: #{_forward_impl.1} parent=63 // pred_fallthru
        _
    $region64: #{_forward_impl.1} parent=5 // pred_fallthru
      _
  $region6: #{_forward_impl.1} parent=0 // loop_footer
    %s19 = sadd.s32 1, %s15
  $region7: #{_forward_impl.1} parent=0 // loop_footer_branch
    %14 = sbr.rel target = $region3
  $region8: #{_forward_impl.1} parent=0 // loop_exit
    _

</llo_original>
